<compile_context>
chip_gen: v7x
topology: tpu7x:2x2x1
jax: 0.10.0
libtpu: 0.0.40
codegen_flags: <defaults>
</compile_context>

<pallas_src>
import jax
import jax.numpy as jnp
import numpy as np
from jax.experimental import pallas as pl
from jax.experimental.pallas import tpu as pltpu


def _round_up(x, m):
    return -(-x // m) * m


def _interp_matrix(n_in, n_out):
    """Row-interpolation matrix for bilinear upsampling with align_corners=True."""
    if n_in == 1:
        return jnp.ones((n_out, 1), jnp.float32)
    src = jnp.arange(n_out, dtype=jnp.float32) * (n_in - 1) / (n_out - 1)
    h0 = jnp.clip(jnp.floor(src).astype(jnp.int32), 0, n_in - 2)
    frac = src - h0.astype(jnp.float32)
    m = jnp.zeros((n_out, n_in), jnp.float32)
    m = m.at[jnp.arange(n_out), h0].add(1.0 - frac)
    m = m.at[jnp.arange(n_out), h0 + 1].add(frac)
    return m


def _vmem_limit_bytes():
    """Per-generation scoped-VMEM limit: ~80% of physical capacity
    (v5e/v6e 128 MiB -> ~102 MiB, v7x 64 MiB -> ~51 MiB); falls back to a
    v7x-safe 51 MiB if the hardware query is unavailable."""
    cap = 64 * 1024 * 1024
    try:
        info = pltpu.get_tpu_info()
        cap = int(getattr(info, "vmem_capacity_bytes", cap)) or cap
    except Exception:
        pass
    cap = max(cap, 32 * 1024 * 1024)
    return min(int(cap * 0.8), 112 * 1024 * 1024)


def _pick_tile_h(H1, W1, C1, C2, Cmid, Cout, limit_bytes):
    """Largest H2-divisor tile height whose per-step VMEM estimate fits."""
    H2, W2 = 2 * H1, 2 * W1
    Cin = C1 + C2
    cpad1, cpad2 = _round_up(Cin, 128), _round_up(Cmid, 128)
    use1, use2 = Cin < 128, Cmid < 128
    Wp = _round_up(8 + W2 + 1, 8)
    fixed = (2 * H1 * W1 * C1 * 4                 # x1 block (double-buffered)
             + 2 * (H2 + 4) * W2 * C2 * 4         # padded skip plane (double-buffered)
             + (H2 + 4) * H1 * 4 + W1 * W2 * 4    # interp matrices (single-buffered)
             + 9 * cpad1 * Cmid * 2 + 9 * cpad2 * Cout * 2)  # weights (single-buffered)
    budget = max(limit_bytes // 2 - fixed, 1 << 20)

    def per_tile(th):
        b = (th + 4) * Wp * Cin * 4 + (th + 2) * Wp * Cmid * 4   # pad scratches
        if use1 or use2:
            lanes = 9 * max(cpad1 if use1 else 0, cpad2 if use2 else 0)
            rows = (th + 2) * W2 if use1 else th * W2
            b += rows * lanes * 2                                # bf16 im2col buffer
        b += 2 * th * W2 * Cout * 4                              # output block (dbl-buf)
        b += 4 * (th + 4) * W2 * max(Cin, 2 * C1) * 4            # upsample/concat temps
        b += 3 * (th + 2) * W2 * max(Cmid, Cout) * 4             # conv temporaries
        return b

    for th in sorted((d for d in range(1, H2 + 1) if H2 % d == 0), reverse=True):
        if per_tile(th) <= budget:
            return th
    return 1


def _make_up_kernel(H1, W1, C1, C2, Cmid, Cout, TH, nHT, LPAD, Wp,
                    cpad1, cpad2, use_im2col_1, use_im2col_2):
    H2, W2 = 2 * H1, 2 * W1
    Cin = C1 + C2
    f32 = jnp.float32
    bf16 = jnp.bfloat16

    def conv3x3_bn_relu(pad_ref, w_ref, b_ref, cin, cpad, cout, rows,
                        use_im2col, patch_ref):
        """3x3 conv (pad=1 in W via halo columns, in H via the extra scratch
        rows) with the BN scale already folded into w; adds shift + ReLU."""
        if use_im2col:
            # One bf16 im2col matmul; each tap's lane block is padded to a
            # 128-aligned stride so the stores are full-width and unmasked.
            zpad = (jnp.zeros((rows * W2, cpad - cin), bf16)
                    if cpad > cin else None)
            for k in range(9):
                dy, dx = k // 3, k % 3
                tap = pad_ref[dy:dy + rows, LPAD - 1 + dx:LPAD - 1 + dx + W2, :]
                tap = tap.reshape(rows * W2, cin).astype(bf16)
                if zpad is not None:
                    tap = jnp.concatenate([tap, zpad], axis=-1)
                patch_ref[0:rows * W2, k * cpad:(k + 1) * cpad] = tap
            acc = jnp.dot(patch_ref[0:rows * W2, 0:9 * cpad], w_ref[...],
                          preferred_element_type=f32)
        else:
            # Production channel counts: no im2col buffer, 9 accumulated
            # matmuls with K = cin (>=128) keep the MXU fed on all chips.
            acc = jnp.zeros((rows * W2, cout), f32)
            for k in range(9):
                dy, dx = k // 3, k % 3
                lhs = pad_ref[dy:dy + rows, LPAD - 1 + dx:LPAD - 1 + dx + W2, :]
                lhs = lhs.reshape(rows * W2, cin).astype(bf16)
                acc = acc + jnp.dot(lhs, w_ref[k * cpad:k * cpad + cin, :],
                                    preferred_element_type=f32)
        return jnp.maximum(acc + b_ref[...], 0.0)

    def kernel(x1_ref, x2_ref, uh_ref, uwt_ref, w1_ref, b1_ref, w2_ref, b2_ref,
               out_ref, pad1_ref, pad2_ref, *maybe_patch):
        patch_ref = maybe_patch[0] if maybe_patch else None
        t = pl.program_id(1)
        h0 = t * TH
        if TH % 8 == 0:
            h0 = pl.multiple_of(h0, 8)

        # Zero the 1-column W halos every step (scratch is per-core and the
        # batch / tile axes may be sharded across TensorCores, so never rely
        # on a first-iteration-only init).  Everything else read below is
        # fully rewritten each step.
        pad1_ref[:, LPAD - 1:LPAD, :] = jnp.zeros((TH + 4, 1, Cin), f32)
        pad1_ref[:, LPAD + W2:LPAD + W2 + 1, :] = jnp.zeros((TH + 4, 1, Cin), f32)
        pad2_ref[:, LPAD - 1:LPAD, :] = jnp.zeros((TH + 2, 1, Cmid), f32)
        pad2_ref[:, LPAD + W2:LPAD + W2 + 1, :] = jnp.zeros((TH + 2, 1, Cmid), f32)

        # Bilinear 2x upsample (align_corners=True) of only the TH+4 rows this
        # tile's convs read.  uh_ref carries 2 zero rows top/bottom, so
        # out-of-image rows come out as zeros = conv1's H halo.
        x1 = x1_ref[...]                                            # (H1,W1,C1)
        uh = uh_ref[pl.ds(h0, TH + 4), :]                           # (TH+4,H1)
        a = jnp.dot(uh, x1.reshape(H1, W1 * C1),
                    preferred_element_type=f32)                     # (TH+4,W1*C1)
        a = jnp.swapaxes(a.reshape(TH + 4, W1, C1), 1, 2)           # (TH+4,C1,W1)
        a = jnp.dot(a.reshape((TH + 4) * C1, W1), uwt_ref[...],
                    preferred_element_type=f32)                     # ((TH+4)*C1,W2)
        up = jnp.swapaxes(a.reshape(TH + 4, C1, W2), 1, 2)          # (TH+4,W2,C1)

        # Channel concat with the (zero-row-padded) skip connection, written
        # straight into conv1's padded input at the sublane-aligned interior.
        x2 = x2_ref[pl.ds(h0, TH + 4), :, :].astype(f32)            # (TH+4,W2,C2)
        pad1_ref[0:TH + 4, LPAD:LPAD + W2, 0:C1] = up
        pad1_ref[0:TH + 4, LPAD:LPAD + W2, C1:Cin] = x2

        # conv1 + BN shift + ReLU over TH+2 rows (1-row halo for conv2); the
        # result goes straight into conv2's padded input.
        h = conv3x3_bn_relu(pad1_ref, w1_ref, b1_ref, Cin, cpad1, Cmid,
                            TH + 2, use_im2col_1, patch_ref)
        pad2_ref[0:TH + 2, LPAD:LPAD + W2, :] = h.reshape(TH + 2, W2, Cmid)

        # Rows outside the image are zero padding for conv2, not conv1 output.
        @pl.when(t == 0)
        def _():
            pad2_ref[0:1, :, :] = jnp.zeros((1, Wp, Cmid), f32)

        @pl.when(t == nHT - 1)
        def _():
            pad2_ref[TH + 1:TH + 2, :, :] = jnp.zeros((1, Wp, Cmid), f32)

        # conv2 + BN shift + ReLU for this tile's TH output rows; unpadded
        # Cout writeback (no 128-channel padding of the output).
        y = conv3x3_bn_relu(pad2_ref, w2_ref, b2_ref, Cmid, cpad2, Cout,
                            TH, use_im2col_2, patch_ref)
        out_ref[...] = y.astype(out_ref.dtype)

    return kernel


def up_forward(x1, x2, params, tile_h=None):
    """x1: (N, H, W, C1), x2: (N, 2H, 2W, C2) -> (N, 2H, 2W, Cout)."""
    w1, s1, b1, w2, s2, b2 = params
    N, H1, W1, C1 = x1.shape
    N2, H2, W2, C2 = x2.shape
    assert N == N2 and H2 == 2 * H1 and W2 == 2 * W1
    Cin = C1 + C2
    Cmid = w1.shape[-1]
    Cout = w2.shape[-1]
    assert w1.shape[2] == Cin and w2.shape[2] == Cmid

    LPAD = 8                                   # sublane-aligned interior start
    Wp = _round_up(LPAD + W2 + 1, 8)           # padded scratch width
    cpad1 = _round_up(Cin, 128)                # 128-aligned im2col tap stride
    cpad2 = _round_up(Cmid, 128)
    use_im2col_1 = Cin < 128                   # big channels: direct 9-matmul path
    use_im2col_2 = Cmid < 128

    vmem_limit = _vmem_limit_bytes()
    if tile_h is None:
        tile_h = _pick_tile_h(H1, W1, C1, C2, Cmid, Cout, vmem_limit)
    assert H2 % tile_h == 0, "tile_h must divide the output height"
    TH = int(tile_h)
    nHT = H2 // TH

    # Interp matrices.  The H one gets 2 zero rows top/bottom so per-tile row
    # slices produce conv1's H halo for free; the W one is pre-transposed.
    uh_pad = jnp.pad(_interp_matrix(H1, H2), ((2, 2), (0, 0)))     # (H2+4, H1)
    uwt = _interp_matrix(W1, W2).T                                  # (W1, W2)
    x2_pad = jnp.pad(x2, ((0, 0), (2, 2), (0, 0), (0, 0)))          # (N, H2+4, W2, C2)

    # Fold the BN scale into the conv weights (kernel adds only the shift);
    # tap rows are laid out at a 128-aligned stride matching the patch buffer.
    def pack_w(w, s, cin, cout, cpad):
        wf = (w * s.reshape(1, 1, 1, cout)).reshape(9, cin, cout)
        wf = jnp.pad(wf, ((0, 0), (0, cpad - cin), (0, 0)))
        return wf.reshape(9 * cpad, cout).astype(jnp.bfloat16)

    w1f = pack_w(w1, s1, Cin, Cmid, cpad1)
    b1f = b1.reshape(1, Cmid).astype(jnp.float32)
    w2f = pack_w(w2, s2, Cmid, Cout, cpad2)
    b2f = b2.reshape(1, Cout).astype(jnp.float32)

    kernel = _make_up_kernel(H1, W1, C1, C2, Cmid, Cout, TH, nHT, LPAD, Wp,
                             cpad1, cpad2, use_im2col_1, use_im2col_2)

    # Grid-invariant operands: single-buffered (their block index never
    # changes, so the second pipeline buffer is dead VMEM).
    def _const_spec(shape):
        idx = lambda n, t, _k=len(shape): (0,) * _k
        try:
            return pl.BlockSpec(shape, idx, pipeline_mode=pl.Buffered(1))
        except Exception:
            return pl.BlockSpec(shape, idx)

    scratch = [
        # Halo-padded conv inputs, O(TH) rows each.  Kept f32: the (sublane-
        # aligned) interiors could go bf16 later for another 2x on v7x.
        pltpu.VMEM((TH + 4, Wp, Cin), jnp.float32),
        pltpu.VMEM((TH + 2, Wp, Cmid), jnp.float32),
    ]
    if use_im2col_1 or use_im2col_2:
        lanes = 9 * max(cpad1 if use_im2col_1 else 0,
                        cpad2 if use_im2col_2 else 0)
        rows = (TH + 2) * W2 if use_im2col_1 else TH * W2
        scratch.append(pltpu.VMEM((rows, lanes), jnp.bfloat16))   # shared im2col buf

    grid_spec = pltpu.PrefetchScalarGridSpec(
        num_scalar_prefetch=0,
        grid=(N, nHT),
        in_specs=[
            pl.BlockSpec((None, H1, W1, C1), lambda n, t: (n, 0, 0, 0)),
            pl.BlockSpec((None, H2 + 4, W2, C2), lambda n, t: (n, 0, 0, 0)),
            _const_spec((H2 + 4, H1)),
            _const_spec((W1, W2)),
            _const_spec((9 * cpad1, Cmid)),
            _const_spec((1, Cmid)),
            _const_spec((9 * cpad2, Cout)),
            _const_spec((1, Cout)),
        ],
        # Unpadded Cout, flattened (H, W) rows -> no 32x writeback amplification
        # and no in-kernel output reshape.
        out_specs=pl.BlockSpec((None, TH * W2, Cout), lambda n, t: (n, t, 0)),
        scratch_shapes=scratch,
    )

    out = pl.pallas_call(
        kernel,
        out_shape=jax.ShapeDtypeStruct((N, H2 * W2, Cout), jnp.float32),
        grid_spec=grid_spec,
        compiler_params=pltpu.CompilerParams(
            dimension_semantics=("parallel", "parallel"),
            vmem_limit_bytes=vmem_limit,
        ),
    )(x1, x2_pad, uh_pad, uwt, w1f, b1f, w2f, b2f)
    return out.reshape(N, H2, W2, Cout)


def up_reference(x1, x2, params):
    """Pure-JAX reference (same math, same BN folding, full f32)."""
    w1, s1, b1, w2, s2, b2 = params
    N, H1, W1, C1 = x1.shape
    uh = _interp_matrix(H1, 2 * H1)
    uw = _interp_matrix(W1, 2 * W1)
    up = jnp.einsum('ih,nhwc->niwc', uh, x1)
    up = jnp.einsum('jw,niwc->nijc', uw, up)
    x = jnp.concatenate([up, x2], axis=-1)

    def cbr(x, w, s, b):
        y = jax.lax.conv_general_dilated(
            x, w, window_strides=(1, 1), padding='SAME',
            dimension_numbers=('NHWC', 'HWIO', 'NHWC'))
        return jnp.maximum(y * s + b, 0.0)

    return cbr(cbr(x, w1, s1, b1), w2, s2, b2)


def init_params(key, in_channels, out_channels):
    """Deterministic params matching Up(in_channels, out_channels, bilinear=True)."""
    mid = in_channels // 2
    eps = 1e-5
    ks = jax.random.split(key, 10)

    def bn_fold(kg, kb, km, kv, c):
        gamma = 1.0 + 0.1 * jax.random.normal(kg, (c,), jnp.float32)
        beta = 0.1 * jax.random.normal(kb, (c,), jnp.float32)
        mean = 0.1 * jax.random.normal(km, (c,), jnp.float32)
        var = 1.0 + 0.1 * jnp.abs(jax.random.normal(kv, (c,), jnp.float32))
        scale = gamma / jnp.sqrt(var + eps)
        shift = beta - mean * scale
        return scale, shift

    w1 = jax.random.normal(ks[0], (3, 3, in_channels, mid), jnp.float32) \
         * (2.0 / (9 * in_channels)) ** 0.5
    s1, b1 = bn_fold(ks[1], ks[2], ks[3], ks[4], mid)
    w2 = jax.random.normal(ks[5], (3, 3, mid, out_channels), jnp.float32) \
         * (2.0 / (9 * mid)) ** 0.5
    s2, b2 = bn_fold(ks[6], ks[7], ks[8], ks[9], out_channels)
    return (w1, s1, b1, w2, s2, b2)


if __name__ == "__main__":
    # Small shapes: Up(in_channels=8, out_channels=4, bilinear=True)
    # x1: (N=2, 8, 8, C1=4), x2: (N=2, 16, 16, C2=4)  (NHWC; NCHW equivalents
    # [2,4,8,8] / [2,4,16,16]).
    key = jax.random.PRNGKey(0)
    kx1, kx2, kp = jax.random.split(key, 3)

    in_channels, out_channels = 8, 4
    x1 = jax.random.normal(kx1, (2, 8, 8, 4), jnp.float32)
    x2 = jax.random.normal(kx2, (2, 16, 16, 4), jnp.float32)
    params = init_params(kp, in_channels, out_channels)

    # tile_h=8 -> two H-tiles per image so the halo/tiling logic is exercised
    # at demo scale (production sizes would auto-derive tile_h from VMEM).
    out = jax.block_until_ready(up_forward(x1, x2, params, tile_h=8))

    ref = up_reference(x1, x2, params)
    # bf16 MXU operands with f32 accumulation -> slightly looser tolerance.
    np.testing.assert_allclose(np.asarray(out), np.asarray(ref), rtol=3e-2, atol=3e-2)

    print("KERNEL_OK")
</pallas_src>

<mosaic_0001>
module attributes {stable_mosaic.version = 11 : i64} {
  func.func @kernel(%arg0: i32, %arg1: i32, %arg2: memref<1x8x8x4xf32, #tpu.memory_space<vmem>>, %arg3: memref<1x20x16x4xf32, #tpu.memory_space<vmem>>, %arg4: memref<20x8xf32, #tpu.memory_space<vmem>>, %arg5: memref<8x16xf32, #tpu.memory_space<vmem>>, %arg6: memref<1152x4xbf16, #tpu.memory_space<vmem>>, %arg7: memref<1x4xf32, #tpu.memory_space<vmem>>, %arg8: memref<1152x4xbf16, #tpu.memory_space<vmem>>, %arg9: memref<1x4xf32, #tpu.memory_space<vmem>>, %arg10: memref<1x128x4xf32, #tpu.memory_space<vmem>>, %arg11: memref<12x32x8xf32, #tpu.memory_space<vmem>>, %arg12: memref<10x32x4xf32, #tpu.memory_space<vmem>>, %arg13: memref<160x1152xbf16, #tpu.memory_space<vmem>>) attributes {dimension_semantics = [#tpu.dimension_semantics<parallel>, #tpu.dimension_semantics<parallel>], iteration_bounds = array<i64: 2, 2>, scalar_prefetch = 0 : i64, scratch_operands = 3 : i64, tpu.core_type = #tpu.core_type<tc>, window_params = [{transform_indices = @transform_0, window_bounds = array<i64: 1, 8, 8, 4>}, {transform_indices = @transform_1, window_bounds = array<i64: 1, 20, 16, 4>}, {pipeline_mode = #tpu.pipeline_mode<synchronous>, transform_indices = @transform_2, window_bounds = array<i64: 20, 8>}, {pipeline_mode = #tpu.pipeline_mode<synchronous>, transform_indices = @transform_3, window_bounds = array<i64: 8, 16>}, {pipeline_mode = #tpu.pipeline_mode<synchronous>, transform_indices = @transform_4, window_bounds = array<i64: 1152, 4>}, {pipeline_mode = #tpu.pipeline_mode<synchronous>, transform_indices = @transform_5, window_bounds = array<i64: 1, 4>}, {pipeline_mode = #tpu.pipeline_mode<synchronous>, transform_indices = @transform_6, window_bounds = array<i64: 1152, 4>}, {pipeline_mode = #tpu.pipeline_mode<synchronous>, transform_indices = @transform_7, window_bounds = array<i64: 1, 4>}, {transform_indices = @transform_8, window_bounds = array<i64: 1, 128, 4>}]} {
    %c8_i32 = arith.constant 8 : i32
    %0 = arith.muli %arg1, %c8_i32 : i32
    %1 = tpu.assume_multiple %0, 8 : i32
    %cst = arith.constant 0.000000e+00 : f32
    %2 = vector.broadcast %cst : f32 to vector<12x1x8xf32>
    %c0 = arith.constant 0 : index
    %c7 = arith.constant 7 : index
    %c0_0 = arith.constant 0 : index
    %3 = vector.load %arg11[%c0, %c7, %c0_0] : memref<12x32x8xf32, #tpu.memory_space<vmem>>, vector<12x1x8xf32>
    tpu.vector_store %arg11[%c0, %c7, %c0_0], %2 {strides = array<i32>} : memref<12x32x8xf32, #tpu.memory_space<vmem>>, vector<12x1x8xf32>,
    %cst_1 = arith.constant 0.000000e+00 : f32
    %4 = vector.broadcast %cst_1 : f32 to vector<12x1x8xf32>
    %c0_2 = arith.constant 0 : index
    %c24 = arith.constant 24 : index
    %c0_3 = arith.constant 0 : index
    %5 = vector.load %arg11[%c0_2, %c24, %c0_3] : memref<12x32x8xf32, #tpu.memory_space<vmem>>, vector<12x1x8xf32>
    tpu.vector_store %arg11[%c0_2, %c24, %c0_3], %4 {strides = array<i32>} : memref<12x32x8xf32, #tpu.memory_space<vmem>>, vector<12x1x8xf32>,
    %cst_4 = arith.constant 0.000000e+00 : f32
    %6 = vector.broadcast %cst_4 : f32 to vector<10x1x4xf32>
    %c0_5 = arith.constant 0 : index
    %c7_6 = arith.constant 7 : index
    %c0_7 = arith.constant 0 : index
    %7 = vector.load %arg12[%c0_5, %c7_6, %c0_7] : memref<10x32x4xf32, #tpu.memory_space<vmem>>, vector<10x1x4xf32>
    tpu.vector_store %arg12[%c0_5, %c7_6, %c0_7], %6 {strides = array<i32>} : memref<10x32x4xf32, #tpu.memory_space<vmem>>, vector<10x1x4xf32>,
    %cst_8 = arith.constant 0.000000e+00 : f32
    %8 = vector.broadcast %cst_8 : f32 to vector<10x1x4xf32>
    %c0_9 = arith.constant 0 : index
    %c24_10 = arith.constant 24 : index
    %c0_11 = arith.constant 0 : index
    %9 = vector.load %arg12[%c0_9, %c24_10, %c0_11] : memref<10x32x4xf32, #tpu.memory_space<vmem>>, vector<10x1x4xf32>
    tpu.vector_store %arg12[%c0_9, %c24_10, %c0_11], %8 {strides = array<i32>} : memref<10x32x4xf32, #tpu.memory_space<vmem>>, vector<10x1x4xf32>,
    %c0_12 = arith.constant 0 : index
    %c0_13 = arith.constant 0 : index
    %c0_14 = arith.constant 0 : index
    %c0_15 = arith.constant 0 : index
    %10 = vector.load %arg2[%c0_12, %c0_13, %c0_14, %c0_15] : memref<1x8x8x4xf32, #tpu.memory_space<vmem>>, vector<1x8x8x4xf32>
    %11 = vector.shape_cast %10 : vector<1x8x8x4xf32> to vector<8x8x4xf32>
    %12 = arith.index_cast %1 : i32 to index
    %c0_16 = arith.constant 0 : index
    %13 = vector.load %arg4[%12, %c0_16] : memref<20x8xf32, #tpu.memory_space<vmem>>, vector<12x8xf32>
    %14 = vector.shape_cast %11 : vector<8x8x4xf32> to vector<8x32xf32>
    %cst_17 = arith.constant dense<0.000000e+00> : vector<12x32xf32>
    %15 = tpu.matmul %13, %14, %cst_17 {dimension_numbers = #tpu.dot_dimension_numbers<[1], [0], [0], [1], [0, 0, 1, 1], [], []>} : vector<12x8xf32>, vector<8x32xf32>, vector<12x32xf32> -> vector<12x32xf32>
    %16 = vector.shape_cast %15 : vector<12x32xf32> to vector<12x8x4xf32>
    %17 = tpu.transpose %16, [0, 2, 1] : vector<12x8x4xf32> -> vector<12x4x8xf32>
    %18 = vector.shape_cast %17 : vector<12x4x8xf32> to vector<48x8xf32>
    %c0_18 = arith.constant 0 : index
    %c0_19 = arith.constant 0 : index
    %19 = vector.load %arg5[%c0_18, %c0_19] : memref<8x16xf32, #tpu.memory_space<vmem>>, vector<8x16xf32>
    %cst_20 = arith.constant dense<0.000000e+00> : vector<48x16xf32>
    %20 = tpu.matmul %18, %19, %cst_20 {dimension_numbers = #tpu.dot_dimension_numbers<[1], [0], [0], [1], [0, 0, 1, 1], [], []>} : vector<48x8xf32>, vector<8x16xf32>, vector<48x16xf32> -> vector<48x16xf32>
    %21 = vector.shape_cast %20 : vector<48x16xf32> to vector<12x4x16xf32>
    %22 = tpu.transpose %21, [0, 2, 1] : vector<12x4x16xf32> -> vector<12x16x4xf32>
    %c0_21 = arith.constant 0 : index
    %23 = arith.index_cast %1 : i32 to index
    %c0_22 = arith.constant 0 : index
    %c0_23 = arith.constant 0 : index
    %24 = vector.load %arg3[%c0_21, %23, %c0_22, %c0_23] : memref<1x20x16x4xf32, #tpu.memory_space<vmem>>, vector<1x12x16x4xf32>
    %25 = vector.shape_cast %24 : vector<1x12x16x4xf32> to vector<12x16x4xf32>
    %c0_24 = arith.constant 0 : index
    %c8 = arith.constant 8 : index
    %c0_25 = arith.constant 0 : index
    %26 = vector.load %arg11[%c0_24, %c8, %c0_25] : memref<12x32x8xf32, #tpu.memory_space<vmem>>, vector<12x16x4xf32>
    tpu.vector_store %arg11[%c0_24, %c8, %c0_25], %22 {strides = array<i32>} : memref<12x32x8xf32, #tpu.memory_space<vmem>>, vector<12x16x4xf32>,
    %c0_26 = arith.constant 0 : index
    %c8_27 = arith.constant 8 : index
    %c4 = arith.constant 4 : index
    %27 = vector.load %arg11[%c0_26, %c8_27, %c4] : memref<12x32x8xf32, #tpu.memory_space<vmem>>, vector<12x16x4xf32>
    tpu.vector_store %arg11[%c0_26, %c8_27, %c4], %25 {strides = array<i32>} : memref<12x32x8xf32, #tpu.memory_space<vmem>>, vector<12x16x4xf32>,
    %cst_28 = arith.constant 0.000000e+00 : bf16
    %28 = vector.broadcast %cst_28 : bf16 to vector<160x120xbf16>
    %c0_29 = arith.constant 0 : index
    %c7_30 = arith.constant 7 : index
    %c0_31 = arith.constant 0 : index
    %29 = vector.load %arg11[%c0_29, %c7_30, %c0_31] : memref<12x32x8xf32, #tpu.memory_space<vmem>>, vector<10x16x8xf32>
    %30 = vector.shape_cast %29 : vector<10x16x8xf32> to vector<160x8xf32>
    %31 = arith.truncf %30 : vector<160x8xf32> to vector<160x8xbf16>
    %32 = tpu.concatenate %31, %28 in 1 : vector<160x8xbf16>, vector<160x120xbf16> -> vector<160x128xbf16>
    %c0_32 = arith.constant 0 : index
    %c0_33 = arith.constant 0 : index
    %33 = vector.load %arg13[%c0_32, %c0_33] : memref<160x1152xbf16, #tpu.memory_space<vmem>>, vector<160x128xbf16>
    tpu.vector_store %arg13[%c0_32, %c0_33], %32 {strides = array<i32>} : memref<160x1152xbf16, #tpu.memory_space<vmem>>, vector<160x128xbf16>,
    %c0_34 = arith.constant 0 : index
    %c8_35 = arith.constant 8 : index
    %c0_36 = arith.constant 0 : index
    %34 = vector.load %arg11[%c0_34, %c8_35, %c0_36] : memref<12x32x8xf32, #tpu.memory_space<vmem>>, vector<10x16x8xf32>
    %35 = vector.shape_cast %34 : vector<10x16x8xf32> to vector<160x8xf32>
    %36 = arith.truncf %35 : vector<160x8xf32> to vector<160x8xbf16>
    %37 = tpu.concatenate %36, %28 in 1 : vector<160x8xbf16>, vector<160x120xbf16> -> vector<160x128xbf16>
    %c0_37 = arith.constant 0 : index
    %c128 = arith.constant 128 : index
    %38 = vector.load %arg13[%c0_37, %c128] : memref<160x1152xbf16, #tpu.memory_space<vmem>>, vector<160x128xbf16>
    tpu.vector_store %arg13[%c0_37, %c128], %37 {strides = array<i32>} : memref<160x1152xbf16, #tpu.memory_space<vmem>>, vector<160x128xbf16>,
    %c0_38 = arith.constant 0 : index
    %c9 = arith.constant 9 : index
    %c0_39 = arith.constant 0 : index
    %39 = vector.load %arg11[%c0_38, %c9, %c0_39] : memref<12x32x8xf32, #tpu.memory_space<vmem>>, vector<10x16x8xf32>
    %40 = vector.shape_cast %39 : vector<10x16x8xf32> to vector<160x8xf32>
    %41 = arith.truncf %40 : vector<160x8xf32> to vector<160x8xbf16>
    %42 = tpu.concatenate %41, %28 in 1 : vector<160x8xbf16>, vector<160x120xbf16> -> vector<160x128xbf16>
    %c0_40 = arith.constant 0 : index
    %c256 = arith.constant 256 : index
    %43 = vector.load %arg13[%c0_40, %c256] : memref<160x1152xbf16, #tpu.memory_space<vmem>>, vector<160x128xbf16>
    tpu.vector_store %arg13[%c0_40, %c256], %42 {strides = array<i32>} : memref<160x1152xbf16, #tpu.memory_space<vmem>>, vector<160x128xbf16>,
    %c1 = arith.constant 1 : index
    %c7_41 = arith.constant 7 : index
    %c0_42 = arith.constant 0 : index
    %44 = vector.load %arg11[%c1, %c7_41, %c0_42] : memref<12x32x8xf32, #tpu.memory_space<vmem>>, vector<10x16x8xf32>
    %45 = vector.shape_cast %44 : vector<10x16x8xf32> to vector<160x8xf32>
    %46 = arith.truncf %45 : vector<160x8xf32> to vector<160x8xbf16>
    %47 = tpu.concatenate %46, %28 in 1 : vector<160x8xbf16>, vector<160x120xbf16> -> vector<160x128xbf16>
    %c0_43 = arith.constant 0 : index
    %c384 = arith.constant 384 : index
    %48 = vector.load %arg13[%c0_43, %c384] : memref<160x1152xbf16, #tpu.memory_space<vmem>>, vector<160x128xbf16>
    tpu.vector_store %arg13[%c0_43, %c384], %47 {strides = array<i32>} : memref<160x1152xbf16, #tpu.memory_space<vmem>>, vector<160x128xbf16>,
    %c1_44 = arith.constant 1 : index
    %c8_45 = arith.constant 8 : index
    %c0_46 = arith.constant 0 : index
    %49 = vector.load %arg11[%c1_44, %c8_45, %c0_46] : memref<12x32x8xf32, #tpu.memory_space<vmem>>, vector<10x16x8xf32>
    %50 = vector.shape_cast %49 : vector<10x16x8xf32> to vector<160x8xf32>
    %51 = arith.truncf %50 : vector<160x8xf32> to vector<160x8xbf16>
    %52 = tpu.concatenate %51, %28 in 1 : vector<160x8xbf16>, vector<160x120xbf16> -> vector<160x128xbf16>
    %c0_47 = arith.constant 0 : index
    %c512 = arith.constant 512 : index
    %53 = vector.load %arg13[%c0_47, %c512] : memref<160x1152xbf16, #tpu.memory_space<vmem>>, vector<160x128xbf16>
    tpu.vector_store %arg13[%c0_47, %c512], %52 {strides = array<i32>} : memref<160x1152xbf16, #tpu.memory_space<vmem>>, vector<160x128xbf16>,
    %c1_48 = arith.constant 1 : index
    %c9_49 = arith.constant 9 : index
    %c0_50 = arith.constant 0 : index
    %54 = vector.load %arg11[%c1_48, %c9_49, %c0_50] : memref<12x32x8xf32, #tpu.memory_space<vmem>>, vector<10x16x8xf32>
    %55 = vector.shape_cast %54 : vector<10x16x8xf32> to vector<160x8xf32>
    %56 = arith.truncf %55 : vector<160x8xf32> to vector<160x8xbf16>
    %57 = tpu.concatenate %56, %28 in 1 : vector<160x8xbf16>, vector<160x120xbf16> -> vector<160x128xbf16>
    %c0_51 = arith.constant 0 : index
    %c640 = arith.constant 640 : index
    %58 = vector.load %arg13[%c0_51, %c640] : memref<160x1152xbf16, #tpu.memory_space<vmem>>, vector<160x128xbf16>
    tpu.vector_store %arg13[%c0_51, %c640], %57 {strides = array<i32>} : memref<160x1152xbf16, #tpu.memory_space<vmem>>, vector<160x128xbf16>,
    %c2 = arith.constant 2 : index
    %c7_52 = arith.constant 7 : index
    %c0_53 = arith.constant 0 : index
    %59 = vector.load %arg11[%c2, %c7_52, %c0_53] : memref<12x32x8xf32, #tpu.memory_space<vmem>>, vector<10x16x8xf32>
    %60 = vector.shape_cast %59 : vector<10x16x8xf32> to vector<160x8xf32>
    %61 = arith.truncf %60 : vector<160x8xf32> to vector<160x8xbf16>
    %62 = tpu.concatenate %61, %28 in 1 : vector<160x8xbf16>, vector<160x120xbf16> -> vector<160x128xbf16>
    %c0_54 = arith.constant 0 : index
    %c768 = arith.constant 768 : index
    %63 = vector.load %arg13[%c0_54, %c768] : memref<160x1152xbf16, #tpu.memory_space<vmem>>, vector<160x128xbf16>
    tpu.vector_store %arg13[%c0_54, %c768], %62 {strides = array<i32>} : memref<160x1152xbf16, #tpu.memory_space<vmem>>, vector<160x128xbf16>,
    %c2_55 = arith.constant 2 : index
    %c8_56 = arith.constant 8 : index
    %c0_57 = arith.constant 0 : index
    %64 = vector.load %arg11[%c2_55, %c8_56, %c0_57] : memref<12x32x8xf32, #tpu.memory_space<vmem>>, vector<10x16x8xf32>
    %65 = vector.shape_cast %64 : vector<10x16x8xf32> to vector<160x8xf32>
    %66 = arith.truncf %65 : vector<160x8xf32> to vector<160x8xbf16>
    %67 = tpu.concatenate %66, %28 in 1 : vector<160x8xbf16>, vector<160x120xbf16> -> vector<160x128xbf16>
    %c0_58 = arith.constant 0 : index
    %c896 = arith.constant 896 : index
    %68 = vector.load %arg13[%c0_58, %c896] : memref<160x1152xbf16, #tpu.memory_space<vmem>>, vector<160x128xbf16>
    tpu.vector_store %arg13[%c0_58, %c896], %67 {strides = array<i32>} : memref<160x1152xbf16, #tpu.memory_space<vmem>>, vector<160x128xbf16>,
    %c2_59 = arith.constant 2 : index
    %c9_60 = arith.constant 9 : index
    %c0_61 = arith.constant 0 : index
    %69 = vector.load %arg11[%c2_59, %c9_60, %c0_61] : memref<12x32x8xf32, #tpu.memory_space<vmem>>, vector<10x16x8xf32>
    %70 = vector.shape_cast %69 : vector<10x16x8xf32> to vector<160x8xf32>
    %71 = arith.truncf %70 : vector<160x8xf32> to vector<160x8xbf16>
    %72 = tpu.concatenate %71, %28 in 1 : vector<160x8xbf16>, vector<160x120xbf16> -> vector<160x128xbf16>
    %c0_62 = arith.constant 0 : index
    %c1024 = arith.constant 1024 : index
    %73 = vector.load %arg13[%c0_62, %c1024] : memref<160x1152xbf16, #tpu.memory_space<vmem>>, vector<160x128xbf16>
    tpu.vector_store %arg13[%c0_62, %c1024], %72 {strides = array<i32>} : memref<160x1152xbf16, #tpu.memory_space<vmem>>, vector<160x128xbf16>,
    %c0_63 = arith.constant 0 : index
    %c0_64 = arith.constant 0 : index
    %74 = vector.load %arg13[%c0_63, %c0_64] : memref<160x1152xbf16, #tpu.memory_space<vmem>>, vector<160x1152xbf16>
    %c0_65 = arith.constant 0 : index
    %c0_66 = arith.constant 0 : index
    %75 = vector.load %arg6[%c0_65, %c0_66] : memref<1152x4xbf16, #tpu.memory_space<vmem>>, vector<1152x4xbf16>
    %cst_67 = arith.constant dense<0.000000e+00> : vector<160x4xf32>
    %76 = tpu.matmul %74, %75, %cst_67 {dimension_numbers = #tpu.dot_dimension_numbers<[1], [0], [0], [1], [0, 0, 1, 1], [], []>} : vector<160x1152xbf16>, vector<1152x4xbf16>, vector<160x4xf32> -> vector<160x4xf32>
    %c0_68 = arith.constant 0 : index
    %c0_69 = arith.constant 0 : index
    %77 = vector.load %arg7[%c0_68, %c0_69] : memref<1x4xf32, #tpu.memory_space<vmem>>, vector<1x4xf32>
    %78 = vector.broadcast %77 : vector<1x4xf32> to vector<160x4xf32>
    %79 = arith.addf %76, %78 : vector<160x4xf32>
    %cst_70 = arith.constant 0.000000e+00 : f32
    %80 = vector.broadcast %cst_70 : f32 to vector<160x4xf32>
    %81 = arith.maximumf %79, %80 : vector<160x4xf32>
    %82 = vector.shape_cast %81 : vector<160x4xf32> to vector<10x16x4xf32>
    %c0_71 = arith.constant 0 : index
    %c8_72 = arith.constant 8 : index
    %c0_73 = arith.constant 0 : index
    %83 = vector.load %arg12[%c0_71, %c8_72, %c0_73] : memref<10x32x4xf32, #tpu.memory_space<vmem>>, vector<10x16x4xf32>
    tpu.vector_store %arg12[%c0_71, %c8_72, %c0_73], %82 {strides = array<i32>} : memref<10x32x4xf32, #tpu.memory_space<vmem>>, vector<10x16x4xf32>,
    %c0_i32 = arith.constant 0 : i32
    %84 = arith.cmpi eq, %arg1, %c0_i32 : i32
    %85 = arith.extui %84 : i1 to i32
    %c0_i32_74 = arith.constant 0 : i32
    %86 = arith.cmpi ne, %85, %c0_i32_74 : i32
    scf.if %86 {
      %cst_133 = arith.constant 0.000000e+00 : f32
      %147 = vector.broadcast %cst_133 : f32 to vector<1x32x4xf32>
      %c0_134 = arith.constant 0 : index
      %c0_135 = arith.constant 0 : index
      %c0_136 = arith.constant 0 : index
      %148 = vector.load %arg12[%c0_134, %c0_135, %c0_136] : memref<10x32x4xf32, #tpu.memory_space<vmem>>, vector<1x32x4xf32>
      tpu.vector_store %arg12[%c0_134, %c0_135, %c0_136], %147 {strides = array<i32>} : memref<10x32x4xf32, #tpu.memory_space<vmem>>, vector<1x32x4xf32>,
    } else {
    }
    %c1_i32 = arith.constant 1 : i32
    %87 = arith.cmpi eq, %arg1, %c1_i32 : i32
    %88 = arith.extui %87 : i1 to i32
    %c0_i32_75 = arith.constant 0 : i32
    %89 = arith.cmpi ne, %88, %c0_i32_75 : i32
    scf.if %89 {
      %cst_133 = arith.constant 0.000000e+00 : f32
      %147 = vector.broadcast %cst_133 : f32 to vector<1x32x4xf32>
      %c9_134 = arith.constant 9 : index
      %c0_135 = arith.constant 0 : index
      %c0_136 = arith.constant 0 : index
      %148 = vector.load %arg12[%c9_134, %c0_135, %c0_136] : memref<10x32x4xf32, #tpu.memory_space<vmem>>, vector<1x32x4xf32>
      tpu.vector_store %arg12[%c9_134, %c0_135, %c0_136], %147 {strides = array<i32>} : memref<10x32x4xf32, #tpu.memory_space<vmem>>, vector<1x32x4xf32>,
    } else {
    }
    %cst_76 = arith.constant 0.000000e+00 : bf16
    %90 = vector.broadcast %cst_76 : bf16 to vector<128x124xbf16>
    %c0_77 = arith.constant 0 : index
    %c7_78 = arith.constant 7 : index
    %c0_79 = arith.constant 0 : index
    %91 = vector.load %arg12[%c0_77, %c7_78, %c0_79] : memref<10x32x4xf32, #tpu.memory_space<vmem>>, vector<8x16x4xf32>
    %92 = vector.shape_cast %91 : vector<8x16x4xf32> to vector<128x4xf32>
    %93 = arith.truncf %92 : vector<128x4xf32> to vector<128x4xbf16>
    %94 = tpu.concatenate %93, %90 in 1 : vector<128x4xbf16>, vector<128x124xbf16> -> vector<128x128xbf16>
    %c0_80 = arith.constant 0 : index
    %c0_81 = arith.constant 0 : index
    %95 = vector.load %arg13[%c0_80, %c0_81] : memref<160x1152xbf16, #tpu.memory_space<vmem>>, vector<128x128xbf16>
    tpu.vector_store %arg13[%c0_80, %c0_81], %94 {strides = array<i32>} : memref<160x1152xbf16, #tpu.memory_space<vmem>>, vector<128x128xbf16>,
    %c0_82 = arith.constant 0 : index
    %c8_83 = arith.constant 8 : index
    %c0_84 = arith.constant 0 : index
    %96 = vector.load %arg12[%c0_82, %c8_83, %c0_84] : memref<10x32x4xf32, #tpu.memory_space<vmem>>, vector<8x16x4xf32>
    %97 = vector.shape_cast %96 : vector<8x16x4xf32> to vector<128x4xf32>
    %98 = arith.truncf %97 : vector<128x4xf32> to vector<128x4xbf16>
    %99 = tpu.concatenate %98, %90 in 1 : vector<128x4xbf16>, vector<128x124xbf16> -> vector<128x128xbf16>
    %c0_85 = arith.constant 0 : index
    %c128_86 = arith.constant 128 : index
    %100 = vector.load %arg13[%c0_85, %c128_86] : memref<160x1152xbf16, #tpu.memory_space<vmem>>, vector<128x128xbf16>
    tpu.vector_store %arg13[%c0_85, %c128_86], %99 {strides = array<i32>} : memref<160x1152xbf16, #tpu.memory_space<vmem>>, vector<128x128xbf16>,
    %c0_87 = arith.constant 0 : index
    %c9_88 = arith.constant 9 : index
    %c0_89 = arith.constant 0 : index
    %101 = vector.load %arg12[%c0_87, %c9_88, %c0_89] : memref<10x32x4xf32, #tpu.memory_space<vmem>>, vector<8x16x4xf32>
    %102 = vector.shape_cast %101 : vector<8x16x4xf32> to vector<128x4xf32>
    %103 = arith.truncf %102 : vector<128x4xf32> to vector<128x4xbf16>
    %104 = tpu.concatenate %103, %90 in 1 : vector<128x4xbf16>, vector<128x124xbf16> -> vector<128x128xbf16>
    %c0_90 = arith.constant 0 : index
    %c256_91 = arith.constant 256 : index
    %105 = vector.load %arg13[%c0_90, %c256_91] : memref<160x1152xbf16, #tpu.memory_space<vmem>>, vector<128x128xbf16>
    tpu.vector_store %arg13[%c0_90, %c256_91], %104 {strides = array<i32>} : memref<160x1152xbf16, #tpu.memory_space<vmem>>, vector<128x128xbf16>,
    %c1_92 = arith.constant 1 : index
    %c7_93 = arith.constant 7 : index
    %c0_94 = arith.constant 0 : index
    %106 = vector.load %arg12[%c1_92, %c7_93, %c0_94] : memref<10x32x4xf32, #tpu.memory_space<vmem>>, vector<8x16x4xf32>
    %107 = vector.shape_cast %106 : vector<8x16x4xf32> to vector<128x4xf32>
    %108 = arith.truncf %107 : vector<128x4xf32> to vector<128x4xbf16>
    %109 = tpu.concatenate %108, %90 in 1 : vector<128x4xbf16>, vector<128x124xbf16> -> vector<128x128xbf16>
    %c0_95 = arith.constant 0 : index
    %c384_96 = arith.constant 384 : index
    %110 = vector.load %arg13[%c0_95, %c384_96] : memref<160x1152xbf16, #tpu.memory_space<vmem>>, vector<128x128xbf16>
    tpu.vector_store %arg13[%c0_95, %c384_96], %109 {strides = array<i32>} : memref<160x1152xbf16, #tpu.memory_space<vmem>>, vector<128x128xbf16>,
    %c1_97 = arith.constant 1 : index
    %c8_98 = arith.constant 8 : index
    %c0_99 = arith.constant 0 : index
    %111 = vector.load %arg12[%c1_97, %c8_98, %c0_99] : memref<10x32x4xf32, #tpu.memory_space<vmem>>, vector<8x16x4xf32>
    %112 = vector.shape_cast %111 : vector<8x16x4xf32> to vector<128x4xf32>
    %113 = arith.truncf %112 : vector<128x4xf32> to vector<128x4xbf16>
    %114 = tpu.concatenate %113, %90 in 1 : vector<128x4xbf16>, vector<128x124xbf16> -> vector<128x128xbf16>
    %c0_100 = arith.constant 0 : index
    %c512_101 = arith.constant 512 : index
    %115 = vector.load %arg13[%c0_100, %c512_101] : memref<160x1152xbf16, #tpu.memory_space<vmem>>, vector<128x128xbf16>
    tpu.vector_store %arg13[%c0_100, %c512_101], %114 {strides = array<i32>} : memref<160x1152xbf16, #tpu.memory_space<vmem>>, vector<128x128xbf16>,
    %c1_102 = arith.constant 1 : index
    %c9_103 = arith.constant 9 : index
    %c0_104 = arith.constant 0 : index
    %116 = vector.load %arg12[%c1_102, %c9_103, %c0_104] : memref<10x32x4xf32, #tpu.memory_space<vmem>>, vector<8x16x4xf32>
    %117 = vector.shape_cast %116 : vector<8x16x4xf32> to vector<128x4xf32>
    %118 = arith.truncf %117 : vector<128x4xf32> to vector<128x4xbf16>
    %119 = tpu.concatenate %118, %90 in 1 : vector<128x4xbf16>, vector<128x124xbf16> -> vector<128x128xbf16>
    %c0_105 = arith.constant 0 : index
    %c640_106 = arith.constant 640 : index
    %120 = vector.load %arg13[%c0_105, %c640_106] : memref<160x1152xbf16, #tpu.memory_space<vmem>>, vector<128x128xbf16>
    tpu.vector_store %arg13[%c0_105, %c640_106], %119 {strides = array<i32>} : memref<160x1152xbf16, #tpu.memory_space<vmem>>, vector<128x128xbf16>,
    %c2_107 = arith.constant 2 : index
    %c7_108 = arith.constant 7 : index
    %c0_109 = arith.constant 0 : index
    %121 = vector.load %arg12[%c2_107, %c7_108, %c0_109] : memref<10x32x4xf32, #tpu.memory_space<vmem>>, vector<8x16x4xf32>
    %122 = vector.shape_cast %121 : vector<8x16x4xf32> to vector<128x4xf32>
    %123 = arith.truncf %122 : vector<128x4xf32> to vector<128x4xbf16>
    %124 = tpu.concatenate %123, %90 in 1 : vector<128x4xbf16>, vector<128x124xbf16> -> vector<128x128xbf16>
    %c0_110 = arith.constant 0 : index
    %c768_111 = arith.constant 768 : index
    %125 = vector.load %arg13[%c0_110, %c768_111] : memref<160x1152xbf16, #tpu.memory_space<vmem>>, vector<128x128xbf16>
    tpu.vector_store %arg13[%c0_110, %c768_111], %124 {strides = array<i32>} : memref<160x1152xbf16, #tpu.memory_space<vmem>>, vector<128x128xbf16>,
    %c2_112 = arith.constant 2 : index
    %c8_113 = arith.constant 8 : index
    %c0_114 = arith.constant 0 : index
    %126 = vector.load %arg12[%c2_112, %c8_113, %c0_114] : memref<10x32x4xf32, #tpu.memory_space<vmem>>, vector<8x16x4xf32>
    %127 = vector.shape_cast %126 : vector<8x16x4xf32> to vector<128x4xf32>
    %128 = arith.truncf %127 : vector<128x4xf32> to vector<128x4xbf16>
    %129 = tpu.concatenate %128, %90 in 1 : vector<128x4xbf16>, vector<128x124xbf16> -> vector<128x128xbf16>
    %c0_115 = arith.constant 0 : index
    %c896_116 = arith.constant 896 : index
    %130 = vector.load %arg13[%c0_115, %c896_116] : memref<160x1152xbf16, #tpu.memory_space<vmem>>, vector<128x128xbf16>
    tpu.vector_store %arg13[%c0_115, %c896_116], %129 {strides = array<i32>} : memref<160x1152xbf16, #tpu.memory_space<vmem>>, vector<128x128xbf16>,
    %c2_117 = arith.constant 2 : index
    %c9_118 = arith.constant 9 : index
    %c0_119 = arith.constant 0 : index
    %131 = vector.load %arg12[%c2_117, %c9_118, %c0_119] : memref<10x32x4xf32, #tpu.memory_space<vmem>>, vector<8x16x4xf32>
    %132 = vector.shape_cast %131 : vector<8x16x4xf32> to vector<128x4xf32>
    %133 = arith.truncf %132 : vector<128x4xf32> to vector<128x4xbf16>
    %134 = tpu.concatenate %133, %90 in 1 : vector<128x4xbf16>, vector<128x124xbf16> -> vector<128x128xbf16>
    %c0_120 = arith.constant 0 : index
    %c1024_121 = arith.constant 1024 : index
    %135 = vector.load %arg13[%c0_120, %c1024_121] : memref<160x1152xbf16, #tpu.memory_space<vmem>>, vector<128x128xbf16>
    tpu.vector_store %arg13[%c0_120, %c1024_121], %134 {strides = array<i32>} : memref<160x1152xbf16, #tpu.memory_space<vmem>>, vector<128x128xbf16>,
    %c0_122 = arith.constant 0 : index
    %c0_123 = arith.constant 0 : index
    %136 = vector.load %arg13[%c0_122, %c0_123] : memref<160x1152xbf16, #tpu.memory_space<vmem>>, vector<128x1152xbf16>
    %c0_124 = arith.constant 0 : index
    %c0_125 = arith.constant 0 : index
    %137 = vector.load %arg8[%c0_124, %c0_125] : memref<1152x4xbf16, #tpu.memory_space<vmem>>, vector<1152x4xbf16>
    %cst_126 = arith.constant dense<0.000000e+00> : vector<128x4xf32>
    %138 = tpu.matmul %136, %137, %cst_126 {dimension_numbers = #tpu.dot_dimension_numbers<[1], [0], [0], [1], [0, 0, 1, 1], [], []>} : vector<128x1152xbf16>, vector<1152x4xbf16>, vector<128x4xf32> -> vector<128x4xf32>
    %c0_127 = arith.constant 0 : index
    %c0_128 = arith.constant 0 : index
    %139 = vector.load %arg9[%c0_127, %c0_128] : memref<1x4xf32, #tpu.memory_space<vmem>>, vector<1x4xf32>
    %140 = vector.broadcast %139 : vector<1x4xf32> to vector<128x4xf32>
    %141 = arith.addf %138, %140 : vector<128x4xf32>
    %cst_129 = arith.constant 0.000000e+00 : f32
    %142 = vector.broadcast %cst_129 : f32 to vector<128x4xf32>
    %143 = arith.maximumf %141, %142 : vector<128x4xf32>
    %c0_130 = arith.constant 0 : index
    %c0_131 = arith.constant 0 : index
    %c0_132 = arith.constant 0 : index
    %144 = vector.load %arg10[%c0_130, %c0_131, %c0_132] : memref<1x128x4xf32, #tpu.memory_space<vmem>>, vector<1x128x4xf32>
    %145 = vector.shape_cast %144 : vector<1x128x4xf32> to vector<128x4xf32>
    %146 = vector.shape_cast %143 : vector<128x4xf32> to vector<1x128x4xf32>
    tpu.vector_store %arg10[%c0_130, %c0_131, %c0_132], %146 {strides = array<i32>} : memref<1x128x4xf32, #tpu.memory_space<vmem>>, vector<1x128x4xf32>,
    return
  }
  func.func @transform_0(%arg0: i32, %arg1: i32) -> (i32, i32, i32, i32) {
    %c0_i32 = arith.constant 0 : i32
    %c0_i32_0 = arith.constant 0 : i32
    %c0_i32_1 = arith.constant 0 : i32
    %c0_i32_2 = arith.constant 0 : i32
    return %arg0, %c0_i32, %c0_i32_0, %c0_i32_1 : i32, i32, i32, i32
  }
  func.func @transform_1(%arg0: i32, %arg1: i32) -> (i32, i32, i32, i32) {
    %c0_i32 = arith.constant 0 : i32
    %c0_i32_0 = arith.constant 0 : i32
    %c0_i32_1 = arith.constant 0 : i32
    %c0_i32_2 = arith.constant 0 : i32
    return %arg0, %c0_i32, %c0_i32_0, %c0_i32_1 : i32, i32, i32, i32
  }
  func.func @transform_2(%arg0: i32, %arg1: i32) -> (i32, i32) {
    %c0_i32 = arith.constant 0 : i32
    %c0_i32_0 = arith.constant 0 : i32
    %c0_i32_1 = arith.constant 0 : i32
    return %c0_i32, %c0_i32_0 : i32, i32
  }
  func.func @transform_3(%arg0: i32, %arg1: i32) -> (i32, i32) {
    %c0_i32 = arith.constant 0 : i32
    %c0_i32_0 = arith.constant 0 : i32
    %c0_i32_1 = arith.constant 0 : i32
    return %c0_i32, %c0_i32_0 : i32, i32
  }
  func.func @transform_4(%arg0: i32, %arg1: i32) -> (i32, i32) {
    %c0_i32 = arith.constant 0 : i32
    %c0_i32_0 = arith.constant 0 : i32
    %c0_i32_1 = arith.constant 0 : i32
    return %c0_i32, %c0_i32_0 : i32, i32
  }
  func.func @transform_5(%arg0: i32, %arg1: i32) -> (i32, i32) {
    %c0_i32 = arith.constant 0 : i32
    %c0_i32_0 = arith.constant 0 : i32
    %c0_i32_1 = arith.constant 0 : i32
    return %c0_i32, %c0_i32_0 : i32, i32
  }
  func.func @transform_6(%arg0: i32, %arg1: i32) -> (i32, i32) {
    %c0_i32 = arith.constant 0 : i32
    %c0_i32_0 = arith.constant 0 : i32
    %c0_i32_1 = arith.constant 0 : i32
    return %c0_i32, %c0_i32_0 : i32, i32
  }
  func.func @transform_7(%arg0: i32, %arg1: i32) -> (i32, i32) {
    %c0_i32 = arith.constant 0 : i32
    %c0_i32_0 = arith.constant 0 : i32
    %c0_i32_1 = arith.constant 0 : i32
    return %c0_i32, %c0_i32_0 : i32, i32
  }
  func.func @transform_8(%arg0: i32, %arg1: i32) -> (i32, i32, i32) {
    %c0_i32 = arith.constant 0 : i32
    %c0_i32_0 = arith.constant 0 : i32
    return %arg0, %arg1, %c0_i32 : i32, i32, i32
  }
}

</mosaic_0001>

<llo_original>
// kernel: tpu_custom_call.1
$region0: #{tpu_custom_call.1}
  #allocation0 [shape = 'u32[]', space=smem, size = 0x4, offset = 0x4, fixed_abs, tag = 'smem constant byte address 0x4 - core index']
  #allocation1 [shape = 'u32[144,128]{1,0:T(1,128)}', space=vmem, size = 0x12000, scoped, tag = 'internal scratch']
  #allocation2 [shape = 'f32[12,32,8]{2,1,0:T(8,128)}', space=vmem, size = 0x30000, scoped, tag = 'scratch operand']
  #allocation3 [shape = 'f32[10,32,4]{2,1,0:T(8,128)}', space=vmem, size = 0x28000, scoped, tag = 'scratch operand']
  #allocation4 [shape = 'bf16[160,1152]{1,0:T(16,128)(2,1)}', space=vmem, size = 0x5a000, scoped, tag = 'scratch operand']
  %s0 = inlined_call_operand.vmem [shape: f32[2,8,8,4], index: 0, kind: input, shape index: {}]
  %s1 = inlined_call_operand.vmem [shape: f32[2,20,16,4], index: 1, kind: input, shape index: {}]
  %s2 = inlined_call_operand.vmem [shape: f32[20,8], index: 2, kind: input, shape index: {}]
  %s3 = inlined_call_operand.vmem [shape: f32[8,16], index: 3, kind: input, shape index: {}]
  %s4 = inlined_call_operand.vmem [shape: bf16[1152,4], index: 4, kind: input, shape index: {}]
  %s5 = inlined_call_operand.vmem [shape: f32[1,4], index: 5, kind: input, shape index: {}]
  %s6 = inlined_call_operand.vmem [shape: bf16[1152,4], index: 6, kind: input, shape index: {}]
  %s7 = inlined_call_operand.vmem [shape: f32[1,4], index: 7, kind: input, shape index: {}]
  %s8 = inlined_call_operand.vmem [shape: f32[2,256,4], index: 8, kind: output, shape index: {}]
  %s9 = sld [smem:[#allocation0]]
  $region73: #{tpu_custom_call.1} parent=0
    _
  %s11 = ssub.s32 1, %s9
  %s12 = scalar_select 0, %s11, %s9
  loop: start=0, step=1, limit=6
  $region2: #{tpu_custom_call.1} parent=0 // loop_pre_header
    _
  $region3: #{tpu_custom_call.1} parent=0 // loop_header
    %s14 = sphi 0, %s18
    %p15 = scmp.ge.s32.totalorder %s14, 6
    %s21 = sphi 0, %s33
    %s22 = sphi 0, %s29
    %s23 = sphi 0, %s21
    %s24 = sphi 0, %s22
    %s25 = sphi 0, %s23
    %s26 = sphi 0, %s24
    %s36 = sphi 0, %s38
    %s39 = sphi 0, %s36
    %s40 = sphi 0, %s39
    %s56 = sphi 0, %s40
    %s62 = sphi 0, %s64
    %s65 = sphi 0, %s62
    %s66 = sphi 0, %s65
    %s82 = sphi 0, %s66
    %s86 = sphi 0, %s86
    %s88 = sphi 0, %s86
    %s89 = sphi 0, %s88
    %s103 = sphi 0, %s89
    %s107 = sphi 0, %s107
    %s109 = sphi 0, %s107
    %s110 = sphi 0, %s109
    %s124 = sphi 0, %s110
    %s128 = sphi 0, %s128
    %s130 = sphi 0, %s128
    %s131 = sphi 0, %s130
    %s145 = sphi 0, %s131
    %s149 = sphi 0, %s149
    %s151 = sphi 0, %s149
    %s152 = sphi 0, %s151
    %s166 = sphi 0, %s152
    %s170 = sphi 0, %s170
    %s172 = sphi 0, %s170
    %s173 = sphi 0, %s172
    %s187 = sphi 0, %s173
    %s191 = sphi 0, %s191
    %s193 = sphi 0, %s191
    %s194 = sphi 0, %s193
    %s208 = sphi 0, %s194
    %s216 = sphi 0, %s218
    %s219 = sphi 0, %s216
    %s220 = sphi 0, %s219
    %s236 = sphi 0, %s220
  $region4: #{tpu_custom_call.1} parent=0 // loop_header_branch
    %17 = sbr.rel (%p15) target = $region8
  $region5: #{tpu_custom_call.1} parent=0 // loop_body
    %s19 = ssub.s32 %s14, 1
    %s20 = ssub.s32 %s14, 2
    %s27 = sadd.s32 1, %s22
    %p28 = scmp.ge.s32.totalorder %s27, 2
    %s29 = scalar_select %p28, 0, %s27
    %s30 = sadd.s32 1, %s21
    %s31 = scalar_select %p28, %s30, %s21
    %p32 = scmp.ge.s32.totalorder %s31, 2
    %s33 = scalar_select %p32, 0, %s31
    %s34 = ssub.s32 %s21, %s33
    %p35 = scmp.eq.s32.totalorder %s34, 0
    %s37 = sadd.s32 %s36, 1
    %s38 = scalar_select %p35, %s36, %s37
    %p41 = pneg %p35
    %p42 = scmp.eq.s32.totalorder %s14, 3
    %p43 = por %p41, %p42
    %p44 = scmp.ne.s32.totalorder %s36, %s39
    %p45 = scmp.eq.s32.totalorder %s14, 0
    %p46 = por %p44, %p45
    %p47 = scmp.ne.s32.totalorder %s36, %s39
    %p48 = scmp.eq.s32.totalorder %s19, 3
    %p49 = por %p47, %p48
    %p50 = scmp.ne.s32.totalorder %s39, %s40
    %p51 = scmp.eq.s32.totalorder %s19, 0
    %p52 = por %p50, %p51
    %p53 = scmp.ne.s32.totalorder %s39, %s40
    %p54 = scmp.eq.s32.totalorder %s20, 3
    %p55 = por %p53, %p54
    %p57 = scmp.ne.s32.totalorder %s40, %s56
    %p58 = scmp.eq.s32.totalorder %s20, 0
    %p59 = por %p57, %p58
    %s60 = ssub.s32 %s21, %s33
    %p61 = scmp.eq.s32.totalorder %s60, 0
    %s63 = sadd.s32 %s62, 1
    %s64 = scalar_select %p61, %s62, %s63
    %p67 = pneg %p61
    %p68 = scmp.eq.s32.totalorder %s14, 3
    %p69 = por %p67, %p68
    %p70 = scmp.ne.s32.totalorder %s62, %s65
    %p71 = scmp.eq.s32.totalorder %s14, 0
    %p72 = por %p70, %p71
    %p73 = scmp.ne.s32.totalorder %s62, %s65
    %p74 = scmp.eq.s32.totalorder %s19, 3
    %p75 = por %p73, %p74
    %p76 = scmp.ne.s32.totalorder %s65, %s66
    %p77 = scmp.eq.s32.totalorder %s19, 0
    %p78 = por %p76, %p77
    %p79 = scmp.ne.s32.totalorder %s65, %s66
    %p80 = scmp.eq.s32.totalorder %s20, 3
    %p81 = por %p79, %p80
    %p83 = scmp.ne.s32.totalorder %s66, %s82
    %p84 = scmp.eq.s32.totalorder %s20, 0
    %p85 = por %p83, %p84
    %s87 = sadd.s32 %s86, 1
    %p90 = scmp.eq.s32.totalorder %s14, 3
    %p91 = scmp.ne.s32.totalorder %s86, %s88
    %p92 = scmp.eq.s32.totalorder %s14, 0
    %p93 = por %p91, %p92
    %p94 = scmp.ne.s32.totalorder %s86, %s88
    %p95 = scmp.eq.s32.totalorder %s19, 3
    %p96 = por %p94, %p95
    %p97 = scmp.ne.s32.totalorder %s88, %s89
    %p98 = scmp.eq.s32.totalorder %s19, 0
    %p99 = por %p97, %p98
    %p100 = scmp.ne.s32.totalorder %s88, %s89
    %p101 = scmp.eq.s32.totalorder %s20, 3
    %p102 = por %p100, %p101
    %p104 = scmp.ne.s32.totalorder %s89, %s103
    %p105 = scmp.eq.s32.totalorder %s20, 0
    %p106 = por %p104, %p105
    %s108 = sadd.s32 %s107, 1
    %p111 = scmp.eq.s32.totalorder %s14, 3
    %p112 = scmp.ne.s32.totalorder %s107, %s109
    %p113 = scmp.eq.s32.totalorder %s14, 0
    %p114 = por %p112, %p113
    %p115 = scmp.ne.s32.totalorder %s107, %s109
    %p116 = scmp.eq.s32.totalorder %s19, 3
    %p117 = por %p115, %p116
    %p118 = scmp.ne.s32.totalorder %s109, %s110
    %p119 = scmp.eq.s32.totalorder %s19, 0
    %p120 = por %p118, %p119
    %p121 = scmp.ne.s32.totalorder %s109, %s110
    %p122 = scmp.eq.s32.totalorder %s20, 3
    %p123 = por %p121, %p122
    %p125 = scmp.ne.s32.totalorder %s110, %s124
    %p126 = scmp.eq.s32.totalorder %s20, 0
    %p127 = por %p125, %p126
    %s129 = sadd.s32 %s128, 1
    %p132 = scmp.eq.s32.totalorder %s14, 3
    %p133 = scmp.ne.s32.totalorder %s128, %s130
    %p134 = scmp.eq.s32.totalorder %s14, 0
    %p135 = por %p133, %p134
    %p136 = scmp.ne.s32.totalorder %s128, %s130
    %p137 = scmp.eq.s32.totalorder %s19, 3
    %p138 = por %p136, %p137
    %p139 = scmp.ne.s32.totalorder %s130, %s131
    %p140 = scmp.eq.s32.totalorder %s19, 0
    %p141 = por %p139, %p140
    %p142 = scmp.ne.s32.totalorder %s130, %s131
    %p143 = scmp.eq.s32.totalorder %s20, 3
    %p144 = por %p142, %p143
    %p146 = scmp.ne.s32.totalorder %s131, %s145
    %p147 = scmp.eq.s32.totalorder %s20, 0
    %p148 = por %p146, %p147
    %s150 = sadd.s32 %s149, 1
    %p153 = scmp.eq.s32.totalorder %s14, 3
    %p154 = scmp.ne.s32.totalorder %s149, %s151
    %p155 = scmp.eq.s32.totalorder %s14, 0
    %p156 = por %p154, %p155
    %p157 = scmp.ne.s32.totalorder %s149, %s151
    %p158 = scmp.eq.s32.totalorder %s19, 3
    %p159 = por %p157, %p158
    %p160 = scmp.ne.s32.totalorder %s151, %s152
    %p161 = scmp.eq.s32.totalorder %s19, 0
    %p162 = por %p160, %p161
    %p163 = scmp.ne.s32.totalorder %s151, %s152
    %p164 = scmp.eq.s32.totalorder %s20, 3
    %p165 = por %p163, %p164
    %p167 = scmp.ne.s32.totalorder %s152, %s166
    %p168 = scmp.eq.s32.totalorder %s20, 0
    %p169 = por %p167, %p168
    %s171 = sadd.s32 %s170, 1
    %p174 = scmp.eq.s32.totalorder %s14, 3
    %p175 = scmp.ne.s32.totalorder %s170, %s172
    %p176 = scmp.eq.s32.totalorder %s14, 0
    %p177 = por %p175, %p176
    %p178 = scmp.ne.s32.totalorder %s170, %s172
    %p179 = scmp.eq.s32.totalorder %s19, 3
    %p180 = por %p178, %p179
    %p181 = scmp.ne.s32.totalorder %s172, %s173
    %p182 = scmp.eq.s32.totalorder %s19, 0
    %p183 = por %p181, %p182
    %p184 = scmp.ne.s32.totalorder %s172, %s173
    %p185 = scmp.eq.s32.totalorder %s20, 3
    %p186 = por %p184, %p185
    %p188 = scmp.ne.s32.totalorder %s173, %s187
    %p189 = scmp.eq.s32.totalorder %s20, 0
    %p190 = por %p188, %p189
    %s192 = sadd.s32 %s191, 1
    %p195 = scmp.eq.s32.totalorder %s14, 3
    %p196 = scmp.ne.s32.totalorder %s191, %s193
    %p197 = scmp.eq.s32.totalorder %s14, 0
    %p198 = por %p196, %p197
    %p199 = scmp.ne.s32.totalorder %s191, %s193
    %p200 = scmp.eq.s32.totalorder %s19, 3
    %p201 = por %p199, %p200
    %p202 = scmp.ne.s32.totalorder %s193, %s194
    %p203 = scmp.eq.s32.totalorder %s19, 0
    %p204 = por %p202, %p203
    %p205 = scmp.ne.s32.totalorder %s193, %s194
    %p206 = scmp.eq.s32.totalorder %s20, 3
    %p207 = por %p205, %p206
    %p209 = scmp.ne.s32.totalorder %s194, %s208
    %p210 = scmp.eq.s32.totalorder %s20, 0
    %p211 = por %p209, %p210
    %s212 = ssub.s32 %s21, %s33
    %s213 = ssub.s32 %s22, %s29
    %s214 = sor.u32 %s212, %s213
    %p215 = scmp.eq.s32.totalorder %s214, 0
    %s217 = sadd.s32 %s216, 1
    %s218 = scalar_select %p215, %s216, %s217
    %p221 = pneg %p215
    %p222 = scmp.eq.s32.totalorder %s14, 3
    %p223 = por %p221, %p222
    %p224 = scmp.ne.s32.totalorder %s216, %s219
    %p225 = scmp.eq.s32.totalorder %s14, 0
    %p226 = por %p224, %p225
    %p227 = scmp.ne.s32.totalorder %s216, %s219
    %p228 = scmp.eq.s32.totalorder %s19, 3
    %p229 = por %p227, %p228
    %p230 = scmp.ne.s32.totalorder %s219, %s220
    %p231 = scmp.eq.s32.totalorder %s19, 0
    %p232 = por %p230, %p231
    %p233 = scmp.ne.s32.totalorder %s219, %s220
    %p234 = scmp.eq.s32.totalorder %s20, 3
    %p235 = por %p233, %p234
    %p237 = scmp.ne.s32.totalorder %s220, %s236
    %p238 = scmp.eq.s32.totalorder %s20, 0
    %p239 = por %p237, %p238
    %p240 = scmp.le.s32.totalorder 1, %s14
    %p241 = scmp.lt.s32.totalorder %s14, 5
    %p242 = pnand %p240, %p241
    %p243 = pneg %p242
    // Predicated region
    $region9: #{tpu_custom_call.1} parent=5 // pred_check
      _
    $region10: #{tpu_custom_call.1} parent=5 // pred_check_branch
      %245 = sbr.rel (%p242) target = $region12
    $region11: #{tpu_custom_call.1} parent=5 // pred_region
      %s246 = ssub.s32 %s14, 1
      // Predicated region
      $region13: #{tpu_custom_call.1} parent=11 // pred_check
        %p247 = pneg %p99
      $region14: #{tpu_custom_call.1} parent=11 // pred_check_branch
        %249 = sbr.rel (%p247) target = $region16
      $region15: #{tpu_custom_call.1} parent=11 // pred_region
        _
      $region16: #{tpu_custom_call.1} parent=11 // pred_fallthru
        _
      // Predicated region
      $region17: #{tpu_custom_call.1} parent=11 // pred_check
        %p250 = pneg %p120
      $region18: #{tpu_custom_call.1} parent=11 // pred_check_branch
        %252 = sbr.rel (%p250) target = $region20
      $region19: #{tpu_custom_call.1} parent=11 // pred_region
        _
      $region20: #{tpu_custom_call.1} parent=11 // pred_fallthru
        _
      // Predicated region
      $region21: #{tpu_custom_call.1} parent=11 // pred_check
        %p253 = pneg %p141
      $region22: #{tpu_custom_call.1} parent=11 // pred_check_branch
        %255 = sbr.rel (%p253) target = $region24
      $region23: #{tpu_custom_call.1} parent=11 // pred_region
        _
      $region24: #{tpu_custom_call.1} parent=11 // pred_fallthru
        _
      // Predicated region
      $region25: #{tpu_custom_call.1} parent=11 // pred_check
        %p256 = pneg %p162
      $region26: #{tpu_custom_call.1} parent=11 // pred_check_branch
        %258 = sbr.rel (%p256) target = $region28
      $region27: #{tpu_custom_call.1} parent=11 // pred_region
        _
      $region28: #{tpu_custom_call.1} parent=11 // pred_fallthru
        _
      // Predicated region
      $region29: #{tpu_custom_call.1} parent=11 // pred_check
        %p259 = pneg %p183
      $region30: #{tpu_custom_call.1} parent=11 // pred_check_branch
        %261 = sbr.rel (%p259) target = $region32
      $region31: #{tpu_custom_call.1} parent=11 // pred_region
        _
      $region32: #{tpu_custom_call.1} parent=11 // pred_fallthru
        _
      // Predicated region
      $region33: #{tpu_custom_call.1} parent=11 // pred_check
        %p262 = pneg %p204
      $region34: #{tpu_custom_call.1} parent=11 // pred_check_branch
        %264 = sbr.rel (%p262) target = $region36
      $region35: #{tpu_custom_call.1} parent=11 // pred_region
        _
      $region36: #{tpu_custom_call.1} parent=11 // pred_fallthru
        _
    $region12: #{tpu_custom_call.1} parent=5 // pred_fallthru
      _
    %p265 = scmp.lt.s32.totalorder %s14, 4
    // Predicated region
    $region37: #{tpu_custom_call.1} parent=5 // pred_check
      %p266 = pneg %p265
    $region38: #{tpu_custom_call.1} parent=5 // pred_check_branch
      %268 = sbr.rel (%p266) target = $region40
    $region39: #{tpu_custom_call.1} parent=5 // pred_region
      // Predicated region
      $region41: #{tpu_custom_call.1} parent=39 // pred_check
        %p269 = pneg %p46
      $region42: #{tpu_custom_call.1} parent=39 // pred_check_branch
        %271 = sbr.rel (%p269) target = $region44
      $region43: #{tpu_custom_call.1} parent=39 // pred_region
        %p272 = scmp.lt.s32.totalorder %s21, 1
        %s273 = scalar_select %p272, %s21, 1
        %s274 = smul.addr %s273, 8
        %s275 = smul.addr %s274, 8
        %s276 = scalar_lea.vmem %s0, %s275
      $region44: #{tpu_custom_call.1} parent=39 // pred_fallthru
        _
      // Predicated region
      $region45: #{tpu_custom_call.1} parent=39 // pred_check
        %p277 = pneg %p72
      $region46: #{tpu_custom_call.1} parent=39 // pred_check_branch
        %279 = sbr.rel (%p277) target = $region48
      $region47: #{tpu_custom_call.1} parent=39 // pred_region
        %p280 = scmp.lt.s32.totalorder %s21, 1
        %s281 = scalar_select %p280, %s21, 1
        %s282 = smul.addr %s281, 40
        %s283 = smul.addr %s282, 8
        %s284 = scalar_lea.vmem %s1, %s283
      $region48: #{tpu_custom_call.1} parent=39 // pred_fallthru
        _
    $region40: #{tpu_custom_call.1} parent=5 // pred_fallthru
      _
    %p285 = scmp.le.s32.totalorder 1, %s14
    %p286 = scmp.lt.s32.totalorder %s14, 5
    %p287 = pnand %p285, %p286
    %p288 = pneg %p287
    // Predicated region
    $region49: #{tpu_custom_call.1} parent=5 // pred_check
      _
    $region50: #{tpu_custom_call.1} parent=5 // pred_check_branch
      %290 = sbr.rel (%p287) target = $region52
    $region51: #{tpu_custom_call.1} parent=5 // pred_region
      %s291 = ssub.s32 %s14, 1
      %p292 = scmp.lt.s32.totalorder %s23, 1
      %s293 = scalar_select %p292, %s23, 1
      %s294 = smul.addr %s293, 8
      %s295 = smul.addr %s294, 8
      %s296 = scalar_lea.vmem %s0, %s295
      %p297 = pneg %p52
      %p298 = pneg %p49
      %p299 = scmp.lt.s32.totalorder %s23, 1
      %s300 = scalar_select %p299, %s23, 1
      %s301 = smul.addr %s300, 40
      %s302 = smul.addr %s301, 8
      %s303 = scalar_lea.vmem %s1, %s302
      %p304 = pneg %p78
      %p305 = pneg %p75
      %p306 = pneg %p99
      %p307 = pneg %p96
      %p308 = pneg %p120
      %p309 = pneg %p117
      %p310 = pneg %p141
      %p311 = pneg %p138
      %p312 = pneg %p162
      %p313 = pneg %p159
      %p314 = pneg %p183
      %p315 = pneg %p180
      %p316 = pneg %p204
      %p317 = pneg %p201
      %p318 = pneg %p232
      %p319 = pneg %p229
      %s320 = smul.u32 16, %s24
      %p321 = scmp.lt.s32.totalorder %s23, 1
      %s322 = scalar_select %p321, %s23, 1
      %p323 = scmp.lt.s32.totalorder %s320, 31
      %s324 = scalar_select %p323, %s320, 31
      %s325 = smul.addr %s322, 32
      %s326 = sadd.s32 %s324, %s325
      %s327 = smul.addr %s326, 8
      %s328 = scalar_lea.vmem %s8, %s327
      %p329 = scmp.lt.s32.totalorder %s23, 1
      %s330 = scalar_select %p329, %s23, 1
      %s331 = smul.addr %s330, 8
      %s332 = smul.addr %s331, 8
      %s333 = scalar_lea.vmem %s0, %s332
      %p334 = scmp.lt.s32.totalorder %s23, 1
      %s335 = scalar_select %p334, %s23, 1
      %s336 = smul.addr %s335, 40
      %s337 = smul.addr %s336, 8
      %s338 = scalar_lea.vmem %s1, %s337
      %s339 = smul.u32 16, %s24
      %p340 = scmp.lt.s32.totalorder %s23, 1
      %s341 = scalar_select %p340, %s23, 1
      %p342 = scmp.lt.s32.totalorder %s339, 31
      %s343 = scalar_select %p342, %s339, 31
      %s344 = smul.addr %s341, 32
      %s345 = sadd.s32 %s343, %s344
      %s346 = smul.addr %s345, 8
      %s347 = scalar_lea.vmem %s8, %s346
      %s348 = smul.u32 16, %s24
      %s350 = smul.u32 %s24, 8
      %vm351 = vcmask 57344
      %352 = vst.msk [vmem:[#allocation2 + $0x7] sm:$0x1] %vm351, 0.0
      %353 = vst.msk [vmem:[#allocation2 + $0x27] sm:$0x1] %vm351, 0.0
      %354 = vst.msk [vmem:[#allocation2 + $0x47] sm:$0x1] %vm351, 0.0
      %355 = vst.msk [vmem:[#allocation2 + $0x67] sm:$0x1] %vm351, 0.0
      %356 = vst.msk [vmem:[#allocation2 + $0x87] sm:$0x1] %vm351, 0.0
      %357 = vst.msk [vmem:[#allocation2 + $0xa7] sm:$0x1] %vm351, 0.0
      %358 = vst.msk [vmem:[#allocation2 + $0xc7] sm:$0x1] %vm351, 0.0
      %359 = vst.msk [vmem:[#allocation2 + $0xe7] sm:$0x1] %vm351, 0.0
      %360 = vst.msk [vmem:[#allocation2 + $0x107] sm:$0x1] %vm351, 0.0
      %361 = vst.msk [vmem:[#allocation2 + $0x127] sm:$0x1] %vm351, 0.0
      %362 = vst.msk [vmem:[#allocation2 + $0x147] sm:$0x1] %vm351, 0.0
      %363 = vst.msk [vmem:[#allocation2 + $0x167] sm:$0x1] %vm351, 0.0
      %364 = vst.msk [vmem:[#allocation2 + $0x18] sm:$0x1] %vm351, 0.0
      %365 = vst.msk [vmem:[#allocation2 + $0x38] sm:$0x1] %vm351, 0.0
      %366 = vst.msk [vmem:[#allocation2 + $0x58] sm:$0x1] %vm351, 0.0
      %367 = vst.msk [vmem:[#allocation2 + $0x78] sm:$0x1] %vm351, 0.0
      %368 = vst.msk [vmem:[#allocation2 + $0x98] sm:$0x1] %vm351, 0.0
      %369 = vst.msk [vmem:[#allocation2 + $0xb8] sm:$0x1] %vm351, 0.0
      %370 = vst.msk [vmem:[#allocation2 + $0xd8] sm:$0x1] %vm351, 0.0
      %371 = vst.msk [vmem:[#allocation2 + $0xf8] sm:$0x1] %vm351, 0.0
      %372 = vst.msk [vmem:[#allocation2 + $0x118] sm:$0x1] %vm351, 0.0
      %373 = vst.msk [vmem:[#allocation2 + $0x138] sm:$0x1] %vm351, 0.0
      %374 = vst.msk [vmem:[#allocation2 + $0x158] sm:$0x1] %vm351, 0.0
      %375 = vst.msk [vmem:[#allocation2 + $0x178] sm:$0x1] %vm351, 0.0
      %vm376 = vcmask 24576
      %377 = vst.msk [vmem:[#allocation3 + $0x7] sm:$0x1] %vm376, 0.0
      %378 = vst.msk [vmem:[#allocation3 + $0x27] sm:$0x1] %vm376, 0.0
      %379 = vst.msk [vmem:[#allocation3 + $0x47] sm:$0x1] %vm376, 0.0
      %380 = vst.msk [vmem:[#allocation3 + $0x67] sm:$0x1] %vm376, 0.0
      %381 = vst.msk [vmem:[#allocation3 + $0x87] sm:$0x1] %vm376, 0.0
      %382 = vst.msk [vmem:[#allocation3 + $0xa7] sm:$0x1] %vm376, 0.0
      %383 = vst.msk [vmem:[#allocation3 + $0xc7] sm:$0x1] %vm376, 0.0
      %384 = vst.msk [vmem:[#allocation3 + $0xe7] sm:$0x1] %vm376, 0.0
      %385 = vst.msk [vmem:[#allocation3 + $0x107] sm:$0x1] %vm376, 0.0
      %386 = vst.msk [vmem:[#allocation3 + $0x127] sm:$0x1] %vm376, 0.0
      %387 = vst.msk [vmem:[#allocation3 + $0x18] sm:$0x1] %vm376, 0.0
      %388 = vst.msk [vmem:[#allocation3 + $0x38] sm:$0x1] %vm376, 0.0
      %389 = vst.msk [vmem:[#allocation3 + $0x58] sm:$0x1] %vm376, 0.0
      %390 = vst.msk [vmem:[#allocation3 + $0x78] sm:$0x1] %vm376, 0.0
      %391 = vst.msk [vmem:[#allocation3 + $0x98] sm:$0x1] %vm376, 0.0
      %392 = vst.msk [vmem:[#allocation3 + $0xb8] sm:$0x1] %vm376, 0.0
      %393 = vst.msk [vmem:[#allocation3 + $0xd8] sm:$0x1] %vm376, 0.0
      %394 = vst.msk [vmem:[#allocation3 + $0xf8] sm:$0x1] %vm376, 0.0
      %395 = vst.msk [vmem:[#allocation3 + $0x118] sm:$0x1] %vm376, 0.0
      %396 = vst.msk [vmem:[#allocation3 + $0x138] sm:$0x1] %vm376, 0.0
      %v397 = vld [vmem:[%s333] sm:$0xff]
      %v398 = vld [vmem:[%s333 + $0x8] sm:$0xff]
      %v399 = vld [vmem:[%s333 + $0x10] sm:$0xff]
      %v400 = vld [vmem:[%s333 + $0x18] sm:$0xff]
      %v401 = vld [vmem:[%s333 + $0x20] sm:$0xff]
      %v402 = vld [vmem:[%s333 + $0x28] sm:$0xff]
      %v403 = vld [vmem:[%s333 + $0x30] sm:$0xff]
      %v404 = vld [vmem:[%s333 + $0x38] sm:$0xff]
      %s405 = scalar_lea.vmem %s2, %s350
      %v406 = vld [vmem:[%s405] sm:$0xff]
      %v407 = vld [vmem:[%s405 + $0x8] sm:$0xf]
      %v408 = vcombine.low %v397, %v399
      %v409 = vcombine.high %v397, %v399
      %v411 = vunpack.c.l.s4 1983009808
      %v412 = vunpack.c.0.s8 %v411
      %v413 = vlaneseq
      %v414 = vshrl.u32 %v413, 7
      %v415 = vsub.s32 %v412, %v414
      %v416 = vrot.slane %v408, %v415
      %v418 = vunpack.c.l.s4 1983009808
      %v419 = vunpack.c.0.s8 %v418
      %v420 = vlaneseq
      %v421 = vshrl.u32 %v420, 7
      %v422 = vsub.s32 %v419, %v421
      %v423 = vrot.slane %v409, %v422
      %v424 = vcombine.low %v398, %v400
      %v425 = vcombine.high %v398, %v400
      %v427 = vunpack.c.l.s4 1983009808
      %v428 = vunpack.c.0.s8 %v427
      %v429 = vlaneseq
      %v430 = vshrl.u32 %v429, 7
      %v431 = vsub.s32 %v428, %v430
      %v432 = vrot.slane %v424, %v431
      %v434 = vunpack.c.l.s4 1983009808
      %v435 = vunpack.c.0.s8 %v434
      %v436 = vlaneseq
      %v437 = vshrl.u32 %v436, 7
      %v438 = vsub.s32 %v435, %v437
      %v439 = vrot.slane %v425, %v438
      %v440 = vcombine.low %v401, %v403
      %v441 = vcombine.high %v401, %v403
      %v443 = vunpack.c.l.s4 1983009808
      %v444 = vunpack.c.0.s8 %v443
      %v445 = vlaneseq
      %v446 = vshrl.u32 %v445, 7
      %v447 = vsub.s32 %v444, %v446
      %v448 = vrot.slane %v440, %v447
      %v450 = vunpack.c.l.s4 1983009808
      %v451 = vunpack.c.0.s8 %v450
      %v452 = vlaneseq
      %v453 = vshrl.u32 %v452, 7
      %v454 = vsub.s32 %v451, %v453
      %v455 = vrot.slane %v441, %v454
      %v456 = vcombine.low %v402, %v404
      %v457 = vcombine.high %v402, %v404
      %v459 = vunpack.c.l.s4 1983009808
      %v460 = vunpack.c.0.s8 %v459
      %v461 = vlaneseq
      %v462 = vshrl.u32 %v461, 7
      %v463 = vsub.s32 %v460, %v462
      %v464 = vrot.slane %v456, %v463
      %v466 = vunpack.c.l.s4 1983009808
      %v467 = vunpack.c.0.s8 %v466
      %v468 = vlaneseq
      %v469 = vshrl.u32 %v468, 7
      %v470 = vsub.s32 %v467, %v469
      %v471 = vrot.slane %v457, %v470
      %v472 = vcombine.low %v416, %v432
      %v473 = vcombine.high %v416, %v432
      %v475 = vunpack.c.l.s4 1934713408
      %v476 = vunpack.c.0.s8 %v475
      %v477 = vlaneseq
      %v478 = vshrl.u32 %v477, 7
      %v479 = vsub.s32 %v476, %v478
      %v480 = vrot.slane %v472, %v479
      %v482 = vunpack.c.l.s4 1934713408
      %v483 = vunpack.c.0.s8 %v482
      %v484 = vlaneseq
      %v485 = vshrl.u32 %v484, 7
      %v486 = vsub.s32 %v483, %v485
      %v487 = vrot.slane %v473, %v486
      %v488 = vcombine.low %v423, %v439
      %v489 = vcombine.high %v423, %v439
      %v491 = vunpack.c.l.s4 1934713408
      %v492 = vunpack.c.0.s8 %v491
      %v493 = vlaneseq
      %v494 = vshrl.u32 %v493, 7
      %v495 = vsub.s32 %v492, %v494
      %v496 = vrot.slane %v488, %v495
      %v498 = vunpack.c.l.s4 1934713408
      %v499 = vunpack.c.0.s8 %v498
      %v500 = vlaneseq
      %v501 = vshrl.u32 %v500, 7
      %v502 = vsub.s32 %v499, %v501
      %v503 = vrot.slane %v489, %v502
      %v504 = vcombine.low %v448, %v464
      %v505 = vcombine.high %v448, %v464
      %v507 = vunpack.c.l.s4 1934713408
      %v508 = vunpack.c.0.s8 %v507
      %v509 = vlaneseq
      %v510 = vshrl.u32 %v509, 7
      %v511 = vsub.s32 %v508, %v510
      %v512 = vrot.slane %v504, %v511
      %v514 = vunpack.c.l.s4 1934713408
      %v515 = vunpack.c.0.s8 %v514
      %v516 = vlaneseq
      %v517 = vshrl.u32 %v516, 7
      %v518 = vsub.s32 %v515, %v517
      %v519 = vrot.slane %v505, %v518
      %v520 = vcombine.low %v455, %v471
      %v521 = vcombine.high %v455, %v471
      %v523 = vunpack.c.l.s4 1934713408
      %v524 = vunpack.c.0.s8 %v523
      %v525 = vlaneseq
      %v526 = vshrl.u32 %v525, 7
      %v527 = vsub.s32 %v524, %v526
      %v528 = vrot.slane %v520, %v527
      %v530 = vunpack.c.l.s4 1934713408
      %v531 = vunpack.c.0.s8 %v530
      %v532 = vlaneseq
      %v533 = vshrl.u32 %v532, 7
      %v534 = vsub.s32 %v531, %v533
      %v535 = vrot.slane %v521, %v534
      %v536 = vcombine.low %v480, %v512
      %v537 = vcombine.high %v480, %v512
      %v538 = vcombine.low %v487, %v519
      %v539 = vcombine.high %v487, %v519
      %v540 = vcombine.low %v496, %v528
      %v541 = vcombine.high %v496, %v528
      %v542 = vcombine.low %v503, %v535
      %v543 = vcombine.high %v503, %v535
      %545 = vrot.lane.b32.xlu0 %v537, 4
      %v546 = vpop.permute.xlu0 %545
      %549 = vrot.lane.b32.xlu0 %v538, 8
      %v550 = vpop.permute.xlu0 %549
      %553 = vrot.lane.b32.xlu0 %v539, 12
      %v554 = vpop.permute.xlu0 %553
      %557 = vrot.lane.b32.xlu0 %v540, 16
      %v558 = vpop.permute.xlu0 %557
      %561 = vrot.lane.b32.xlu0 %v541, 20
      %v562 = vpop.permute.xlu0 %561
      %565 = vrot.lane.b32.xlu0 %v542, 24
      %v566 = vpop.permute.xlu0 %565
      %569 = vrot.lane.b32.xlu0 %v543, 28
      %v570 = vpop.permute.xlu0 %569
      %vm572 = vcmask 31744
      %v573 = vsel %vm572, %v536, %v546
      %vm574 = vcmask 64512
      %v575 = vsel %vm574, %v573, %v550
      %vm576 = vcmask 97280
      %v577 = vsel %vm576, %v575, %v554
      %vm578 = vcmask 130048
      %v579 = vsel %vm578, %v577, %v558
      %vm580 = vcmask 162816
      %v581 = vsel %vm580, %v579, %v562
      %vm582 = vcmask 195584
      %v583 = vsel %vm582, %v581, %v566
      %vm584 = vcmask 228352
      %v585 = vsel %vm584, %v583, %v570
      %v587 = vsel %vm574, %v406, 0
      %v590 = vsel %vm574, %v407, 0
      %592 = vmatprep.subr.mxu0 0.0
      %593 = vmatpush1.msra.mxu0 %v585
      %594 = vmatprep.subr.mxu0 0.0
      %595 = vmatpush1.msra.mxu0 0.0
      %596 = vmatprep.subr.mxu0 0.0
      %597 = vmatpush1.msra.mxu0 0.0
      %598 = vmatprep.subr.mxu0 0.0
      %599 = vmatpush1.msra.mxu0 0.0
      %600 = vmatprep.subr.mxu0 0.0
      %601 = vmatpush1.msra.mxu0 0.0
      %602 = vmatprep.subr.mxu0 0.0
      %603 = vmatpush1.msra.mxu0 0.0
      %604 = vmatprep.subr.mxu0 0.0
      %605 = vmatpush1.msra.mxu0 0.0
      %606 = vmatprep.subr.mxu0 0.0
      %607 = vmatpush1.msra.mxu0 0.0
      %608 = vmatprep.subr.mxu0 0.0
      %609 = vmatpush1.msra.mxu0 0.0
      %610 = vmatprep.subr.mxu0 0.0
      %611 = vmatpush1.msra.mxu0 0.0
      %612 = vmatprep.subr.mxu0 0.0
      %613 = vmatpush1.msra.mxu0 0.0
      %614 = vmatprep.subr.mxu0 0.0
      %615 = vmatpush1.msra.mxu0 0.0
      %616 = vmatprep.subr.mxu0 0.0
      %617 = vmatpush1.msra.mxu0 0.0
      %618 = vmatprep.subr.mxu0 0.0
      %619 = vmatpush1.msra.mxu0 0.0
      %620 = vmatprep.subr.mxu0 0.0
      %621 = vmatpush1.msra.mxu0 0.0
      %622 = vmatprep.subr.mxu0 0.0
      %623 = vmatpush1.msra.mxu0 0.0
      %624 = vmatprep.subr.mxu0 0.0
      %625 = vmatpush1.msra.mxu0 0.0
      %626 = vmatprep.subr.mxu0 0.0
      %627 = vmatpush1.msra.mxu0 0.0
      %628 = vmatprep.subr.mxu0 0.0
      %629 = vmatpush1.msra.mxu0 0.0
      %630 = vmatprep.subr.mxu0 0.0
      %631 = vmatpush1.msra.mxu0 0.0
      %632 = vmatprep.subr.mxu0 0.0
      %633 = vmatpush1.msra.mxu0 0.0
      %634 = vmatprep.subr.mxu0 0.0
      %635 = vmatpush1.msra.mxu0 0.0
      %636 = vmatprep.subr.mxu0 0.0
      %637 = vmatpush1.msra.mxu0 0.0
      %638 = vmatprep.subr.mxu0 0.0
      %639 = vmatpush1.msra.mxu0 0.0
      %640 = vmatprep.subr.mxu0 0.0
      %641 = vmatpush1.msra.mxu0 0.0
      %642 = vmatprep.subr.mxu0 0.0
      %643 = vmatpush1.msra.mxu0 0.0
      %644 = vmatprep.subr.mxu0 0.0
      %645 = vmatpush1.msra.mxu0 0.0
      %646 = vmatprep.subr.mxu0 0.0
      %647 = vmatpush1.msra.mxu0 0.0
      %648 = vmatprep.subr.mxu0 0.0
      %649 = vmatpush1.msra.mxu0 0.0
      %650 = vmatprep.subr.mxu0 0.0
      %651 = vmatpush1.msra.mxu0 0.0
      %652 = vmatprep.subr.mxu0 0.0
      %653 = vmatpush1.msra.mxu0 0.0
      %654 = vmatprep.subr.mxu0 0.0
      %655 = vmatpush1.msra.mxu0 0.0
      %656 = vmatprep.mubr.f32.mxu0 0.0
      %657 = vmatmul.mubr.f32.gmra.mrb[0].mxu0 %v587
      %v658 = vpop.f32.mrb[0].mxu0
      %v659 = vadd.f32 0.0, %v658
      %v660 = vpop.f32.mrb[0].mxu0
      %661 = vmatprep.mubr.f32.mxu0 0.0
      %662 = vmatmul.mubr.f32.gmra.mrb[0].mxu0 %v590
      %v663 = vpop.f32.mrb[0].mxu0
      %v664 = vadd.f32 0.0, %v663
      %v665 = vpop.f32.mrb[0].mxu0
      %666 = vdwg.mxu0
      %669 = vrot.lane.b32.xlu0 %v659, 124
      %v670 = vpop.permute.xlu0 %669
      %671 = vrot.lane.b32.xlu0 %v664, 124
      %v672 = vpop.permute.xlu0 %671
      %675 = vrot.lane.b32.xlu0 %v659, 120
      %v676 = vpop.permute.xlu0 %675
      %677 = vrot.lane.b32.xlu0 %v664, 120
      %v678 = vpop.permute.xlu0 %677
      %681 = vrot.lane.b32.xlu0 %v659, 116
      %v682 = vpop.permute.xlu0 %681
      %683 = vrot.lane.b32.xlu0 %v664, 116
      %v684 = vpop.permute.xlu0 %683
      %687 = vrot.lane.b32.xlu0 %v659, 112
      %v688 = vpop.permute.xlu0 %687
      %689 = vrot.lane.b32.xlu0 %v664, 112
      %v690 = vpop.permute.xlu0 %689
      %693 = vrot.lane.b32.xlu0 %v659, 108
      %v694 = vpop.permute.xlu0 %693
      %695 = vrot.lane.b32.xlu0 %v664, 108
      %v696 = vpop.permute.xlu0 %695
      %699 = vrot.lane.b32.xlu0 %v659, 104
      %v700 = vpop.permute.xlu0 %699
      %701 = vrot.lane.b32.xlu0 %v664, 104
      %v702 = vpop.permute.xlu0 %701
      %705 = vrot.lane.b32.xlu0 %v659, 100
      %v706 = vpop.permute.xlu0 %705
      %707 = vrot.lane.b32.xlu0 %v664, 100
      %v708 = vpop.permute.xlu0 %707
      %v711 = vcombine.low %v659, %v676
      %v712 = vcombine.high %v659, %v676
      %v714 = vunpack.c.l.s4 1983009808
      %v715 = vunpack.c.0.s8 %v714
      %v716 = vlaneseq
      %v717 = vshrl.u32 %v716, 7
      %v718 = vsub.s32 %v715, %v717
      %v719 = vrot.slane %v711, %v718
      %v721 = vunpack.c.l.s4 1983009808
      %v722 = vunpack.c.0.s8 %v721
      %v723 = vlaneseq
      %v724 = vshrl.u32 %v723, 7
      %v725 = vsub.s32 %v722, %v724
      %v726 = vrot.slane %v712, %v725
      %v727 = vcombine.low %v670, %v682
      %v728 = vcombine.high %v670, %v682
      %v730 = vunpack.c.l.s4 1983009808
      %v731 = vunpack.c.0.s8 %v730
      %v732 = vlaneseq
      %v733 = vshrl.u32 %v732, 7
      %v734 = vsub.s32 %v731, %v733
      %v735 = vrot.slane %v727, %v734
      %v737 = vunpack.c.l.s4 1983009808
      %v738 = vunpack.c.0.s8 %v737
      %v739 = vlaneseq
      %v740 = vshrl.u32 %v739, 7
      %v741 = vsub.s32 %v738, %v740
      %v742 = vrot.slane %v728, %v741
      %v743 = vcombine.low %v688, %v700
      %v744 = vcombine.high %v688, %v700
      %v746 = vunpack.c.l.s4 1983009808
      %v747 = vunpack.c.0.s8 %v746
      %v748 = vlaneseq
      %v749 = vshrl.u32 %v748, 7
      %v750 = vsub.s32 %v747, %v749
      %v751 = vrot.slane %v743, %v750
      %v753 = vunpack.c.l.s4 1983009808
      %v754 = vunpack.c.0.s8 %v753
      %v755 = vlaneseq
      %v756 = vshrl.u32 %v755, 7
      %v757 = vsub.s32 %v754, %v756
      %v758 = vrot.slane %v744, %v757
      %v759 = vcombine.low %v694, %v706
      %v760 = vcombine.high %v694, %v706
      %v762 = vunpack.c.l.s4 1983009808
      %v763 = vunpack.c.0.s8 %v762
      %v764 = vlaneseq
      %v765 = vshrl.u32 %v764, 7
      %v766 = vsub.s32 %v763, %v765
      %v767 = vrot.slane %v759, %v766
      %v769 = vunpack.c.l.s4 1983009808
      %v770 = vunpack.c.0.s8 %v769
      %v771 = vlaneseq
      %v772 = vshrl.u32 %v771, 7
      %v773 = vsub.s32 %v770, %v772
      %v774 = vrot.slane %v760, %v773
      %v775 = vcombine.low %v719, %v735
      %v776 = vcombine.high %v719, %v735
      %v778 = vunpack.c.l.s4 1934713408
      %v779 = vunpack.c.0.s8 %v778
      %v780 = vlaneseq
      %v781 = vshrl.u32 %v780, 7
      %v782 = vsub.s32 %v779, %v781
      %v783 = vrot.slane %v775, %v782
      %v785 = vunpack.c.l.s4 1934713408
      %v786 = vunpack.c.0.s8 %v785
      %v787 = vlaneseq
      %v788 = vshrl.u32 %v787, 7
      %v789 = vsub.s32 %v786, %v788
      %v790 = vrot.slane %v776, %v789
      %v791 = vcombine.low %v726, %v742
      %v792 = vcombine.high %v726, %v742
      %v794 = vunpack.c.l.s4 1934713408
      %v795 = vunpack.c.0.s8 %v794
      %v796 = vlaneseq
      %v797 = vshrl.u32 %v796, 7
      %v798 = vsub.s32 %v795, %v797
      %v799 = vrot.slane %v791, %v798
      %v801 = vunpack.c.l.s4 1934713408
      %v802 = vunpack.c.0.s8 %v801
      %v803 = vlaneseq
      %v804 = vshrl.u32 %v803, 7
      %v805 = vsub.s32 %v802, %v804
      %v806 = vrot.slane %v792, %v805
      %v807 = vcombine.low %v751, %v767
      %v808 = vcombine.high %v751, %v767
      %v810 = vunpack.c.l.s4 1934713408
      %v811 = vunpack.c.0.s8 %v810
      %v812 = vlaneseq
      %v813 = vshrl.u32 %v812, 7
      %v814 = vsub.s32 %v811, %v813
      %v815 = vrot.slane %v807, %v814
      %v817 = vunpack.c.l.s4 1934713408
      %v818 = vunpack.c.0.s8 %v817
      %v819 = vlaneseq
      %v820 = vshrl.u32 %v819, 7
      %v821 = vsub.s32 %v818, %v820
      %v822 = vrot.slane %v808, %v821
      %v823 = vcombine.low %v758, %v774
      %v824 = vcombine.high %v758, %v774
      %v826 = vunpack.c.l.s4 1934713408
      %v827 = vunpack.c.0.s8 %v826
      %v828 = vlaneseq
      %v829 = vshrl.u32 %v828, 7
      %v830 = vsub.s32 %v827, %v829
      %v831 = vrot.slane %v823, %v830
      %v833 = vunpack.c.l.s4 1934713408
      %v834 = vunpack.c.0.s8 %v833
      %v835 = vlaneseq
      %v836 = vshrl.u32 %v835, 7
      %v837 = vsub.s32 %v834, %v836
      %v838 = vrot.slane %v824, %v837
      %v839 = vcombine.low %v783, %v815
      %v840 = vcombine.high %v783, %v815
      %v841 = vcombine.low %v790, %v822
      %v842 = vcombine.high %v790, %v822
      %v843 = vcombine.low %v799, %v831
      %v844 = vcombine.high %v799, %v831
      %v845 = vcombine.low %v806, %v838
      %v846 = vcombine.high %v806, %v838
      %v847 = vcombine.low %v664, %v678
      %v849 = vunpack.c.l.s4 1983009808
      %v850 = vunpack.c.0.s8 %v849
      %v851 = vlaneseq
      %v852 = vshrl.u32 %v851, 7
      %v853 = vsub.s32 %v850, %v852
      %v854 = vrot.slane %v847, %v853
      %v855 = vcombine.low %v672, %v684
      %v857 = vunpack.c.l.s4 1983009808
      %v858 = vunpack.c.0.s8 %v857
      %v859 = vlaneseq
      %v860 = vshrl.u32 %v859, 7
      %v861 = vsub.s32 %v858, %v860
      %v862 = vrot.slane %v855, %v861
      %v863 = vcombine.low %v690, %v702
      %v865 = vunpack.c.l.s4 1983009808
      %v866 = vunpack.c.0.s8 %v865
      %v867 = vlaneseq
      %v868 = vshrl.u32 %v867, 7
      %v869 = vsub.s32 %v866, %v868
      %v870 = vrot.slane %v863, %v869
      %v871 = vcombine.low %v696, %v708
      %v873 = vunpack.c.l.s4 1983009808
      %v874 = vunpack.c.0.s8 %v873
      %v875 = vlaneseq
      %v876 = vshrl.u32 %v875, 7
      %v877 = vsub.s32 %v874, %v876
      %v878 = vrot.slane %v871, %v877
      %v879 = vcombine.low %v854, %v862
      %v880 = vcombine.high %v854, %v862
      %v882 = vunpack.c.l.s4 1934713408
      %v883 = vunpack.c.0.s8 %v882
      %v884 = vlaneseq
      %v885 = vshrl.u32 %v884, 7
      %v886 = vsub.s32 %v883, %v885
      %v887 = vrot.slane %v879, %v886
      %v889 = vunpack.c.l.s4 1934713408
      %v890 = vunpack.c.0.s8 %v889
      %v891 = vlaneseq
      %v892 = vshrl.u32 %v891, 7
      %v893 = vsub.s32 %v890, %v892
      %v894 = vrot.slane %v880, %v893
      %v895 = vcombine.low %v870, %v878
      %v896 = vcombine.high %v870, %v878
      %v898 = vunpack.c.l.s4 1934713408
      %v899 = vunpack.c.0.s8 %v898
      %v900 = vlaneseq
      %v901 = vshrl.u32 %v900, 7
      %v902 = vsub.s32 %v899, %v901
      %v903 = vrot.slane %v895, %v902
      %v905 = vunpack.c.l.s4 1934713408
      %v906 = vunpack.c.0.s8 %v905
      %v907 = vlaneseq
      %v908 = vshrl.u32 %v907, 7
      %v909 = vsub.s32 %v906, %v908
      %v910 = vrot.slane %v896, %v909
      %v911 = vcombine.low %v887, %v903
      %v912 = vcombine.high %v887, %v903
      %v913 = vcombine.low %v894, %v910
      %v914 = vcombine.high %v894, %v910
      %915 = vxpose.xlu0.b32.start [1/16] %v839, 128
      %916 = vxpose.xlu0.b32.cont [2/16] 0.0, 128
      %917 = vxpose.xlu0.b32.cont [3/16] 0.0, 128
      %918 = vxpose.xlu0.b32.cont [4/16] 0.0, 128
      %919 = vxpose.xlu0.b32.cont [5/16] 0.0, 128
      %920 = vxpose.xlu0.b32.cont [6/16] 0.0, 128
      %921 = vxpose.xlu0.b32.cont [7/16] 0.0, 128
      %922 = vxpose.xlu0.b32.cont [8/16] 0.0, 128
      %923 = vxpose.xlu0.b32.cont [9/16] 0.0, 128
      %924 = vxpose.xlu0.b32.cont [10/16] 0.0, 128
      %925 = vxpose.xlu0.b32.cont [11/16] 0.0, 128
      %926 = vxpose.xlu0.b32.cont [12/16] 0.0, 128
      %927 = vxpose.xlu0.b32.cont [13/16] 0.0, 128
      %928 = vxpose.xlu0.b32.cont [14/16] 0.0, 128
      %929 = vxpose.xlu0.b32.cont [15/16] 0.0, 128
      %930 = vxpose.xlu0.b32.end [16/16] 0.0, 128
      %v931 = vpop.trf.xlu0
      %v932 = vpop.trf.xlu0
      %v933 = vpop.trf.xlu0
      %v934 = vpop.trf.xlu0
      %v935 = vpop.trf.xlu0
      %v936 = vpop.trf.xlu0
      %v937 = vpop.trf.xlu0
      %v938 = vpop.trf.xlu0
      %v939 = vpop.trf.xlu0
      %v940 = vpop.trf.xlu0
      %v941 = vpop.trf.xlu0
      %v942 = vpop.trf.xlu0
      %v943 = vpop.trf.xlu0
      %v944 = vpop.trf.xlu0
      %v945 = vpop.trf.xlu0
      %v946 = vpop.trf.xlu0
      %947 = vxpose.xlu0.b32.start [1/16] %v840, 128
      %948 = vxpose.xlu0.b32.cont [2/16] 0.0, 128
      %949 = vxpose.xlu0.b32.cont [3/16] 0.0, 128
      %950 = vxpose.xlu0.b32.cont [4/16] 0.0, 128
      %951 = vxpose.xlu0.b32.cont [5/16] 0.0, 128
      %952 = vxpose.xlu0.b32.cont [6/16] 0.0, 128
      %953 = vxpose.xlu0.b32.cont [7/16] 0.0, 128
      %954 = vxpose.xlu0.b32.cont [8/16] 0.0, 128
      %955 = vxpose.xlu0.b32.cont [9/16] 0.0, 128
      %956 = vxpose.xlu0.b32.cont [10/16] 0.0, 128
      %957 = vxpose.xlu0.b32.cont [11/16] 0.0, 128
      %958 = vxpose.xlu0.b32.cont [12/16] 0.0, 128
      %959 = vxpose.xlu0.b32.cont [13/16] 0.0, 128
      %960 = vxpose.xlu0.b32.cont [14/16] 0.0, 128
      %961 = vxpose.xlu0.b32.cont [15/16] 0.0, 128
      %962 = vxpose.xlu0.b32.end [16/16] 0.0, 128
      %v963 = vpop.trf.xlu0
      %v964 = vpop.trf.xlu0
      %v965 = vpop.trf.xlu0
      %v966 = vpop.trf.xlu0
      %v967 = vpop.trf.xlu0
      %v968 = vpop.trf.xlu0
      %v969 = vpop.trf.xlu0
      %v970 = vpop.trf.xlu0
      %v971 = vpop.trf.xlu0
      %v972 = vpop.trf.xlu0
      %v973 = vpop.trf.xlu0
      %v974 = vpop.trf.xlu0
      %v975 = vpop.trf.xlu0
      %v976 = vpop.trf.xlu0
      %v977 = vpop.trf.xlu0
      %v978 = vpop.trf.xlu0
      %979 = vxpose.xlu0.b32.start [1/16] %v841, 128
      %980 = vxpose.xlu0.b32.cont [2/16] 0.0, 128
      %981 = vxpose.xlu0.b32.cont [3/16] 0.0, 128
      %982 = vxpose.xlu0.b32.cont [4/16] 0.0, 128
      %983 = vxpose.xlu0.b32.cont [5/16] 0.0, 128
      %984 = vxpose.xlu0.b32.cont [6/16] 0.0, 128
      %985 = vxpose.xlu0.b32.cont [7/16] 0.0, 128
      %986 = vxpose.xlu0.b32.cont [8/16] 0.0, 128
      %987 = vxpose.xlu0.b32.cont [9/16] 0.0, 128
      %988 = vxpose.xlu0.b32.cont [10/16] 0.0, 128
      %989 = vxpose.xlu0.b32.cont [11/16] 0.0, 128
      %990 = vxpose.xlu0.b32.cont [12/16] 0.0, 128
      %991 = vxpose.xlu0.b32.cont [13/16] 0.0, 128
      %992 = vxpose.xlu0.b32.cont [14/16] 0.0, 128
      %993 = vxpose.xlu0.b32.cont [15/16] 0.0, 128
      %994 = vxpose.xlu0.b32.end [16/16] 0.0, 128
      %v995 = vpop.trf.xlu0
      %v996 = vpop.trf.xlu0
      %v997 = vpop.trf.xlu0
      %v998 = vpop.trf.xlu0
      %v999 = vpop.trf.xlu0
      %v1000 = vpop.trf.xlu0
      %v1001 = vpop.trf.xlu0
      %v1002 = vpop.trf.xlu0
      %v1003 = vpop.trf.xlu0
      %v1004 = vpop.trf.xlu0
      %v1005 = vpop.trf.xlu0
      %v1006 = vpop.trf.xlu0
      %v1007 = vpop.trf.xlu0
      %v1008 = vpop.trf.xlu0
      %v1009 = vpop.trf.xlu0
      %v1010 = vpop.trf.xlu0
      %1011 = vxpose.xlu0.b32.start [1/16] %v842, 128
      %1012 = vxpose.xlu0.b32.cont [2/16] 0.0, 128
      %1013 = vxpose.xlu0.b32.cont [3/16] 0.0, 128
      %1014 = vxpose.xlu0.b32.cont [4/16] 0.0, 128
      %1015 = vxpose.xlu0.b32.cont [5/16] 0.0, 128
      %1016 = vxpose.xlu0.b32.cont [6/16] 0.0, 128
      %1017 = vxpose.xlu0.b32.cont [7/16] 0.0, 128
      %1018 = vxpose.xlu0.b32.cont [8/16] 0.0, 128
      %1019 = vxpose.xlu0.b32.cont [9/16] 0.0, 128
      %1020 = vxpose.xlu0.b32.cont [10/16] 0.0, 128
      %1021 = vxpose.xlu0.b32.cont [11/16] 0.0, 128
      %1022 = vxpose.xlu0.b32.cont [12/16] 0.0, 128
      %1023 = vxpose.xlu0.b32.cont [13/16] 0.0, 128
      %1024 = vxpose.xlu0.b32.cont [14/16] 0.0, 128
      %1025 = vxpose.xlu0.b32.cont [15/16] 0.0, 128
      %1026 = vxpose.xlu0.b32.end [16/16] 0.0, 128
      %v1027 = vpop.trf.xlu0
      %v1028 = vpop.trf.xlu0
      %v1029 = vpop.trf.xlu0
      %v1030 = vpop.trf.xlu0
      %v1031 = vpop.trf.xlu0
      %v1032 = vpop.trf.xlu0
      %v1033 = vpop.trf.xlu0
      %v1034 = vpop.trf.xlu0
      %v1035 = vpop.trf.xlu0
      %v1036 = vpop.trf.xlu0
      %v1037 = vpop.trf.xlu0
      %v1038 = vpop.trf.xlu0
      %v1039 = vpop.trf.xlu0
      %v1040 = vpop.trf.xlu0
      %v1041 = vpop.trf.xlu0
      %v1042 = vpop.trf.xlu0
      %1043 = vxpose.xlu0.b32.start [1/16] %v843, 128
      %1044 = vxpose.xlu0.b32.cont [2/16] 0.0, 128
      %1045 = vxpose.xlu0.b32.cont [3/16] 0.0, 128
      %1046 = vxpose.xlu0.b32.cont [4/16] 0.0, 128
      %1047 = vxpose.xlu0.b32.cont [5/16] 0.0, 128
      %1048 = vxpose.xlu0.b32.cont [6/16] 0.0, 128
      %1049 = vxpose.xlu0.b32.cont [7/16] 0.0, 128
      %1050 = vxpose.xlu0.b32.cont [8/16] 0.0, 128
      %1051 = vxpose.xlu0.b32.cont [9/16] 0.0, 128
      %1052 = vxpose.xlu0.b32.cont [10/16] 0.0, 128
      %1053 = vxpose.xlu0.b32.cont [11/16] 0.0, 128
      %1054 = vxpose.xlu0.b32.cont [12/16] 0.0, 128
      %1055 = vxpose.xlu0.b32.cont [13/16] 0.0, 128
      %1056 = vxpose.xlu0.b32.cont [14/16] 0.0, 128
      %1057 = vxpose.xlu0.b32.cont [15/16] 0.0, 128
      %1058 = vxpose.xlu0.b32.end [16/16] 0.0, 128
      %v1059 = vpop.trf.xlu0
      %v1060 = vpop.trf.xlu0
      %v1061 = vpop.trf.xlu0
      %v1062 = vpop.trf.xlu0
      %v1063 = vpop.trf.xlu0
      %v1064 = vpop.trf.xlu0
      %v1065 = vpop.trf.xlu0
      %v1066 = vpop.trf.xlu0
      %v1067 = vpop.trf.xlu0
      %v1068 = vpop.trf.xlu0
      %v1069 = vpop.trf.xlu0
      %v1070 = vpop.trf.xlu0
      %v1071 = vpop.trf.xlu0
      %v1072 = vpop.trf.xlu0
      %v1073 = vpop.trf.xlu0
      %v1074 = vpop.trf.xlu0
      %1075 = vxpose.xlu0.b32.start [1/16] %v844, 128
      %1076 = vxpose.xlu0.b32.cont [2/16] 0.0, 128
      %1077 = vxpose.xlu0.b32.cont [3/16] 0.0, 128
      %1078 = vxpose.xlu0.b32.cont [4/16] 0.0, 128
      %1079 = vxpose.xlu0.b32.cont [5/16] 0.0, 128
      %1080 = vxpose.xlu0.b32.cont [6/16] 0.0, 128
      %1081 = vxpose.xlu0.b32.cont [7/16] 0.0, 128
      %1082 = vxpose.xlu0.b32.cont [8/16] 0.0, 128
      %1083 = vxpose.xlu0.b32.cont [9/16] 0.0, 128
      %1084 = vxpose.xlu0.b32.cont [10/16] 0.0, 128
      %1085 = vxpose.xlu0.b32.cont [11/16] 0.0, 128
      %1086 = vxpose.xlu0.b32.cont [12/16] 0.0, 128
      %1087 = vxpose.xlu0.b32.cont [13/16] 0.0, 128
      %1088 = vxpose.xlu0.b32.cont [14/16] 0.0, 128
      %1089 = vxpose.xlu0.b32.cont [15/16] 0.0, 128
      %1090 = vxpose.xlu0.b32.end [16/16] 0.0, 128
      %v1091 = vpop.trf.xlu0
      %v1092 = vpop.trf.xlu0
      %v1093 = vpop.trf.xlu0
      %v1094 = vpop.trf.xlu0
      %v1095 = vpop.trf.xlu0
      %v1096 = vpop.trf.xlu0
      %v1097 = vpop.trf.xlu0
      %v1098 = vpop.trf.xlu0
      %v1099 = vpop.trf.xlu0
      %v1100 = vpop.trf.xlu0
      %v1101 = vpop.trf.xlu0
      %v1102 = vpop.trf.xlu0
      %v1103 = vpop.trf.xlu0
      %v1104 = vpop.trf.xlu0
      %v1105 = vpop.trf.xlu0
      %v1106 = vpop.trf.xlu0
      %1107 = vxpose.xlu0.b32.start [1/16] %v845, 128
      %1108 = vxpose.xlu0.b32.cont [2/16] 0.0, 128
      %1109 = vxpose.xlu0.b32.cont [3/16] 0.0, 128
      %1110 = vxpose.xlu0.b32.cont [4/16] 0.0, 128
      %1111 = vxpose.xlu0.b32.cont [5/16] 0.0, 128
      %1112 = vxpose.xlu0.b32.cont [6/16] 0.0, 128
      %1113 = vxpose.xlu0.b32.cont [7/16] 0.0, 128
      %1114 = vxpose.xlu0.b32.cont [8/16] 0.0, 128
      %1115 = vxpose.xlu0.b32.cont [9/16] 0.0, 128
      %1116 = vxpose.xlu0.b32.cont [10/16] 0.0, 128
      %1117 = vxpose.xlu0.b32.cont [11/16] 0.0, 128
      %1118 = vxpose.xlu0.b32.cont [12/16] 0.0, 128
      %1119 = vxpose.xlu0.b32.cont [13/16] 0.0, 128
      %1120 = vxpose.xlu0.b32.cont [14/16] 0.0, 128
      %1121 = vxpose.xlu0.b32.cont [15/16] 0.0, 128
      %1122 = vxpose.xlu0.b32.end [16/16] 0.0, 128
      %v1123 = vpop.trf.xlu0
      %v1124 = vpop.trf.xlu0
      %v1125 = vpop.trf.xlu0
      %v1126 = vpop.trf.xlu0
      %v1127 = vpop.trf.xlu0
      %v1128 = vpop.trf.xlu0
      %v1129 = vpop.trf.xlu0
      %v1130 = vpop.trf.xlu0
      %v1131 = vpop.trf.xlu0
      %v1132 = vpop.trf.xlu0
      %v1133 = vpop.trf.xlu0
      %v1134 = vpop.trf.xlu0
      %v1135 = vpop.trf.xlu0
      %v1136 = vpop.trf.xlu0
      %v1137 = vpop.trf.xlu0
      %v1138 = vpop.trf.xlu0
      %1139 = vxpose.xlu0.b32.start [1/16] %v846, 128
      %1140 = vxpose.xlu0.b32.cont [2/16] 0.0, 128
      %1141 = vxpose.xlu0.b32.cont [3/16] 0.0, 128
      %1142 = vxpose.xlu0.b32.cont [4/16] 0.0, 128
      %1143 = vxpose.xlu0.b32.cont [5/16] 0.0, 128
      %1144 = vxpose.xlu0.b32.cont [6/16] 0.0, 128
      %1145 = vxpose.xlu0.b32.cont [7/16] 0.0, 128
      %1146 = vxpose.xlu0.b32.cont [8/16] 0.0, 128
      %1147 = vxpose.xlu0.b32.cont [9/16] 0.0, 128
      %1148 = vxpose.xlu0.b32.cont [10/16] 0.0, 128
      %1149 = vxpose.xlu0.b32.cont [11/16] 0.0, 128
      %1150 = vxpose.xlu0.b32.cont [12/16] 0.0, 128
      %1151 = vxpose.xlu0.b32.cont [13/16] 0.0, 128
      %1152 = vxpose.xlu0.b32.cont [14/16] 0.0, 128
      %1153 = vxpose.xlu0.b32.cont [15/16] 0.0, 128
      %1154 = vxpose.xlu0.b32.end [16/16] 0.0, 128
      %v1155 = vpop.trf.xlu0
      %v1156 = vpop.trf.xlu0
      %v1157 = vpop.trf.xlu0
      %v1158 = vpop.trf.xlu0
      %v1159 = vpop.trf.xlu0
      %v1160 = vpop.trf.xlu0
      %v1161 = vpop.trf.xlu0
      %v1162 = vpop.trf.xlu0
      %v1163 = vpop.trf.xlu0
      %v1164 = vpop.trf.xlu0
      %v1165 = vpop.trf.xlu0
      %v1166 = vpop.trf.xlu0
      %v1167 = vpop.trf.xlu0
      %v1168 = vpop.trf.xlu0
      %v1169 = vpop.trf.xlu0
      %v1170 = vpop.trf.xlu0
      %1171 = vxpose.xlu0.b32.start [1/16] %v911, 128
      %1172 = vxpose.xlu0.b32.cont [2/16] 0.0, 128
      %1173 = vxpose.xlu0.b32.cont [3/16] 0.0, 128
      %1174 = vxpose.xlu0.b32.cont [4/16] 0.0, 128
      %1175 = vxpose.xlu0.b32.cont [5/16] 0.0, 128
      %1176 = vxpose.xlu0.b32.cont [6/16] 0.0, 128
      %1177 = vxpose.xlu0.b32.cont [7/16] 0.0, 128
      %1178 = vxpose.xlu0.b32.cont [8/16] 0.0, 128
      %1179 = vxpose.xlu0.b32.cont [9/16] 0.0, 128
      %1180 = vxpose.xlu0.b32.cont [10/16] 0.0, 128
      %1181 = vxpose.xlu0.b32.cont [11/16] 0.0, 128
      %1182 = vxpose.xlu0.b32.cont [12/16] 0.0, 128
      %1183 = vxpose.xlu0.b32.cont [13/16] 0.0, 128
      %1184 = vxpose.xlu0.b32.cont [14/16] 0.0, 128
      %1185 = vxpose.xlu0.b32.cont [15/16] 0.0, 128
      %1186 = vxpose.xlu0.b32.end [16/16] 0.0, 128
      %v1187 = vpop.trf.xlu0
      %v1188 = vpop.trf.xlu0
      %v1189 = vpop.trf.xlu0
      %v1190 = vpop.trf.xlu0
      %v1191 = vpop.trf.xlu0
      %v1192 = vpop.trf.xlu0
      %v1193 = vpop.trf.xlu0
      %v1194 = vpop.trf.xlu0
      %v1195 = vpop.trf.xlu0
      %v1196 = vpop.trf.xlu0
      %v1197 = vpop.trf.xlu0
      %v1198 = vpop.trf.xlu0
      %v1199 = vpop.trf.xlu0
      %v1200 = vpop.trf.xlu0
      %v1201 = vpop.trf.xlu0
      %v1202 = vpop.trf.xlu0
      %1203 = vxpose.xlu0.b32.start [1/16] %v912, 128
      %1204 = vxpose.xlu0.b32.cont [2/16] 0.0, 128
      %1205 = vxpose.xlu0.b32.cont [3/16] 0.0, 128
      %1206 = vxpose.xlu0.b32.cont [4/16] 0.0, 128
      %1207 = vxpose.xlu0.b32.cont [5/16] 0.0, 128
      %1208 = vxpose.xlu0.b32.cont [6/16] 0.0, 128
      %1209 = vxpose.xlu0.b32.cont [7/16] 0.0, 128
      %1210 = vxpose.xlu0.b32.cont [8/16] 0.0, 128
      %1211 = vxpose.xlu0.b32.cont [9/16] 0.0, 128
      %1212 = vxpose.xlu0.b32.cont [10/16] 0.0, 128
      %1213 = vxpose.xlu0.b32.cont [11/16] 0.0, 128
      %1214 = vxpose.xlu0.b32.cont [12/16] 0.0, 128
      %1215 = vxpose.xlu0.b32.cont [13/16] 0.0, 128
      %1216 = vxpose.xlu0.b32.cont [14/16] 0.0, 128
      %1217 = vxpose.xlu0.b32.cont [15/16] 0.0, 128
      %1218 = vxpose.xlu0.b32.end [16/16] 0.0, 128
      %v1219 = vpop.trf.xlu0
      %v1220 = vpop.trf.xlu0
      %v1221 = vpop.trf.xlu0
      %v1222 = vpop.trf.xlu0
      %v1223 = vpop.trf.xlu0
      %v1224 = vpop.trf.xlu0
      %v1225 = vpop.trf.xlu0
      %v1226 = vpop.trf.xlu0
      %v1227 = vpop.trf.xlu0
      %v1228 = vpop.trf.xlu0
      %v1229 = vpop.trf.xlu0
      %v1230 = vpop.trf.xlu0
      %v1231 = vpop.trf.xlu0
      %v1232 = vpop.trf.xlu0
      %v1233 = vpop.trf.xlu0
      %v1234 = vpop.trf.xlu0
      %1235 = vxpose.xlu0.b32.start [1/16] %v913, 128
      %1236 = vxpose.xlu0.b32.cont [2/16] 0.0, 128
      %1237 = vxpose.xlu0.b32.cont [3/16] 0.0, 128
      %1238 = vxpose.xlu0.b32.cont [4/16] 0.0, 128
      %1239 = vxpose.xlu0.b32.cont [5/16] 0.0, 128
      %1240 = vxpose.xlu0.b32.cont [6/16] 0.0, 128
      %1241 = vxpose.xlu0.b32.cont [7/16] 0.0, 128
      %1242 = vxpose.xlu0.b32.cont [8/16] 0.0, 128
      %1243 = vxpose.xlu0.b32.cont [9/16] 0.0, 128
      %1244 = vxpose.xlu0.b32.cont [10/16] 0.0, 128
      %1245 = vxpose.xlu0.b32.cont [11/16] 0.0, 128
      %1246 = vxpose.xlu0.b32.cont [12/16] 0.0, 128
      %1247 = vxpose.xlu0.b32.cont [13/16] 0.0, 128
      %1248 = vxpose.xlu0.b32.cont [14/16] 0.0, 128
      %1249 = vxpose.xlu0.b32.cont [15/16] 0.0, 128
      %1250 = vxpose.xlu0.b32.end [16/16] 0.0, 128
      %v1251 = vpop.trf.xlu0
      %v1252 = vpop.trf.xlu0
      %v1253 = vpop.trf.xlu0
      %v1254 = vpop.trf.xlu0
      %v1255 = vpop.trf.xlu0
      %v1256 = vpop.trf.xlu0
      %v1257 = vpop.trf.xlu0
      %v1258 = vpop.trf.xlu0
      %v1259 = vpop.trf.xlu0
      %v1260 = vpop.trf.xlu0
      %v1261 = vpop.trf.xlu0
      %v1262 = vpop.trf.xlu0
      %v1263 = vpop.trf.xlu0
      %v1264 = vpop.trf.xlu0
      %v1265 = vpop.trf.xlu0
      %v1266 = vpop.trf.xlu0
      %1267 = vxpose.xlu0.b32.start [1/16] %v914, 128
      %1268 = vxpose.xlu0.b32.cont [2/16] 0.0, 128
      %1269 = vxpose.xlu0.b32.cont [3/16] 0.0, 128
      %1270 = vxpose.xlu0.b32.cont [4/16] 0.0, 128
      %1271 = vxpose.xlu0.b32.cont [5/16] 0.0, 128
      %1272 = vxpose.xlu0.b32.cont [6/16] 0.0, 128
      %1273 = vxpose.xlu0.b32.cont [7/16] 0.0, 128
      %1274 = vxpose.xlu0.b32.cont [8/16] 0.0, 128
      %1275 = vxpose.xlu0.b32.cont [9/16] 0.0, 128
      %1276 = vxpose.xlu0.b32.cont [10/16] 0.0, 128
      %1277 = vxpose.xlu0.b32.cont [11/16] 0.0, 128
      %1278 = vxpose.xlu0.b32.cont [12/16] 0.0, 128
      %1279 = vxpose.xlu0.b32.cont [13/16] 0.0, 128
      %1280 = vxpose.xlu0.b32.cont [14/16] 0.0, 128
      %1281 = vxpose.xlu0.b32.cont [15/16] 0.0, 128
      %1282 = vxpose.xlu0.b32.end [16/16] 0.0, 128
      %v1283 = vpop.trf.xlu0
      %v1284 = vpop.trf.xlu0
      %v1285 = vpop.trf.xlu0
      %v1286 = vpop.trf.xlu0
      %v1287 = vpop.trf.xlu0
      %v1288 = vpop.trf.xlu0
      %v1289 = vpop.trf.xlu0
      %v1290 = vpop.trf.xlu0
      %v1291 = vpop.trf.xlu0
      %v1292 = vpop.trf.xlu0
      %v1293 = vpop.trf.xlu0
      %v1294 = vpop.trf.xlu0
      %v1295 = vpop.trf.xlu0
      %v1296 = vpop.trf.xlu0
      %v1297 = vpop.trf.xlu0
      %v1298 = vpop.trf.xlu0
      %v1299 = vld [vmem:[%s3] sm:$0xff]
      %v1312 = vcombine.low %v931, %v963
      %v1313 = vcombine.low %v995, %v1027
      %v1314 = vcombine.low %v1059, %v1091
      %v1315 = vcombine.low %v1123, %v1155
      %v1316 = vcombine.low %v1187, %v1219
      %v1317 = vcombine.low %v1251, %v1283
      %v1318 = vsel %vm574, %v1312, 0
      %v1320 = vsel %vm574, %v1313, 0
      %v1322 = vsel %vm574, %v1314, 0
      %v1324 = vsel %vm574, %v1315, 0
      %v1326 = vsel %vm574, %v1316, 0
      %v1328 = vsel %vm574, %v1317, 0
      %1330 = vmatprep.subr.mxu0 0.0
      %1331 = vmatpush1.msra.mxu0 %v1299
      %1332 = vmatprep.subr.mxu0 0.0
      %1333 = vmatpush1.msra.mxu0 0.0
      %1334 = vmatprep.subr.mxu0 0.0
      %1335 = vmatpush1.msra.mxu0 0.0
      %1336 = vmatprep.subr.mxu0 0.0
      %1337 = vmatpush1.msra.mxu0 0.0
      %1338 = vmatprep.subr.mxu0 0.0
      %1339 = vmatpush1.msra.mxu0 0.0
      %1340 = vmatprep.subr.mxu0 0.0
      %1341 = vmatpush1.msra.mxu0 0.0
      %1342 = vmatprep.subr.mxu0 0.0
      %1343 = vmatpush1.msra.mxu0 0.0
      %1344 = vmatprep.subr.mxu0 0.0
      %1345 = vmatpush1.msra.mxu0 0.0
      %1346 = vmatprep.subr.mxu0 0.0
      %1347 = vmatpush1.msra.mxu0 0.0
      %1348 = vmatprep.subr.mxu0 0.0
      %1349 = vmatpush1.msra.mxu0 0.0
      %1350 = vmatprep.subr.mxu0 0.0
      %1351 = vmatpush1.msra.mxu0 0.0
      %1352 = vmatprep.subr.mxu0 0.0
      %1353 = vmatpush1.msra.mxu0 0.0
      %1354 = vmatprep.subr.mxu0 0.0
      %1355 = vmatpush1.msra.mxu0 0.0
      %1356 = vmatprep.subr.mxu0 0.0
      %1357 = vmatpush1.msra.mxu0 0.0
      %1358 = vmatprep.subr.mxu0 0.0
      %1359 = vmatpush1.msra.mxu0 0.0
      %1360 = vmatprep.subr.mxu0 0.0
      %1361 = vmatpush1.msra.mxu0 0.0
      %1362 = vmatprep.subr.mxu0 0.0
      %1363 = vmatpush1.msra.mxu0 0.0
      %1364 = vmatprep.subr.mxu0 0.0
      %1365 = vmatpush1.msra.mxu0 0.0
      %1366 = vmatprep.subr.mxu0 0.0
      %1367 = vmatpush1.msra.mxu0 0.0
      %1368 = vmatprep.subr.mxu0 0.0
      %1369 = vmatpush1.msra.mxu0 0.0
      %1370 = vmatprep.subr.mxu0 0.0
      %1371 = vmatpush1.msra.mxu0 0.0
      %1372 = vmatprep.subr.mxu0 0.0
      %1373 = vmatpush1.msra.mxu0 0.0
      %1374 = vmatprep.subr.mxu0 0.0
      %1375 = vmatpush1.msra.mxu0 0.0
      %1376 = vmatprep.subr.mxu0 0.0
      %1377 = vmatpush1.msra.mxu0 0.0
      %1378 = vmatprep.subr.mxu0 0.0
      %1379 = vmatpush1.msra.mxu0 0.0
      %1380 = vmatprep.subr.mxu0 0.0
      %1381 = vmatpush1.msra.mxu0 0.0
      %1382 = vmatprep.subr.mxu0 0.0
      %1383 = vmatpush1.msra.mxu0 0.0
      %1384 = vmatprep.subr.mxu0 0.0
      %1385 = vmatpush1.msra.mxu0 0.0
      %1386 = vmatprep.subr.mxu0 0.0
      %1387 = vmatpush1.msra.mxu0 0.0
      %1388 = vmatprep.subr.mxu0 0.0
      %1389 = vmatpush1.msra.mxu0 0.0
      %1390 = vmatprep.subr.mxu0 0.0
      %1391 = vmatpush1.msra.mxu0 0.0
      %1392 = vmatprep.subr.mxu0 0.0
      %1393 = vmatpush1.msra.mxu0 0.0
      %1394 = vmatprep.mubr.f32.mxu0 0.0
      %1395 = vmatmul.mubr.f32.gmra.mrb[0].mxu0 %v1318
      %v1396 = vpop.f32.mrb[0].mxu0
      %v1397 = vadd.f32 0.0, %v1396
      %v1398 = vpop.f32.mrb[0].mxu0
      %1399 = vmatprep.mubr.f32.mxu0 0.0
      %1400 = vmatmul.mubr.f32.gmra.mrb[0].mxu0 %v1320
      %v1401 = vpop.f32.mrb[0].mxu0
      %v1402 = vadd.f32 0.0, %v1401
      %v1403 = vpop.f32.mrb[0].mxu0
      %1404 = vmatprep.mubr.f32.mxu0 0.0
      %1405 = vmatmul.mubr.f32.gmra.mrb[0].mxu0 %v1322
      %v1406 = vpop.f32.mrb[0].mxu0
      %v1407 = vadd.f32 0.0, %v1406
      %v1408 = vpop.f32.mrb[0].mxu0
      %1409 = vmatprep.mubr.f32.mxu0 0.0
      %1410 = vmatmul.mubr.f32.gmra.mrb[0].mxu0 %v1324
      %v1411 = vpop.f32.mrb[0].mxu0
      %v1412 = vadd.f32 0.0, %v1411
      %v1413 = vpop.f32.mrb[0].mxu0
      %1414 = vmatprep.mubr.f32.mxu0 0.0
      %1415 = vmatmul.mubr.f32.gmra.mrb[0].mxu0 %v1326
      %v1416 = vpop.f32.mrb[0].mxu0
      %v1417 = vadd.f32 0.0, %v1416
      %v1418 = vpop.f32.mrb[0].mxu0
      %1419 = vmatprep.mubr.f32.mxu0 0.0
      %1420 = vmatmul.mubr.f32.gmra.mrb[0].mxu0 %v1328
      %v1421 = vpop.f32.mrb[0].mxu0
      %v1422 = vadd.f32 0.0, %v1421
      %v1423 = vpop.f32.mrb[0].mxu0
      %1424 = vdwg.mxu0
      %v1431 = vcombine.high %v1397, %v1397
      %v1432 = vcombine.high %v1402, %v1402
      %v1433 = vcombine.high %v1407, %v1407
      %v1434 = vcombine.high %v1412, %v1412
      %v1435 = vcombine.high %v1417, %v1417
      %v1436 = vcombine.high %v1422, %v1422
      %1443 = vxpose.xlu0.b32.start [1/16] %v1397, 128
      %1444 = vxpose.xlu0.b32.cont [2/16] 0.0, 128
      %1445 = vxpose.xlu0.b32.cont [3/16] 0.0, 128
      %1446 = vxpose.xlu0.b32.cont [4/16] 0.0, 128
      %1447 = vxpose.xlu0.b32.cont [5/16] 0.0, 128
      %1448 = vxpose.xlu0.b32.cont [6/16] 0.0, 128
      %1449 = vxpose.xlu0.b32.cont [7/16] 0.0, 128
      %1450 = vxpose.xlu0.b32.cont [8/16] 0.0, 128
      %1451 = vxpose.xlu0.b32.cont [9/16] 0.0, 128
      %1452 = vxpose.xlu0.b32.cont [10/16] 0.0, 128
      %1453 = vxpose.xlu0.b32.cont [11/16] 0.0, 128
      %1454 = vxpose.xlu0.b32.cont [12/16] 0.0, 128
      %1455 = vxpose.xlu0.b32.cont [13/16] 0.0, 128
      %1456 = vxpose.xlu0.b32.cont [14/16] 0.0, 128
      %1457 = vxpose.xlu0.b32.cont [15/16] 0.0, 128
      %1458 = vxpose.xlu0.b32.end [16/16] 0.0, 128
      %v1459 = vpop.trf.xlu0
      %v1460 = vpop.trf.xlu0
      %v1461 = vpop.trf.xlu0
      %v1462 = vpop.trf.xlu0
      %v1463 = vpop.trf.xlu0
      %v1464 = vpop.trf.xlu0
      %v1465 = vpop.trf.xlu0
      %v1466 = vpop.trf.xlu0
      %v1467 = vpop.trf.xlu0
      %v1468 = vpop.trf.xlu0
      %v1469 = vpop.trf.xlu0
      %v1470 = vpop.trf.xlu0
      %v1471 = vpop.trf.xlu0
      %v1472 = vpop.trf.xlu0
      %v1473 = vpop.trf.xlu0
      %v1474 = vpop.trf.xlu0
      %1475 = vxpose.xlu0.b32.start [1/16] %v1431, 128
      %1476 = vxpose.xlu0.b32.cont [2/16] 0.0, 128
      %1477 = vxpose.xlu0.b32.cont [3/16] 0.0, 128
      %1478 = vxpose.xlu0.b32.cont [4/16] 0.0, 128
      %1479 = vxpose.xlu0.b32.cont [5/16] 0.0, 128
      %1480 = vxpose.xlu0.b32.cont [6/16] 0.0, 128
      %1481 = vxpose.xlu0.b32.cont [7/16] 0.0, 128
      %1482 = vxpose.xlu0.b32.cont [8/16] 0.0, 128
      %1483 = vxpose.xlu0.b32.cont [9/16] 0.0, 128
      %1484 = vxpose.xlu0.b32.cont [10/16] 0.0, 128
      %1485 = vxpose.xlu0.b32.cont [11/16] 0.0, 128
      %1486 = vxpose.xlu0.b32.cont [12/16] 0.0, 128
      %1487 = vxpose.xlu0.b32.cont [13/16] 0.0, 128
      %1488 = vxpose.xlu0.b32.cont [14/16] 0.0, 128
      %1489 = vxpose.xlu0.b32.cont [15/16] 0.0, 128
      %1490 = vxpose.xlu0.b32.end [16/16] 0.0, 128
      %v1491 = vpop.trf.xlu0
      %v1492 = vpop.trf.xlu0
      %v1493 = vpop.trf.xlu0
      %v1494 = vpop.trf.xlu0
      %v1495 = vpop.trf.xlu0
      %v1496 = vpop.trf.xlu0
      %v1497 = vpop.trf.xlu0
      %v1498 = vpop.trf.xlu0
      %v1499 = vpop.trf.xlu0
      %v1500 = vpop.trf.xlu0
      %v1501 = vpop.trf.xlu0
      %v1502 = vpop.trf.xlu0
      %v1503 = vpop.trf.xlu0
      %v1504 = vpop.trf.xlu0
      %v1505 = vpop.trf.xlu0
      %v1506 = vpop.trf.xlu0
      %1507 = vxpose.xlu0.b32.start [1/16] %v1402, 128
      %1508 = vxpose.xlu0.b32.cont [2/16] 0.0, 128
      %1509 = vxpose.xlu0.b32.cont [3/16] 0.0, 128
      %1510 = vxpose.xlu0.b32.cont [4/16] 0.0, 128
      %1511 = vxpose.xlu0.b32.cont [5/16] 0.0, 128
      %1512 = vxpose.xlu0.b32.cont [6/16] 0.0, 128
      %1513 = vxpose.xlu0.b32.cont [7/16] 0.0, 128
      %1514 = vxpose.xlu0.b32.cont [8/16] 0.0, 128
      %1515 = vxpose.xlu0.b32.cont [9/16] 0.0, 128
      %1516 = vxpose.xlu0.b32.cont [10/16] 0.0, 128
      %1517 = vxpose.xlu0.b32.cont [11/16] 0.0, 128
      %1518 = vxpose.xlu0.b32.cont [12/16] 0.0, 128
      %1519 = vxpose.xlu0.b32.cont [13/16] 0.0, 128
      %1520 = vxpose.xlu0.b32.cont [14/16] 0.0, 128
      %1521 = vxpose.xlu0.b32.cont [15/16] 0.0, 128
      %1522 = vxpose.xlu0.b32.end [16/16] 0.0, 128
      %v1523 = vpop.trf.xlu0
      %v1524 = vpop.trf.xlu0
      %v1525 = vpop.trf.xlu0
      %v1526 = vpop.trf.xlu0
      %v1527 = vpop.trf.xlu0
      %v1528 = vpop.trf.xlu0
      %v1529 = vpop.trf.xlu0
      %v1530 = vpop.trf.xlu0
      %v1531 = vpop.trf.xlu0
      %v1532 = vpop.trf.xlu0
      %v1533 = vpop.trf.xlu0
      %v1534 = vpop.trf.xlu0
      %v1535 = vpop.trf.xlu0
      %v1536 = vpop.trf.xlu0
      %v1537 = vpop.trf.xlu0
      %v1538 = vpop.trf.xlu0
      %1539 = vxpose.xlu0.b32.start [1/16] %v1432, 128
      %1540 = vxpose.xlu0.b32.cont [2/16] 0.0, 128
      %1541 = vxpose.xlu0.b32.cont [3/16] 0.0, 128
      %1542 = vxpose.xlu0.b32.cont [4/16] 0.0, 128
      %1543 = vxpose.xlu0.b32.cont [5/16] 0.0, 128
      %1544 = vxpose.xlu0.b32.cont [6/16] 0.0, 128
      %1545 = vxpose.xlu0.b32.cont [7/16] 0.0, 128
      %1546 = vxpose.xlu0.b32.cont [8/16] 0.0, 128
      %1547 = vxpose.xlu0.b32.cont [9/16] 0.0, 128
      %1548 = vxpose.xlu0.b32.cont [10/16] 0.0, 128
      %1549 = vxpose.xlu0.b32.cont [11/16] 0.0, 128
      %1550 = vxpose.xlu0.b32.cont [12/16] 0.0, 128
      %1551 = vxpose.xlu0.b32.cont [13/16] 0.0, 128
      %1552 = vxpose.xlu0.b32.cont [14/16] 0.0, 128
      %1553 = vxpose.xlu0.b32.cont [15/16] 0.0, 128
      %1554 = vxpose.xlu0.b32.end [16/16] 0.0, 128
      %v1555 = vpop.trf.xlu0
      %v1556 = vpop.trf.xlu0
      %v1557 = vpop.trf.xlu0
      %v1558 = vpop.trf.xlu0
      %v1559 = vpop.trf.xlu0
      %v1560 = vpop.trf.xlu0
      %v1561 = vpop.trf.xlu0
      %v1562 = vpop.trf.xlu0
      %v1563 = vpop.trf.xlu0
      %v1564 = vpop.trf.xlu0
      %v1565 = vpop.trf.xlu0
      %v1566 = vpop.trf.xlu0
      %v1567 = vpop.trf.xlu0
      %v1568 = vpop.trf.xlu0
      %v1569 = vpop.trf.xlu0
      %v1570 = vpop.trf.xlu0
      %1571 = vxpose.xlu0.b32.start [1/16] %v1407, 128
      %1572 = vxpose.xlu0.b32.cont [2/16] 0.0, 128
      %1573 = vxpose.xlu0.b32.cont [3/16] 0.0, 128
      %1574 = vxpose.xlu0.b32.cont [4/16] 0.0, 128
      %1575 = vxpose.xlu0.b32.cont [5/16] 0.0, 128
      %1576 = vxpose.xlu0.b32.cont [6/16] 0.0, 128
      %1577 = vxpose.xlu0.b32.cont [7/16] 0.0, 128
      %1578 = vxpose.xlu0.b32.cont [8/16] 0.0, 128
      %1579 = vxpose.xlu0.b32.cont [9/16] 0.0, 128
      %1580 = vxpose.xlu0.b32.cont [10/16] 0.0, 128
      %1581 = vxpose.xlu0.b32.cont [11/16] 0.0, 128
      %1582 = vxpose.xlu0.b32.cont [12/16] 0.0, 128
      %1583 = vxpose.xlu0.b32.cont [13/16] 0.0, 128
      %1584 = vxpose.xlu0.b32.cont [14/16] 0.0, 128
      %1585 = vxpose.xlu0.b32.cont [15/16] 0.0, 128
      %1586 = vxpose.xlu0.b32.end [16/16] 0.0, 128
      %v1587 = vpop.trf.xlu0
      %v1588 = vpop.trf.xlu0
      %v1589 = vpop.trf.xlu0
      %v1590 = vpop.trf.xlu0
      %v1591 = vpop.trf.xlu0
      %v1592 = vpop.trf.xlu0
      %v1593 = vpop.trf.xlu0
      %v1594 = vpop.trf.xlu0
      %v1595 = vpop.trf.xlu0
      %v1596 = vpop.trf.xlu0
      %v1597 = vpop.trf.xlu0
      %v1598 = vpop.trf.xlu0
      %v1599 = vpop.trf.xlu0
      %v1600 = vpop.trf.xlu0
      %v1601 = vpop.trf.xlu0
      %v1602 = vpop.trf.xlu0
      %1603 = vxpose.xlu0.b32.start [1/16] %v1433, 128
      %1604 = vxpose.xlu0.b32.cont [2/16] 0.0, 128
      %1605 = vxpose.xlu0.b32.cont [3/16] 0.0, 128
      %1606 = vxpose.xlu0.b32.cont [4/16] 0.0, 128
      %1607 = vxpose.xlu0.b32.cont [5/16] 0.0, 128
      %1608 = vxpose.xlu0.b32.cont [6/16] 0.0, 128
      %1609 = vxpose.xlu0.b32.cont [7/16] 0.0, 128
      %1610 = vxpose.xlu0.b32.cont [8/16] 0.0, 128
      %1611 = vxpose.xlu0.b32.cont [9/16] 0.0, 128
      %1612 = vxpose.xlu0.b32.cont [10/16] 0.0, 128
      %1613 = vxpose.xlu0.b32.cont [11/16] 0.0, 128
      %1614 = vxpose.xlu0.b32.cont [12/16] 0.0, 128
      %1615 = vxpose.xlu0.b32.cont [13/16] 0.0, 128
      %1616 = vxpose.xlu0.b32.cont [14/16] 0.0, 128
      %1617 = vxpose.xlu0.b32.cont [15/16] 0.0, 128
      %1618 = vxpose.xlu0.b32.end [16/16] 0.0, 128
      %v1619 = vpop.trf.xlu0
      %v1620 = vpop.trf.xlu0
      %v1621 = vpop.trf.xlu0
      %v1622 = vpop.trf.xlu0
      %v1623 = vpop.trf.xlu0
      %v1624 = vpop.trf.xlu0
      %v1625 = vpop.trf.xlu0
      %v1626 = vpop.trf.xlu0
      %v1627 = vpop.trf.xlu0
      %v1628 = vpop.trf.xlu0
      %v1629 = vpop.trf.xlu0
      %v1630 = vpop.trf.xlu0
      %v1631 = vpop.trf.xlu0
      %v1632 = vpop.trf.xlu0
      %v1633 = vpop.trf.xlu0
      %v1634 = vpop.trf.xlu0
      %1635 = vxpose.xlu0.b32.start [1/16] %v1412, 128
      %1636 = vxpose.xlu0.b32.cont [2/16] 0.0, 128
      %1637 = vxpose.xlu0.b32.cont [3/16] 0.0, 128
      %1638 = vxpose.xlu0.b32.cont [4/16] 0.0, 128
      %1639 = vxpose.xlu0.b32.cont [5/16] 0.0, 128
      %1640 = vxpose.xlu0.b32.cont [6/16] 0.0, 128
      %1641 = vxpose.xlu0.b32.cont [7/16] 0.0, 128
      %1642 = vxpose.xlu0.b32.cont [8/16] 0.0, 128
      %1643 = vxpose.xlu0.b32.cont [9/16] 0.0, 128
      %1644 = vxpose.xlu0.b32.cont [10/16] 0.0, 128
      %1645 = vxpose.xlu0.b32.cont [11/16] 0.0, 128
      %1646 = vxpose.xlu0.b32.cont [12/16] 0.0, 128
      %1647 = vxpose.xlu0.b32.cont [13/16] 0.0, 128
      %1648 = vxpose.xlu0.b32.cont [14/16] 0.0, 128
      %1649 = vxpose.xlu0.b32.cont [15/16] 0.0, 128
      %1650 = vxpose.xlu0.b32.end [16/16] 0.0, 128
      %v1651 = vpop.trf.xlu0
      %v1652 = vpop.trf.xlu0
      %v1653 = vpop.trf.xlu0
      %v1654 = vpop.trf.xlu0
      %v1655 = vpop.trf.xlu0
      %v1656 = vpop.trf.xlu0
      %v1657 = vpop.trf.xlu0
      %v1658 = vpop.trf.xlu0
      %v1659 = vpop.trf.xlu0
      %v1660 = vpop.trf.xlu0
      %v1661 = vpop.trf.xlu0
      %v1662 = vpop.trf.xlu0
      %v1663 = vpop.trf.xlu0
      %v1664 = vpop.trf.xlu0
      %v1665 = vpop.trf.xlu0
      %v1666 = vpop.trf.xlu0
      %1667 = vxpose.xlu0.b32.start [1/16] %v1434, 128
      %1668 = vxpose.xlu0.b32.cont [2/16] 0.0, 128
      %1669 = vxpose.xlu0.b32.cont [3/16] 0.0, 128
      %1670 = vxpose.xlu0.b32.cont [4/16] 0.0, 128
      %1671 = vxpose.xlu0.b32.cont [5/16] 0.0, 128
      %1672 = vxpose.xlu0.b32.cont [6/16] 0.0, 128
      %1673 = vxpose.xlu0.b32.cont [7/16] 0.0, 128
      %1674 = vxpose.xlu0.b32.cont [8/16] 0.0, 128
      %1675 = vxpose.xlu0.b32.cont [9/16] 0.0, 128
      %1676 = vxpose.xlu0.b32.cont [10/16] 0.0, 128
      %1677 = vxpose.xlu0.b32.cont [11/16] 0.0, 128
      %1678 = vxpose.xlu0.b32.cont [12/16] 0.0, 128
      %1679 = vxpose.xlu0.b32.cont [13/16] 0.0, 128
      %1680 = vxpose.xlu0.b32.cont [14/16] 0.0, 128
      %1681 = vxpose.xlu0.b32.cont [15/16] 0.0, 128
      %1682 = vxpose.xlu0.b32.end [16/16] 0.0, 128
      %v1683 = vpop.trf.xlu0
      %v1684 = vpop.trf.xlu0
      %v1685 = vpop.trf.xlu0
      %v1686 = vpop.trf.xlu0
      %v1687 = vpop.trf.xlu0
      %v1688 = vpop.trf.xlu0
      %v1689 = vpop.trf.xlu0
      %v1690 = vpop.trf.xlu0
      %v1691 = vpop.trf.xlu0
      %v1692 = vpop.trf.xlu0
      %v1693 = vpop.trf.xlu0
      %v1694 = vpop.trf.xlu0
      %v1695 = vpop.trf.xlu0
      %v1696 = vpop.trf.xlu0
      %v1697 = vpop.trf.xlu0
      %v1698 = vpop.trf.xlu0
      %1699 = vxpose.xlu0.b32.start [1/16] %v1417, 128
      %1700 = vxpose.xlu0.b32.cont [2/16] 0.0, 128
      %1701 = vxpose.xlu0.b32.cont [3/16] 0.0, 128
      %1702 = vxpose.xlu0.b32.cont [4/16] 0.0, 128
      %1703 = vxpose.xlu0.b32.cont [5/16] 0.0, 128
      %1704 = vxpose.xlu0.b32.cont [6/16] 0.0, 128
      %1705 = vxpose.xlu0.b32.cont [7/16] 0.0, 128
      %1706 = vxpose.xlu0.b32.cont [8/16] 0.0, 128
      %1707 = vxpose.xlu0.b32.cont [9/16] 0.0, 128
      %1708 = vxpose.xlu0.b32.cont [10/16] 0.0, 128
      %1709 = vxpose.xlu0.b32.cont [11/16] 0.0, 128
      %1710 = vxpose.xlu0.b32.cont [12/16] 0.0, 128
      %1711 = vxpose.xlu0.b32.cont [13/16] 0.0, 128
      %1712 = vxpose.xlu0.b32.cont [14/16] 0.0, 128
      %1713 = vxpose.xlu0.b32.cont [15/16] 0.0, 128
      %1714 = vxpose.xlu0.b32.end [16/16] 0.0, 128
      %v1715 = vpop.trf.xlu0
      %v1716 = vpop.trf.xlu0
      %v1717 = vpop.trf.xlu0
      %v1718 = vpop.trf.xlu0
      %v1719 = vpop.trf.xlu0
      %v1720 = vpop.trf.xlu0
      %v1721 = vpop.trf.xlu0
      %v1722 = vpop.trf.xlu0
      %v1723 = vpop.trf.xlu0
      %v1724 = vpop.trf.xlu0
      %v1725 = vpop.trf.xlu0
      %v1726 = vpop.trf.xlu0
      %v1727 = vpop.trf.xlu0
      %v1728 = vpop.trf.xlu0
      %v1729 = vpop.trf.xlu0
      %v1730 = vpop.trf.xlu0
      %1731 = vxpose.xlu0.b32.start [1/16] %v1435, 128
      %1732 = vxpose.xlu0.b32.cont [2/16] 0.0, 128
      %1733 = vxpose.xlu0.b32.cont [3/16] 0.0, 128
      %1734 = vxpose.xlu0.b32.cont [4/16] 0.0, 128
      %1735 = vxpose.xlu0.b32.cont [5/16] 0.0, 128
      %1736 = vxpose.xlu0.b32.cont [6/16] 0.0, 128
      %1737 = vxpose.xlu0.b32.cont [7/16] 0.0, 128
      %1738 = vxpose.xlu0.b32.cont [8/16] 0.0, 128
      %1739 = vxpose.xlu0.b32.cont [9/16] 0.0, 128
      %1740 = vxpose.xlu0.b32.cont [10/16] 0.0, 128
      %1741 = vxpose.xlu0.b32.cont [11/16] 0.0, 128
      %1742 = vxpose.xlu0.b32.cont [12/16] 0.0, 128
      %1743 = vxpose.xlu0.b32.cont [13/16] 0.0, 128
      %1744 = vxpose.xlu0.b32.cont [14/16] 0.0, 128
      %1745 = vxpose.xlu0.b32.cont [15/16] 0.0, 128
      %1746 = vxpose.xlu0.b32.end [16/16] 0.0, 128
      %v1747 = vpop.trf.xlu0
      %v1748 = vpop.trf.xlu0
      %v1749 = vpop.trf.xlu0
      %v1750 = vpop.trf.xlu0
      %v1751 = vpop.trf.xlu0
      %v1752 = vpop.trf.xlu0
      %v1753 = vpop.trf.xlu0
      %v1754 = vpop.trf.xlu0
      %v1755 = vpop.trf.xlu0
      %v1756 = vpop.trf.xlu0
      %v1757 = vpop.trf.xlu0
      %v1758 = vpop.trf.xlu0
      %v1759 = vpop.trf.xlu0
      %v1760 = vpop.trf.xlu0
      %v1761 = vpop.trf.xlu0
      %v1762 = vpop.trf.xlu0
      %1763 = vxpose.xlu0.b32.start [1/16] %v1422, 128
      %1764 = vxpose.xlu0.b32.cont [2/16] 0.0, 128
      %1765 = vxpose.xlu0.b32.cont [3/16] 0.0, 128
      %1766 = vxpose.xlu0.b32.cont [4/16] 0.0, 128
      %1767 = vxpose.xlu0.b32.cont [5/16] 0.0, 128
      %1768 = vxpose.xlu0.b32.cont [6/16] 0.0, 128
      %1769 = vxpose.xlu0.b32.cont [7/16] 0.0, 128
      %1770 = vxpose.xlu0.b32.cont [8/16] 0.0, 128
      %1771 = vxpose.xlu0.b32.cont [9/16] 0.0, 128
      %1772 = vxpose.xlu0.b32.cont [10/16] 0.0, 128
      %1773 = vxpose.xlu0.b32.cont [11/16] 0.0, 128
      %1774 = vxpose.xlu0.b32.cont [12/16] 0.0, 128
      %1775 = vxpose.xlu0.b32.cont [13/16] 0.0, 128
      %1776 = vxpose.xlu0.b32.cont [14/16] 0.0, 128
      %1777 = vxpose.xlu0.b32.cont [15/16] 0.0, 128
      %1778 = vxpose.xlu0.b32.end [16/16] 0.0, 128
      %v1779 = vpop.trf.xlu0
      %v1780 = vpop.trf.xlu0
      %v1781 = vpop.trf.xlu0
      %v1782 = vpop.trf.xlu0
      %v1783 = vpop.trf.xlu0
      %v1784 = vpop.trf.xlu0
      %v1785 = vpop.trf.xlu0
      %v1786 = vpop.trf.xlu0
      %v1787 = vpop.trf.xlu0
      %v1788 = vpop.trf.xlu0
      %v1789 = vpop.trf.xlu0
      %v1790 = vpop.trf.xlu0
      %v1791 = vpop.trf.xlu0
      %v1792 = vpop.trf.xlu0
      %v1793 = vpop.trf.xlu0
      %v1794 = vpop.trf.xlu0
      %1795 = vxpose.xlu0.b32.start [1/16] %v1436, 128
      %1796 = vxpose.xlu0.b32.cont [2/16] 0.0, 128
      %1797 = vxpose.xlu0.b32.cont [3/16] 0.0, 128
      %1798 = vxpose.xlu0.b32.cont [4/16] 0.0, 128
      %1799 = vxpose.xlu0.b32.cont [5/16] 0.0, 128
      %1800 = vxpose.xlu0.b32.cont [6/16] 0.0, 128
      %1801 = vxpose.xlu0.b32.cont [7/16] 0.0, 128
      %1802 = vxpose.xlu0.b32.cont [8/16] 0.0, 128
      %1803 = vxpose.xlu0.b32.cont [9/16] 0.0, 128
      %1804 = vxpose.xlu0.b32.cont [10/16] 0.0, 128
      %1805 = vxpose.xlu0.b32.cont [11/16] 0.0, 128
      %1806 = vxpose.xlu0.b32.cont [12/16] 0.0, 128
      %1807 = vxpose.xlu0.b32.cont [13/16] 0.0, 128
      %1808 = vxpose.xlu0.b32.cont [14/16] 0.0, 128
      %1809 = vxpose.xlu0.b32.cont [15/16] 0.0, 128
      %1810 = vxpose.xlu0.b32.end [16/16] 0.0, 128
      %v1811 = vpop.trf.xlu0
      %v1812 = vpop.trf.xlu0
      %v1813 = vpop.trf.xlu0
      %v1814 = vpop.trf.xlu0
      %v1815 = vpop.trf.xlu0
      %v1816 = vpop.trf.xlu0
      %v1817 = vpop.trf.xlu0
      %v1818 = vpop.trf.xlu0
      %v1819 = vpop.trf.xlu0
      %v1820 = vpop.trf.xlu0
      %v1821 = vpop.trf.xlu0
      %v1822 = vpop.trf.xlu0
      %v1823 = vpop.trf.xlu0
      %v1824 = vpop.trf.xlu0
      %v1825 = vpop.trf.xlu0
      %v1826 = vpop.trf.xlu0
      %s1827 = smul.u32 %s350, 16
      %s1828 = scalar_lea.vmem %s338, %s1827
      %v1829 = vld [vmem:[%s1828] sm:$0xff]
      %v1830 = vld [vmem:[%s1828 + $0x8] sm:$0xff]
      %v1831 = vld [vmem:[%s1828 + $0x10] sm:$0xff]
      %v1832 = vld [vmem:[%s1828 + $0x18] sm:$0xff]
      %v1833 = vld [vmem:[%s1828 + $0x20] sm:$0xff]
      %v1834 = vld [vmem:[%s1828 + $0x28] sm:$0xff]
      %v1835 = vld [vmem:[%s1828 + $0x30] sm:$0xff]
      %v1836 = vld [vmem:[%s1828 + $0x38] sm:$0xff]
      %v1837 = vld [vmem:[%s1828 + $0x40] sm:$0xff]
      %v1838 = vld [vmem:[%s1828 + $0x48] sm:$0xff]
      %v1839 = vld [vmem:[%s1828 + $0x50] sm:$0xff]
      %v1840 = vld [vmem:[%s1828 + $0x58] sm:$0xff]
      %v1841 = vld [vmem:[%s1828 + $0x60] sm:$0xff]
      %v1842 = vld [vmem:[%s1828 + $0x68] sm:$0xff]
      %v1843 = vld [vmem:[%s1828 + $0x70] sm:$0xff]
      %v1844 = vld [vmem:[%s1828 + $0x78] sm:$0xff]
      %v1845 = vld [vmem:[%s1828 + $0x80] sm:$0xff]
      %v1846 = vld [vmem:[%s1828 + $0x88] sm:$0xff]
      %v1847 = vld [vmem:[%s1828 + $0x90] sm:$0xff]
      %v1848 = vld [vmem:[%s1828 + $0x98] sm:$0xff]
      %v1849 = vld [vmem:[%s1828 + $0xa0] sm:$0xff]
      %v1850 = vld [vmem:[%s1828 + $0xa8] sm:$0xff]
      %v1851 = vld [vmem:[%s1828 + $0xb0] sm:$0xff]
      %v1852 = vld [vmem:[%s1828 + $0xb8] sm:$0xff]
      %1853 = vst.msk [vmem:[#allocation2 + $0x8] sm:$0xff] %vm572, %v1459
      %1854 = vst.msk [vmem:[#allocation2 + $0x10] sm:$0xff] %vm572, %v1460
      %1855 = vst.msk [vmem:[#allocation2 + $0x28] sm:$0xff] %vm572, %v1491
      %1856 = vst.msk [vmem:[#allocation2 + $0x30] sm:$0xff] %vm572, %v1492
      %1857 = vst.msk [vmem:[#allocation2 + $0x48] sm:$0xff] %vm572, %v1523
      %1858 = vst.msk [vmem:[#allocation2 + $0x50] sm:$0xff] %vm572, %v1524
      %1859 = vst.msk [vmem:[#allocation2 + $0x68] sm:$0xff] %vm572, %v1555
      %1860 = vst.msk [vmem:[#allocation2 + $0x70] sm:$0xff] %vm572, %v1556
      %1861 = vst.msk [vmem:[#allocation2 + $0x88] sm:$0xff] %vm572, %v1587
      %1862 = vst.msk [vmem:[#allocation2 + $0x90] sm:$0xff] %vm572, %v1588
      %1863 = vst.msk [vmem:[#allocation2 + $0xa8] sm:$0xff] %vm572, %v1619
      %1864 = vst.msk [vmem:[#allocation2 + $0xb0] sm:$0xff] %vm572, %v1620
      %1865 = vst.msk [vmem:[#allocation2 + $0xc8] sm:$0xff] %vm572, %v1651
      %1866 = vst.msk [vmem:[#allocation2 + $0xd0] sm:$0xff] %vm572, %v1652
      %1867 = vst.msk [vmem:[#allocation2 + $0xe8] sm:$0xff] %vm572, %v1683
      %1868 = vst.msk [vmem:[#allocation2 + $0xf0] sm:$0xff] %vm572, %v1684
      %1869 = vst.msk [vmem:[#allocation2 + $0x108] sm:$0xff] %vm572, %v1715
      %1870 = vst.msk [vmem:[#allocation2 + $0x110] sm:$0xff] %vm572, %v1716
      %1871 = vst.msk [vmem:[#allocation2 + $0x128] sm:$0xff] %vm572, %v1747
      %1872 = vst.msk [vmem:[#allocation2 + $0x130] sm:$0xff] %vm572, %v1748
      %1873 = vst.msk [vmem:[#allocation2 + $0x148] sm:$0xff] %vm572, %v1779
      %1874 = vst.msk [vmem:[#allocation2 + $0x150] sm:$0xff] %vm572, %v1780
      %1875 = vst.msk [vmem:[#allocation2 + $0x168] sm:$0xff] %vm572, %v1811
      %1876 = vst.msk [vmem:[#allocation2 + $0x170] sm:$0xff] %vm572, %v1812
      %1901 = vrot.lane.b32.xlu0 %v1829, 4
      %v1902 = vpop.permute.xlu0 %1901
      %1903 = vrot.lane.b32.xlu0 %v1830, 4
      %v1904 = vpop.permute.xlu0 %1903
      %1905 = vrot.lane.b32.xlu0 %v1831, 4
      %v1906 = vpop.permute.xlu0 %1905
      %1907 = vrot.lane.b32.xlu0 %v1832, 4
      %v1908 = vpop.permute.xlu0 %1907
      %1909 = vrot.lane.b32.xlu0 %v1833, 4
      %v1910 = vpop.permute.xlu0 %1909
      %1911 = vrot.lane.b32.xlu0 %v1834, 4
      %v1912 = vpop.permute.xlu0 %1911
      %1913 = vrot.lane.b32.xlu0 %v1835, 4
      %v1914 = vpop.permute.xlu0 %1913
      %1915 = vrot.lane.b32.xlu0 %v1836, 4
      %v1916 = vpop.permute.xlu0 %1915
      %1917 = vrot.lane.b32.xlu0 %v1837, 4
      %v1918 = vpop.permute.xlu0 %1917
      %1919 = vrot.lane.b32.xlu0 %v1838, 4
      %v1920 = vpop.permute.xlu0 %1919
      %1921 = vrot.lane.b32.xlu0 %v1839, 4
      %v1922 = vpop.permute.xlu0 %1921
      %1923 = vrot.lane.b32.xlu0 %v1840, 4
      %v1924 = vpop.permute.xlu0 %1923
      %1925 = vrot.lane.b32.xlu0 %v1841, 4
      %v1926 = vpop.permute.xlu0 %1925
      %1927 = vrot.lane.b32.xlu0 %v1842, 4
      %v1928 = vpop.permute.xlu0 %1927
      %1929 = vrot.lane.b32.xlu0 %v1843, 4
      %v1930 = vpop.permute.xlu0 %1929
      %1931 = vrot.lane.b32.xlu0 %v1844, 4
      %v1932 = vpop.permute.xlu0 %1931
      %1933 = vrot.lane.b32.xlu0 %v1845, 4
      %v1934 = vpop.permute.xlu0 %1933
      %1935 = vrot.lane.b32.xlu0 %v1846, 4
      %v1936 = vpop.permute.xlu0 %1935
      %1937 = vrot.lane.b32.xlu0 %v1847, 4
      %v1938 = vpop.permute.xlu0 %1937
      %1939 = vrot.lane.b32.xlu0 %v1848, 4
      %v1940 = vpop.permute.xlu0 %1939
      %1941 = vrot.lane.b32.xlu0 %v1849, 4
      %v1942 = vpop.permute.xlu0 %1941
      %1943 = vrot.lane.b32.xlu0 %v1850, 4
      %v1944 = vpop.permute.xlu0 %1943
      %1945 = vrot.lane.b32.xlu0 %v1851, 4
      %v1946 = vpop.permute.xlu0 %1945
      %1947 = vrot.lane.b32.xlu0 %v1852, 4
      %v1948 = vpop.permute.xlu0 %1947
      %vm1973 = vcmask 64544
      %1974 = vst.msk [vmem:[#allocation2 + $0x8] sm:$0xff] %vm1973, %v1902
      %1975 = vst.msk [vmem:[#allocation2 + $0x10] sm:$0xff] %vm1973, %v1904
      %1976 = vst.msk [vmem:[#allocation2 + $0x28] sm:$0xff] %vm1973, %v1906
      %1977 = vst.msk [vmem:[#allocation2 + $0x30] sm:$0xff] %vm1973, %v1908
      %1978 = vst.msk [vmem:[#allocation2 + $0x48] sm:$0xff] %vm1973, %v1910
      %1979 = vst.msk [vmem:[#allocation2 + $0x50] sm:$0xff] %vm1973, %v1912
      %1980 = vst.msk [vmem:[#allocation2 + $0x68] sm:$0xff] %vm1973, %v1914
      %1981 = vst.msk [vmem:[#allocation2 + $0x70] sm:$0xff] %vm1973, %v1916
      %1982 = vst.msk [vmem:[#allocation2 + $0x88] sm:$0xff] %vm1973, %v1918
      %1983 = vst.msk [vmem:[#allocation2 + $0x90] sm:$0xff] %vm1973, %v1920
      %1984 = vst.msk [vmem:[#allocation2 + $0xa8] sm:$0xff] %vm1973, %v1922
      %1985 = vst.msk [vmem:[#allocation2 + $0xb0] sm:$0xff] %vm1973, %v1924
      %1986 = vst.msk [vmem:[#allocation2 + $0xc8] sm:$0xff] %vm1973, %v1926
      %1987 = vst.msk [vmem:[#allocation2 + $0xd0] sm:$0xff] %vm1973, %v1928
      %1988 = vst.msk [vmem:[#allocation2 + $0xe8] sm:$0xff] %vm1973, %v1930
      %1989 = vst.msk [vmem:[#allocation2 + $0xf0] sm:$0xff] %vm1973, %v1932
      %1990 = vst.msk [vmem:[#allocation2 + $0x108] sm:$0xff] %vm1973, %v1934
      %1991 = vst.msk [vmem:[#allocation2 + $0x110] sm:$0xff] %vm1973, %v1936
      %1992 = vst.msk [vmem:[#allocation2 + $0x128] sm:$0xff] %vm1973, %v1938
      %1993 = vst.msk [vmem:[#allocation2 + $0x130] sm:$0xff] %vm1973, %v1940
      %1994 = vst.msk [vmem:[#allocation2 + $0x148] sm:$0xff] %vm1973, %v1942
      %1995 = vst.msk [vmem:[#allocation2 + $0x150] sm:$0xff] %vm1973, %v1944
      %1996 = vst.msk [vmem:[#allocation2 + $0x168] sm:$0xff] %vm1973, %v1946
      %1997 = vst.msk [vmem:[#allocation2 + $0x170] sm:$0xff] %vm1973, %v1948
      %v1998 = vld [vmem:[#allocation2 + $0x7] sm:$0xff]
      %v1999 = vld [vmem:[#allocation2 + $0xf] sm:$0xff]
      %v2000 = vld [vmem:[#allocation2 + $0x27] sm:$0xff]
      %v2001 = vld [vmem:[#allocation2 + $0x2f] sm:$0xff]
      %v2002 = vld [vmem:[#allocation2 + $0x47] sm:$0xff]
      %v2003 = vld [vmem:[#allocation2 + $0x4f] sm:$0xff]
      %v2004 = vld [vmem:[#allocation2 + $0x67] sm:$0xff]
      %v2005 = vld [vmem:[#allocation2 + $0x6f] sm:$0xff]
      %v2006 = vld [vmem:[#allocation2 + $0x87] sm:$0xff]
      %v2007 = vld [vmem:[#allocation2 + $0x8f] sm:$0xff]
      %v2008 = vld [vmem:[#allocation2 + $0xa7] sm:$0xff]
      %v2009 = vld [vmem:[#allocation2 + $0xaf] sm:$0xff]
      %v2010 = vld [vmem:[#allocation2 + $0xc7] sm:$0xff]
      %v2011 = vld [vmem:[#allocation2 + $0xcf] sm:$0xff]
      %v2012 = vld [vmem:[#allocation2 + $0xe7] sm:$0xff]
      %v2013 = vld [vmem:[#allocation2 + $0xef] sm:$0xff]
      %v2014 = vld [vmem:[#allocation2 + $0x107] sm:$0xff]
      %v2015 = vld [vmem:[#allocation2 + $0x10f] sm:$0xff]
      %v2016 = vld [vmem:[#allocation2 + $0x127] sm:$0xff]
      %v2017 = vld [vmem:[#allocation2 + $0x12f] sm:$0xff]
      %v2018 = vpack.c.bf16 %v1999, %v1998
      %v2019 = vpack.c.bf16 %v2001, %v2000
      %v2020 = vpack.c.bf16 %v2003, %v2002
      %v2021 = vpack.c.bf16 %v2005, %v2004
      %v2022 = vpack.c.bf16 %v2007, %v2006
      %v2023 = vpack.c.bf16 %v2009, %v2008
      %v2024 = vpack.c.bf16 %v2011, %v2010
      %v2025 = vpack.c.bf16 %v2013, %v2012
      %v2026 = vpack.c.bf16 %v2015, %v2014
      %v2027 = vpack.c.bf16 %v2017, %v2016
      %v2030 = vsel %vm574, %v2018, 0
      %v2033 = vsel %vm574, %v2019, 0
      %v2036 = vsel %vm574, %v2020, 0
      %v2039 = vsel %vm574, %v2021, 0
      %v2042 = vsel %vm574, %v2022, 0
      %v2045 = vsel %vm574, %v2023, 0
      %v2048 = vsel %vm574, %v2024, 0
      %v2051 = vsel %vm574, %v2025, 0
      %v2054 = vsel %vm574, %v2026, 0
      %v2057 = vsel %vm574, %v2027, 0
      %2059 = vst [vmem:[#allocation4] sm:$0xff] %v2030
      %2060 = vst [vmem:[#allocation4 + $0x48] sm:$0xff] %v2033
      %2061 = vst [vmem:[#allocation4 + $0x90] sm:$0xff] %v2036
      %2062 = vst [vmem:[#allocation4 + $0xd8] sm:$0xff] %v2039
      %2063 = vst [vmem:[#allocation4 + $0x120] sm:$0xff] %v2042
      %2064 = vst [vmem:[#allocation4 + $0x168] sm:$0xff] %v2045
      %2065 = vst [vmem:[#allocation4 + $0x1b0] sm:$0xff] %v2048
      %2066 = vst [vmem:[#allocation4 + $0x1f8] sm:$0xff] %v2051
      %2067 = vst [vmem:[#allocation4 + $0x240] sm:$0xff] %v2054
      %2068 = vst [vmem:[#allocation4 + $0x288] sm:$0xff] %v2057
      %v2069 = vld [vmem:[#allocation2 + $0x8] sm:$0xff]
      %v2070 = vld [vmem:[#allocation2 + $0x10] sm:$0xff]
      %v2071 = vld [vmem:[#allocation2 + $0x28] sm:$0xff]
      %v2072 = vld [vmem:[#allocation2 + $0x30] sm:$0xff]
      %v2073 = vld [vmem:[#allocation2 + $0x48] sm:$0xff]
      %v2074 = vld [vmem:[#allocation2 + $0x50] sm:$0xff]
      %v2075 = vld [vmem:[#allocation2 + $0x68] sm:$0xff]
      %v2076 = vld [vmem:[#allocation2 + $0x70] sm:$0xff]
      %v2077 = vld [vmem:[#allocation2 + $0x88] sm:$0xff]
      %v2078 = vld [vmem:[#allocation2 + $0x90] sm:$0xff]
      %v2079 = vld [vmem:[#allocation2 + $0xa8] sm:$0xff]
      %v2080 = vld [vmem:[#allocation2 + $0xb0] sm:$0xff]
      %v2081 = vld [vmem:[#allocation2 + $0xc8] sm:$0xff]
      %v2082 = vld [vmem:[#allocation2 + $0xd0] sm:$0xff]
      %v2083 = vld [vmem:[#allocation2 + $0xe8] sm:$0xff]
      %v2084 = vld [vmem:[#allocation2 + $0xf0] sm:$0xff]
      %v2085 = vld [vmem:[#allocation2 + $0x108] sm:$0xff]
      %v2086 = vld [vmem:[#allocation2 + $0x110] sm:$0xff]
      %v2087 = vld [vmem:[#allocation2 + $0x128] sm:$0xff]
      %v2088 = vld [vmem:[#allocation2 + $0x130] sm:$0xff]
      %v2089 = vpack.c.bf16 %v2070, %v2069
      %v2090 = vpack.c.bf16 %v2072, %v2071
      %v2091 = vpack.c.bf16 %v2074, %v2073
      %v2092 = vpack.c.bf16 %v2076, %v2075
      %v2093 = vpack.c.bf16 %v2078, %v2077
      %v2094 = vpack.c.bf16 %v2080, %v2079
      %v2095 = vpack.c.bf16 %v2082, %v2081
      %v2096 = vpack.c.bf16 %v2084, %v2083
      %v2097 = vpack.c.bf16 %v2086, %v2085
      %v2098 = vpack.c.bf16 %v2088, %v2087
      %v2100 = vsel %vm574, %v2089, 0
      %v2103 = vsel %vm574, %v2090, 0
      %v2106 = vsel %vm574, %v2091, 0
      %v2109 = vsel %vm574, %v2092, 0
      %v2112 = vsel %vm574, %v2093, 0
      %v2115 = vsel %vm574, %v2094, 0
      %v2118 = vsel %vm574, %v2095, 0
      %v2121 = vsel %vm574, %v2096, 0
      %v2124 = vsel %vm574, %v2097, 0
      %v2127 = vsel %vm574, %v2098, 0
      %2129 = vst [vmem:[#allocation4 + $0x8] sm:$0xff] %v2100
      %2130 = vst [vmem:[#allocation4 + $0x50] sm:$0xff] %v2103
      %2131 = vst [vmem:[#allocation4 + $0x98] sm:$0xff] %v2106
      %2132 = vst [vmem:[#allocation4 + $0xe0] sm:$0xff] %v2109
      %2133 = vst [vmem:[#allocation4 + $0x128] sm:$0xff] %v2112
      %2134 = vst [vmem:[#allocation4 + $0x170] sm:$0xff] %v2115
      %2135 = vst [vmem:[#allocation4 + $0x1b8] sm:$0xff] %v2118
      %2136 = vst [vmem:[#allocation4 + $0x200] sm:$0xff] %v2121
      %2137 = vst [vmem:[#allocation4 + $0x248] sm:$0xff] %v2124
      %2138 = vst [vmem:[#allocation4 + $0x290] sm:$0xff] %v2127
      %v2139 = vld [vmem:[#allocation2 + $0x9] sm:$0xff]
      %v2140 = vld [vmem:[#allocation2 + $0x11] sm:$0xff]
      %v2141 = vld [vmem:[#allocation2 + $0x29] sm:$0xff]
      %v2142 = vld [vmem:[#allocation2 + $0x31] sm:$0xff]
      %v2143 = vld [vmem:[#allocation2 + $0x49] sm:$0xff]
      %v2144 = vld [vmem:[#allocation2 + $0x51] sm:$0xff]
      %v2145 = vld [vmem:[#allocation2 + $0x69] sm:$0xff]
      %v2146 = vld [vmem:[#allocation2 + $0x71] sm:$0xff]
      %v2147 = vld [vmem:[#allocation2 + $0x89] sm:$0xff]
      %v2148 = vld [vmem:[#allocation2 + $0x91] sm:$0xff]
      %v2149 = vld [vmem:[#allocation2 + $0xa9] sm:$0xff]
      %v2150 = vld [vmem:[#allocation2 + $0xb1] sm:$0xff]
      %v2151 = vld [vmem:[#allocation2 + $0xc9] sm:$0xff]
      %v2152 = vld [vmem:[#allocation2 + $0xd1] sm:$0xff]
      %v2153 = vld [vmem:[#allocation2 + $0xe9] sm:$0xff]
      %v2154 = vld [vmem:[#allocation2 + $0xf1] sm:$0xff]
      %v2155 = vld [vmem:[#allocation2 + $0x109] sm:$0xff]
      %v2156 = vld [vmem:[#allocation2 + $0x111] sm:$0xff]
      %v2157 = vld [vmem:[#allocation2 + $0x129] sm:$0xff]
      %v2158 = vld [vmem:[#allocation2 + $0x131] sm:$0xff]
      %v2159 = vpack.c.bf16 %v2140, %v2139
      %v2160 = vpack.c.bf16 %v2142, %v2141
      %v2161 = vpack.c.bf16 %v2144, %v2143
      %v2162 = vpack.c.bf16 %v2146, %v2145
      %v2163 = vpack.c.bf16 %v2148, %v2147
      %v2164 = vpack.c.bf16 %v2150, %v2149
      %v2165 = vpack.c.bf16 %v2152, %v2151
      %v2166 = vpack.c.bf16 %v2154, %v2153
      %v2167 = vpack.c.bf16 %v2156, %v2155
      %v2168 = vpack.c.bf16 %v2158, %v2157
      %v2170 = vsel %vm574, %v2159, 0
      %v2173 = vsel %vm574, %v2160, 0
      %v2176 = vsel %vm574, %v2161, 0
      %v2179 = vsel %vm574, %v2162, 0
      %v2182 = vsel %vm574, %v2163, 0
      %v2185 = vsel %vm574, %v2164, 0
      %v2188 = vsel %vm574, %v2165, 0
      %v2191 = vsel %vm574, %v2166, 0
      %v2194 = vsel %vm574, %v2167, 0
      %v2197 = vsel %vm574, %v2168, 0
      %2199 = vst [vmem:[#allocation4 + $0x10] sm:$0xff] %v2170
      %2200 = vst [vmem:[#allocation4 + $0x58] sm:$0xff] %v2173
      %2201 = vst [vmem:[#allocation4 + $0xa0] sm:$0xff] %v2176
      %2202 = vst [vmem:[#allocation4 + $0xe8] sm:$0xff] %v2179
      %2203 = vst [vmem:[#allocation4 + $0x130] sm:$0xff] %v2182
      %2204 = vst [vmem:[#allocation4 + $0x178] sm:$0xff] %v2185
      %2205 = vst [vmem:[#allocation4 + $0x1c0] sm:$0xff] %v2188
      %2206 = vst [vmem:[#allocation4 + $0x208] sm:$0xff] %v2191
      %2207 = vst [vmem:[#allocation4 + $0x250] sm:$0xff] %v2194
      %2208 = vst [vmem:[#allocation4 + $0x298] sm:$0xff] %v2197
      %s2209 = scalar_lea.vmem [#allocation2], 32
      %v2210 = vld [vmem:[%s2209 + $0x7] sm:$0xff]
      %v2211 = vld [vmem:[%s2209 + $0xf] sm:$0xff]
      %v2212 = vld [vmem:[%s2209 + $0x27] sm:$0xff]
      %v2213 = vld [vmem:[%s2209 + $0x2f] sm:$0xff]
      %v2214 = vld [vmem:[%s2209 + $0x47] sm:$0xff]
      %v2215 = vld [vmem:[%s2209 + $0x4f] sm:$0xff]
      %v2216 = vld [vmem:[%s2209 + $0x67] sm:$0xff]
      %v2217 = vld [vmem:[%s2209 + $0x6f] sm:$0xff]
      %v2218 = vld [vmem:[%s2209 + $0x87] sm:$0xff]
      %v2219 = vld [vmem:[%s2209 + $0x8f] sm:$0xff]
      %v2220 = vld [vmem:[%s2209 + $0xa7] sm:$0xff]
      %v2221 = vld [vmem:[%s2209 + $0xaf] sm:$0xff]
      %v2222 = vld [vmem:[%s2209 + $0xc7] sm:$0xff]
      %v2223 = vld [vmem:[%s2209 + $0xcf] sm:$0xff]
      %v2224 = vld [vmem:[%s2209 + $0xe7] sm:$0xff]
      %v2225 = vld [vmem:[%s2209 + $0xef] sm:$0xff]
      %v2226 = vld [vmem:[%s2209 + $0x107] sm:$0xff]
      %v2227 = vld [vmem:[%s2209 + $0x10f] sm:$0xff]
      %v2228 = vld [vmem:[%s2209 + $0x127] sm:$0xff]
      %v2229 = vld [vmem:[%s2209 + $0x12f] sm:$0xff]
      %v2230 = vpack.c.bf16 %v2211, %v2210
      %v2231 = vpack.c.bf16 %v2213, %v2212
      %v2232 = vpack.c.bf16 %v2215, %v2214
      %v2233 = vpack.c.bf16 %v2217, %v2216
      %v2234 = vpack.c.bf16 %v2219, %v2218
      %v2235 = vpack.c.bf16 %v2221, %v2220
      %v2236 = vpack.c.bf16 %v2223, %v2222
      %v2237 = vpack.c.bf16 %v2225, %v2224
      %v2238 = vpack.c.bf16 %v2227, %v2226
      %v2239 = vpack.c.bf16 %v2229, %v2228
      %v2241 = vsel %vm574, %v2230, 0
      %v2244 = vsel %vm574, %v2231, 0
      %v2247 = vsel %vm574, %v2232, 0
      %v2250 = vsel %vm574, %v2233, 0
      %v2253 = vsel %vm574, %v2234, 0
      %v2256 = vsel %vm574, %v2235, 0
      %v2259 = vsel %vm574, %v2236, 0
      %v2262 = vsel %vm574, %v2237, 0
      %v2265 = vsel %vm574, %v2238, 0
      %v2268 = vsel %vm574, %v2239, 0
      %2270 = vst [vmem:[#allocation4 + $0x18] sm:$0xff] %v2241
      %2271 = vst [vmem:[#allocation4 + $0x60] sm:$0xff] %v2244
      %2272 = vst [vmem:[#allocation4 + $0xa8] sm:$0xff] %v2247
      %2273 = vst [vmem:[#allocation4 + $0xf0] sm:$0xff] %v2250
      %2274 = vst [vmem:[#allocation4 + $0x138] sm:$0xff] %v2253
      %2275 = vst [vmem:[#allocation4 + $0x180] sm:$0xff] %v2256
      %2276 = vst [vmem:[#allocation4 + $0x1c8] sm:$0xff] %v2259
      %2277 = vst [vmem:[#allocation4 + $0x210] sm:$0xff] %v2262
      %2278 = vst [vmem:[#allocation4 + $0x258] sm:$0xff] %v2265
      %2279 = vst [vmem:[#allocation4 + $0x2a0] sm:$0xff] %v2268
      %v2280 = vld [vmem:[%s2209 + $0x8] sm:$0xff]
      %v2281 = vld [vmem:[%s2209 + $0x10] sm:$0xff]
      %v2282 = vld [vmem:[%s2209 + $0x28] sm:$0xff]
      %v2283 = vld [vmem:[%s2209 + $0x30] sm:$0xff]
      %v2284 = vld [vmem:[%s2209 + $0x48] sm:$0xff]
      %v2285 = vld [vmem:[%s2209 + $0x50] sm:$0xff]
      %v2286 = vld [vmem:[%s2209 + $0x68] sm:$0xff]
      %v2287 = vld [vmem:[%s2209 + $0x70] sm:$0xff]
      %v2288 = vld [vmem:[%s2209 + $0x88] sm:$0xff]
      %v2289 = vld [vmem:[%s2209 + $0x90] sm:$0xff]
      %v2290 = vld [vmem:[%s2209 + $0xa8] sm:$0xff]
      %v2291 = vld [vmem:[%s2209 + $0xb0] sm:$0xff]
      %v2292 = vld [vmem:[%s2209 + $0xc8] sm:$0xff]
      %v2293 = vld [vmem:[%s2209 + $0xd0] sm:$0xff]
      %v2294 = vld [vmem:[%s2209 + $0xe8] sm:$0xff]
      %v2295 = vld [vmem:[%s2209 + $0xf0] sm:$0xff]
      %v2296 = vld [vmem:[%s2209 + $0x108] sm:$0xff]
      %v2297 = vld [vmem:[%s2209 + $0x110] sm:$0xff]
      %v2298 = vld [vmem:[%s2209 + $0x128] sm:$0xff]
      %v2299 = vld [vmem:[%s2209 + $0x130] sm:$0xff]
      %v2300 = vpack.c.bf16 %v2281, %v2280
      %v2301 = vpack.c.bf16 %v2283, %v2282
      %v2302 = vpack.c.bf16 %v2285, %v2284
      %v2303 = vpack.c.bf16 %v2287, %v2286
      %v2304 = vpack.c.bf16 %v2289, %v2288
      %v2305 = vpack.c.bf16 %v2291, %v2290
      %v2306 = vpack.c.bf16 %v2293, %v2292
      %v2307 = vpack.c.bf16 %v2295, %v2294
      %v2308 = vpack.c.bf16 %v2297, %v2296
      %v2309 = vpack.c.bf16 %v2299, %v2298
      %v2311 = vsel %vm574, %v2300, 0
      %v2314 = vsel %vm574, %v2301, 0
      %v2317 = vsel %vm574, %v2302, 0
      %v2320 = vsel %vm574, %v2303, 0
      %v2323 = vsel %vm574, %v2304, 0
      %v2326 = vsel %vm574, %v2305, 0
      %v2329 = vsel %vm574, %v2306, 0
      %v2332 = vsel %vm574, %v2307, 0
      %v2335 = vsel %vm574, %v2308, 0
      %v2338 = vsel %vm574, %v2309, 0
      %2340 = vst [vmem:[#allocation4 + $0x20] sm:$0xff] %v2311
      %2341 = vst [vmem:[#allocation4 + $0x68] sm:$0xff] %v2314
      %2342 = vst [vmem:[#allocation4 + $0xb0] sm:$0xff] %v2317
      %2343 = vst [vmem:[#allocation4 + $0xf8] sm:$0xff] %v2320
      %2344 = vst [vmem:[#allocation4 + $0x140] sm:$0xff] %v2323
      %2345 = vst [vmem:[#allocation4 + $0x188] sm:$0xff] %v2326
      %2346 = vst [vmem:[#allocation4 + $0x1d0] sm:$0xff] %v2329
      %2347 = vst [vmem:[#allocation4 + $0x218] sm:$0xff] %v2332
      %2348 = vst [vmem:[#allocation4 + $0x260] sm:$0xff] %v2335
      %2349 = vst [vmem:[#allocation4 + $0x2a8] sm:$0xff] %v2338
      %v2350 = vld [vmem:[%s2209 + $0x9] sm:$0xff]
      %v2351 = vld [vmem:[%s2209 + $0x11] sm:$0xff]
      %v2352 = vld [vmem:[%s2209 + $0x29] sm:$0xff]
      %v2353 = vld [vmem:[%s2209 + $0x31] sm:$0xff]
      %v2354 = vld [vmem:[%s2209 + $0x49] sm:$0xff]
      %v2355 = vld [vmem:[%s2209 + $0x51] sm:$0xff]
      %v2356 = vld [vmem:[%s2209 + $0x69] sm:$0xff]
      %v2357 = vld [vmem:[%s2209 + $0x71] sm:$0xff]
      %v2358 = vld [vmem:[%s2209 + $0x89] sm:$0xff]
      %v2359 = vld [vmem:[%s2209 + $0x91] sm:$0xff]
      %v2360 = vld [vmem:[%s2209 + $0xa9] sm:$0xff]
      %v2361 = vld [vmem:[%s2209 + $0xb1] sm:$0xff]
      %v2362 = vld [vmem:[%s2209 + $0xc9] sm:$0xff]
      %v2363 = vld [vmem:[%s2209 + $0xd1] sm:$0xff]
      %v2364 = vld [vmem:[%s2209 + $0xe9] sm:$0xff]
      %v2365 = vld [vmem:[%s2209 + $0xf1] sm:$0xff]
      %v2366 = vld [vmem:[%s2209 + $0x109] sm:$0xff]
      %v2367 = vld [vmem:[%s2209 + $0x111] sm:$0xff]
      %v2368 = vld [vmem:[%s2209 + $0x129] sm:$0xff]
      %v2369 = vld [vmem:[%s2209 + $0x131] sm:$0xff]
      %v2370 = vpack.c.bf16 %v2351, %v2350
      %v2371 = vpack.c.bf16 %v2353, %v2352
      %v2372 = vpack.c.bf16 %v2355, %v2354
      %v2373 = vpack.c.bf16 %v2357, %v2356
      %v2374 = vpack.c.bf16 %v2359, %v2358
      %v2375 = vpack.c.bf16 %v2361, %v2360
      %v2376 = vpack.c.bf16 %v2363, %v2362
      %v2377 = vpack.c.bf16 %v2365, %v2364
      %v2378 = vpack.c.bf16 %v2367, %v2366
      %v2379 = vpack.c.bf16 %v2369, %v2368
      %v2381 = vsel %vm574, %v2370, 0
      %v2384 = vsel %vm574, %v2371, 0
      %v2387 = vsel %vm574, %v2372, 0
      %v2390 = vsel %vm574, %v2373, 0
      %v2393 = vsel %vm574, %v2374, 0
      %v2396 = vsel %vm574, %v2375, 0
      %v2399 = vsel %vm574, %v2376, 0
      %v2402 = vsel %vm574, %v2377, 0
      %v2405 = vsel %vm574, %v2378, 0
      %v2408 = vsel %vm574, %v2379, 0
      %2410 = vst [vmem:[#allocation4 + $0x28] sm:$0xff] %v2381
      %2411 = vst [vmem:[#allocation4 + $0x70] sm:$0xff] %v2384
      %2412 = vst [vmem:[#allocation4 + $0xb8] sm:$0xff] %v2387
      %2413 = vst [vmem:[#allocation4 + $0x100] sm:$0xff] %v2390
      %2414 = vst [vmem:[#allocation4 + $0x148] sm:$0xff] %v2393
      %2415 = vst [vmem:[#allocation4 + $0x190] sm:$0xff] %v2396
      %2416 = vst [vmem:[#allocation4 + $0x1d8] sm:$0xff] %v2399
      %2417 = vst [vmem:[#allocation4 + $0x220] sm:$0xff] %v2402
      %2418 = vst [vmem:[#allocation4 + $0x268] sm:$0xff] %v2405
      %2419 = vst [vmem:[#allocation4 + $0x2b0] sm:$0xff] %v2408
      %s2420 = scalar_lea.vmem [#allocation2], 64
      %v2421 = vld [vmem:[%s2420 + $0x7] sm:$0xff]
      %v2422 = vld [vmem:[%s2420 + $0xf] sm:$0xff]
      %v2423 = vld [vmem:[%s2420 + $0x27] sm:$0xff]
      %v2424 = vld [vmem:[%s2420 + $0x2f] sm:$0xff]
      %v2425 = vld [vmem:[%s2420 + $0x47] sm:$0xff]
      %v2426 = vld [vmem:[%s2420 + $0x4f] sm:$0xff]
      %v2427 = vld [vmem:[%s2420 + $0x67] sm:$0xff]
      %v2428 = vld [vmem:[%s2420 + $0x6f] sm:$0xff]
      %v2429 = vld [vmem:[%s2420 + $0x87] sm:$0xff]
      %v2430 = vld [vmem:[%s2420 + $0x8f] sm:$0xff]
      %v2431 = vld [vmem:[%s2420 + $0xa7] sm:$0xff]
      %v2432 = vld [vmem:[%s2420 + $0xaf] sm:$0xff]
      %v2433 = vld [vmem:[%s2420 + $0xc7] sm:$0xff]
      %v2434 = vld [vmem:[%s2420 + $0xcf] sm:$0xff]
      %v2435 = vld [vmem:[%s2420 + $0xe7] sm:$0xff]
      %v2436 = vld [vmem:[%s2420 + $0xef] sm:$0xff]
      %v2437 = vld [vmem:[%s2420 + $0x107] sm:$0xff]
      %v2438 = vld [vmem:[%s2420 + $0x10f] sm:$0xff]
      %v2439 = vld [vmem:[%s2420 + $0x127] sm:$0xff]
      %v2440 = vld [vmem:[%s2420 + $0x12f] sm:$0xff]
      %v2441 = vpack.c.bf16 %v2422, %v2421
      %v2442 = vpack.c.bf16 %v2424, %v2423
      %v2443 = vpack.c.bf16 %v2426, %v2425
      %v2444 = vpack.c.bf16 %v2428, %v2427
      %v2445 = vpack.c.bf16 %v2430, %v2429
      %v2446 = vpack.c.bf16 %v2432, %v2431
      %v2447 = vpack.c.bf16 %v2434, %v2433
      %v2448 = vpack.c.bf16 %v2436, %v2435
      %v2449 = vpack.c.bf16 %v2438, %v2437
      %v2450 = vpack.c.bf16 %v2440, %v2439
      %v2452 = vsel %vm574, %v2441, 0
      %v2455 = vsel %vm574, %v2442, 0
      %v2458 = vsel %vm574, %v2443, 0
      %v2461 = vsel %vm574, %v2444, 0
      %v2464 = vsel %vm574, %v2445, 0
      %v2467 = vsel %vm574, %v2446, 0
      %v2470 = vsel %vm574, %v2447, 0
      %v2473 = vsel %vm574, %v2448, 0
      %v2476 = vsel %vm574, %v2449, 0
      %v2479 = vsel %vm574, %v2450, 0
      %2481 = vst [vmem:[#allocation4 + $0x30] sm:$0xff] %v2452
      %2482 = vst [vmem:[#allocation4 + $0x78] sm:$0xff] %v2455
      %2483 = vst [vmem:[#allocation4 + $0xc0] sm:$0xff] %v2458
      %2484 = vst [vmem:[#allocation4 + $0x108] sm:$0xff] %v2461
      %2485 = vst [vmem:[#allocation4 + $0x150] sm:$0xff] %v2464
      %2486 = vst [vmem:[#allocation4 + $0x198] sm:$0xff] %v2467
      %2487 = vst [vmem:[#allocation4 + $0x1e0] sm:$0xff] %v2470
      %2488 = vst [vmem:[#allocation4 + $0x228] sm:$0xff] %v2473
      %2489 = vst [vmem:[#allocation4 + $0x270] sm:$0xff] %v2476
      %2490 = vst [vmem:[#allocation4 + $0x2b8] sm:$0xff] %v2479
      %v2491 = vld [vmem:[%s2420 + $0x8] sm:$0xff]
      %v2492 = vld [vmem:[%s2420 + $0x10] sm:$0xff]
      %v2493 = vld [vmem:[%s2420 + $0x28] sm:$0xff]
      %v2494 = vld [vmem:[%s2420 + $0x30] sm:$0xff]
      %v2495 = vld [vmem:[%s2420 + $0x48] sm:$0xff]
      %v2496 = vld [vmem:[%s2420 + $0x50] sm:$0xff]
      %v2497 = vld [vmem:[%s2420 + $0x68] sm:$0xff]
      %v2498 = vld [vmem:[%s2420 + $0x70] sm:$0xff]
      %v2499 = vld [vmem:[%s2420 + $0x88] sm:$0xff]
      %v2500 = vld [vmem:[%s2420 + $0x90] sm:$0xff]
      %v2501 = vld [vmem:[%s2420 + $0xa8] sm:$0xff]
      %v2502 = vld [vmem:[%s2420 + $0xb0] sm:$0xff]
      %v2503 = vld [vmem:[%s2420 + $0xc8] sm:$0xff]
      %v2504 = vld [vmem:[%s2420 + $0xd0] sm:$0xff]
      %v2505 = vld [vmem:[%s2420 + $0xe8] sm:$0xff]
      %v2506 = vld [vmem:[%s2420 + $0xf0] sm:$0xff]
      %v2507 = vld [vmem:[%s2420 + $0x108] sm:$0xff]
      %v2508 = vld [vmem:[%s2420 + $0x110] sm:$0xff]
      %v2509 = vld [vmem:[%s2420 + $0x128] sm:$0xff]
      %v2510 = vld [vmem:[%s2420 + $0x130] sm:$0xff]
      %v2511 = vpack.c.bf16 %v2492, %v2491
      %v2512 = vpack.c.bf16 %v2494, %v2493
      %v2513 = vpack.c.bf16 %v2496, %v2495
      %v2514 = vpack.c.bf16 %v2498, %v2497
      %v2515 = vpack.c.bf16 %v2500, %v2499
      %v2516 = vpack.c.bf16 %v2502, %v2501
      %v2517 = vpack.c.bf16 %v2504, %v2503
      %v2518 = vpack.c.bf16 %v2506, %v2505
      %v2519 = vpack.c.bf16 %v2508, %v2507
      %v2520 = vpack.c.bf16 %v2510, %v2509
      %v2522 = vsel %vm574, %v2511, 0
      %v2525 = vsel %vm574, %v2512, 0
      %v2528 = vsel %vm574, %v2513, 0
      %v2531 = vsel %vm574, %v2514, 0
      %v2534 = vsel %vm574, %v2515, 0
      %v2537 = vsel %vm574, %v2516, 0
      %v2540 = vsel %vm574, %v2517, 0
      %v2543 = vsel %vm574, %v2518, 0
      %v2546 = vsel %vm574, %v2519, 0
      %v2549 = vsel %vm574, %v2520, 0
      %2551 = vst [vmem:[#allocation4 + $0x38] sm:$0xff] %v2522
      %2552 = vst [vmem:[#allocation4 + $0x80] sm:$0xff] %v2525
      %2553 = vst [vmem:[#allocation4 + $0xc8] sm:$0xff] %v2528
      %2554 = vst [vmem:[#allocation4 + $0x110] sm:$0xff] %v2531
      %2555 = vst [vmem:[#allocation4 + $0x158] sm:$0xff] %v2534
      %2556 = vst [vmem:[#allocation4 + $0x1a0] sm:$0xff] %v2537
      %2557 = vst [vmem:[#allocation4 + $0x1e8] sm:$0xff] %v2540
      %2558 = vst [vmem:[#allocation4 + $0x230] sm:$0xff] %v2543
      %2559 = vst [vmem:[#allocation4 + $0x278] sm:$0xff] %v2546
      %2560 = vst [vmem:[#allocation4 + $0x2c0] sm:$0xff] %v2549
      %v2561 = vld [vmem:[%s2420 + $0x9] sm:$0xff]
      %v2562 = vld [vmem:[%s2420 + $0x11] sm:$0xff]
      %v2563 = vld [vmem:[%s2420 + $0x29] sm:$0xff]
      %v2564 = vld [vmem:[%s2420 + $0x31] sm:$0xff]
      %v2565 = vld [vmem:[%s2420 + $0x49] sm:$0xff]
      %v2566 = vld [vmem:[%s2420 + $0x51] sm:$0xff]
      %v2567 = vld [vmem:[%s2420 + $0x69] sm:$0xff]
      %v2568 = vld [vmem:[%s2420 + $0x71] sm:$0xff]
      %v2569 = vld [vmem:[%s2420 + $0x89] sm:$0xff]
      %v2570 = vld [vmem:[%s2420 + $0x91] sm:$0xff]
      %v2571 = vld [vmem:[%s2420 + $0xa9] sm:$0xff]
      %v2572 = vld [vmem:[%s2420 + $0xb1] sm:$0xff]
      %v2573 = vld [vmem:[%s2420 + $0xc9] sm:$0xff]
      %v2574 = vld [vmem:[%s2420 + $0xd1] sm:$0xff]
      %v2575 = vld [vmem:[%s2420 + $0xe9] sm:$0xff]
      %v2576 = vld [vmem:[%s2420 + $0xf1] sm:$0xff]
      %v2577 = vld [vmem:[%s2420 + $0x109] sm:$0xff]
      %v2578 = vld [vmem:[%s2420 + $0x111] sm:$0xff]
      %v2579 = vld [vmem:[%s2420 + $0x129] sm:$0xff]
      %v2580 = vld [vmem:[%s2420 + $0x131] sm:$0xff]
      %v2581 = vpack.c.bf16 %v2562, %v2561
      %v2582 = vpack.c.bf16 %v2564, %v2563
      %v2583 = vpack.c.bf16 %v2566, %v2565
      %v2584 = vpack.c.bf16 %v2568, %v2567
      %v2585 = vpack.c.bf16 %v2570, %v2569
      %v2586 = vpack.c.bf16 %v2572, %v2571
      %v2587 = vpack.c.bf16 %v2574, %v2573
      %v2588 = vpack.c.bf16 %v2576, %v2575
      %v2589 = vpack.c.bf16 %v2578, %v2577
      %v2590 = vpack.c.bf16 %v2580, %v2579
      %v2592 = vsel %vm574, %v2581, 0
      %v2595 = vsel %vm574, %v2582, 0
      %v2598 = vsel %vm574, %v2583, 0
      %v2601 = vsel %vm574, %v2584, 0
      %v2604 = vsel %vm574, %v2585, 0
      %v2607 = vsel %vm574, %v2586, 0
      %v2610 = vsel %vm574, %v2587, 0
      %v2613 = vsel %vm574, %v2588, 0
      %v2616 = vsel %vm574, %v2589, 0
      %v2619 = vsel %vm574, %v2590, 0
      %2621 = vst [vmem:[#allocation4 + $0x40] sm:$0xff] %v2592
      %2622 = vst [vmem:[#allocation4 + $0x88] sm:$0xff] %v2595
      %2623 = vst [vmem:[#allocation4 + $0xd0] sm:$0xff] %v2598
      %2624 = vst [vmem:[#allocation4 + $0x118] sm:$0xff] %v2601
      %2625 = vst [vmem:[#allocation4 + $0x160] sm:$0xff] %v2604
      %2626 = vst [vmem:[#allocation4 + $0x1a8] sm:$0xff] %v2607
      %2627 = vst [vmem:[#allocation4 + $0x1f0] sm:$0xff] %v2610
      %2628 = vst [vmem:[#allocation4 + $0x238] sm:$0xff] %v2613
      %2629 = vst [vmem:[#allocation4 + $0x280] sm:$0xff] %v2616
      %2630 = vst [vmem:[#allocation4 + $0x2c8] sm:$0xff] %v2619
      %v2631 = vld [vmem:[#allocation4] sm:$0xff]
      %v2632 = vld [vmem:[#allocation4 + $0x8] sm:$0xff]
      %v2633 = vld [vmem:[#allocation4 + $0x10] sm:$0xff]
      %v2634 = vld [vmem:[#allocation4 + $0x18] sm:$0xff]
      %v2635 = vld [vmem:[#allocation4 + $0x20] sm:$0xff]
      %v2636 = vld [vmem:[#allocation4 + $0x28] sm:$0xff]
      %v2637 = vld [vmem:[#allocation4 + $0x30] sm:$0xff]
      %v2638 = vld [vmem:[#allocation4 + $0x38] sm:$0xff]
      %v2639 = vld [vmem:[#allocation4 + $0x40] sm:$0xff]
      %v2640 = vld [vmem:[#allocation4 + $0x48] sm:$0xff]
      %v2641 = vld [vmem:[#allocation4 + $0x50] sm:$0xff]
      %v2642 = vld [vmem:[#allocation4 + $0x58] sm:$0xff]
      %v2643 = vld [vmem:[#allocation4 + $0x60] sm:$0xff]
      %v2644 = vld [vmem:[#allocation4 + $0x68] sm:$0xff]
      %v2645 = vld [vmem:[#allocation4 + $0x70] sm:$0xff]
      %v2646 = vld [vmem:[#allocation4 + $0x78] sm:$0xff]
      %v2647 = vld [vmem:[#allocation4 + $0x80] sm:$0xff]
      %v2648 = vld [vmem:[#allocation4 + $0x88] sm:$0xff]
      %v2649 = vld [vmem:[#allocation4 + $0x90] sm:$0xff]
      %v2650 = vld [vmem:[#allocation4 + $0x98] sm:$0xff]
      %v2651 = vld [vmem:[#allocation4 + $0xa0] sm:$0xff]
      %v2652 = vld [vmem:[#allocation4 + $0xa8] sm:$0xff]
      %v2653 = vld [vmem:[#allocation4 + $0xb0] sm:$0xff]
      %v2654 = vld [vmem:[#allocation4 + $0xb8] sm:$0xff]
      %v2655 = vld [vmem:[#allocation4 + $0xc0] sm:$0xff]
      %v2656 = vld [vmem:[#allocation4 + $0xc8] sm:$0xff]
      %v2657 = vld [vmem:[#allocation4 + $0xd0] sm:$0xff]
      %v2658 = vld [vmem:[#allocation4 + $0xd8] sm:$0xff]
      %v2659 = vld [vmem:[#allocation4 + $0xe0] sm:$0xff]
      %v2660 = vld [vmem:[#allocation4 + $0xe8] sm:$0xff]
      %v2661 = vld [vmem:[#allocation4 + $0xf0] sm:$0xff]
      %v2662 = vld [vmem:[#allocation4 + $0xf8] sm:$0xff]
      %v2663 = vld [vmem:[#allocation4 + $0x100] sm:$0xff]
      %v2664 = vld [vmem:[#allocation4 + $0x108] sm:$0xff]
      %v2665 = vld [vmem:[#allocation4 + $0x110] sm:$0xff]
      %v2666 = vld [vmem:[#allocation4 + $0x118] sm:$0xff]
      %v2667 = vld [vmem:[#allocation4 + $0x120] sm:$0xff]
      %v2668 = vld [vmem:[#allocation4 + $0x128] sm:$0xff]
      %v2669 = vld [vmem:[#allocation4 + $0x130] sm:$0xff]
      %v2670 = vld [vmem:[#allocation4 + $0x138] sm:$0xff]
      %v2671 = vld [vmem:[#allocation4 + $0x140] sm:$0xff]
      %v2672 = vld [vmem:[#allocation4 + $0x148] sm:$0xff]
      %v2673 = vld [vmem:[#allocation4 + $0x150] sm:$0xff]
      %v2674 = vld [vmem:[#allocation4 + $0x158] sm:$0xff]
      %v2675 = vld [vmem:[#allocation4 + $0x160] sm:$0xff]
      %v2676 = vld [vmem:[#allocation4 + $0x168] sm:$0xff]
      %v2677 = vld [vmem:[#allocation4 + $0x170] sm:$0xff]
      %v2678 = vld [vmem:[#allocation4 + $0x178] sm:$0xff]
      %v2679 = vld [vmem:[#allocation4 + $0x180] sm:$0xff]
      %v2680 = vld [vmem:[#allocation4 + $0x188] sm:$0xff]
      %v2681 = vld [vmem:[#allocation4 + $0x190] sm:$0xff]
      %v2682 = vld [vmem:[#allocation4 + $0x198] sm:$0xff]
      %v2683 = vld [vmem:[#allocation4 + $0x1a0] sm:$0xff]
      %v2684 = vld [vmem:[#allocation4 + $0x1a8] sm:$0xff]
      %v2685 = vld [vmem:[#allocation4 + $0x1b0] sm:$0xff]
      %v2686 = vld [vmem:[#allocation4 + $0x1b8] sm:$0xff]
      %v2687 = vld [vmem:[#allocation4 + $0x1c0] sm:$0xff]
      %v2688 = vld [vmem:[#allocation4 + $0x1c8] sm:$0xff]
      %v2689 = vld [vmem:[#allocation4 + $0x1d0] sm:$0xff]
      %v2690 = vld [vmem:[#allocation4 + $0x1d8] sm:$0xff]
      %v2691 = vld [vmem:[#allocation4 + $0x1e0] sm:$0xff]
      %v2692 = vld [vmem:[#allocation4 + $0x1e8] sm:$0xff]
      %v2693 = vld [vmem:[#allocation4 + $0x1f0] sm:$0xff]
      %v2694 = vld [vmem:[#allocation4 + $0x1f8] sm:$0xff]
      %v2695 = vld [vmem:[#allocation4 + $0x200] sm:$0xff]
      %v2696 = vld [vmem:[#allocation4 + $0x208] sm:$0xff]
      %v2697 = vld [vmem:[#allocation4 + $0x210] sm:$0xff]
      %v2698 = vld [vmem:[#allocation4 + $0x218] sm:$0xff]
      %v2699 = vld [vmem:[#allocation4 + $0x220] sm:$0xff]
      %v2700 = vld [vmem:[#allocation4 + $0x228] sm:$0xff]
      %v2701 = vld [vmem:[#allocation4 + $0x230] sm:$0xff]
      %v2702 = vld [vmem:[#allocation4 + $0x238] sm:$0xff]
      %v2703 = vld [vmem:[#allocation4 + $0x240] sm:$0xff]
      %v2704 = vld [vmem:[#allocation4 + $0x248] sm:$0xff]
      %v2705 = vld [vmem:[#allocation4 + $0x250] sm:$0xff]
      %v2706 = vld [vmem:[#allocation4 + $0x258] sm:$0xff]
      %v2707 = vld [vmem:[#allocation4 + $0x260] sm:$0xff]
      %v2708 = vld [vmem:[#allocation4 + $0x268] sm:$0xff]
      %v2709 = vld [vmem:[#allocation4 + $0x270] sm:$0xff]
      %v2710 = vld [vmem:[#allocation4 + $0x278] sm:$0xff]
      %v2711 = vld [vmem:[#allocation4 + $0x280] sm:$0xff]
      %v2712 = vld [vmem:[#allocation4 + $0x288] sm:$0xff]
      %v2713 = vld [vmem:[#allocation4 + $0x290] sm:$0xff]
      %v2714 = vld [vmem:[#allocation4 + $0x298] sm:$0xff]
      %v2715 = vld [vmem:[#allocation4 + $0x2a0] sm:$0xff]
      %v2716 = vld [vmem:[#allocation4 + $0x2a8] sm:$0xff]
      %v2717 = vld [vmem:[#allocation4 + $0x2b0] sm:$0xff]
      %v2718 = vld [vmem:[#allocation4 + $0x2b8] sm:$0xff]
      %v2719 = vld [vmem:[#allocation4 + $0x2c0] sm:$0xff]
      %v2720 = vld [vmem:[#allocation4 + $0x2c8] sm:$0xff]
      %v2721 = vld [vmem:[%s4] sm:$0xf]
      %v2722 = vld [vmem:[%s4 + $0x4] sm:$0xf]
      %v2723 = vld [vmem:[%s4 + $0x8] sm:$0xf]
      %v2724 = vld [vmem:[%s4 + $0xc] sm:$0xf]
      %v2725 = vld [vmem:[%s4 + $0x10] sm:$0xf]
      %v2726 = vld [vmem:[%s4 + $0x14] sm:$0xf]
      %v2727 = vld [vmem:[%s4 + $0x18] sm:$0xf]
      %v2728 = vld [vmem:[%s4 + $0x1c] sm:$0xf]
      %v2729 = vld [vmem:[%s4 + $0x20] sm:$0xf]
      %v2730 = vld [vmem:[%s4 + $0x24] sm:$0xf]
      %v2731 = vld [vmem:[%s4 + $0x28] sm:$0xf]
      %v2732 = vld [vmem:[%s4 + $0x2c] sm:$0xf]
      %v2733 = vld [vmem:[%s4 + $0x30] sm:$0xf]
      %v2734 = vld [vmem:[%s4 + $0x34] sm:$0xf]
      %v2735 = vld [vmem:[%s4 + $0x38] sm:$0xf]
      %v2736 = vld [vmem:[%s4 + $0x3c] sm:$0xf]
      %v2737 = vld [vmem:[%s4 + $0x40] sm:$0xf]
      %v2738 = vld [vmem:[%s4 + $0x44] sm:$0xf]
      %v2739 = vld [vmem:[%s4 + $0x48] sm:$0xf]
      %v2740 = vld [vmem:[%s4 + $0x4c] sm:$0xf]
      %v2741 = vld [vmem:[%s4 + $0x50] sm:$0xf]
      %v2742 = vld [vmem:[%s4 + $0x54] sm:$0xf]
      %v2743 = vld [vmem:[%s4 + $0x58] sm:$0xf]
      %v2744 = vld [vmem:[%s4 + $0x5c] sm:$0xf]
      %v2745 = vld [vmem:[%s4 + $0x60] sm:$0xf]
      %v2746 = vld [vmem:[%s4 + $0x64] sm:$0xf]
      %v2747 = vld [vmem:[%s4 + $0x68] sm:$0xf]
      %v2748 = vld [vmem:[%s4 + $0x6c] sm:$0xf]
      %v2749 = vld [vmem:[%s4 + $0x70] sm:$0xf]
      %v2750 = vld [vmem:[%s4 + $0x74] sm:$0xf]
      %v2751 = vld [vmem:[%s4 + $0x78] sm:$0xf]
      %v2752 = vld [vmem:[%s4 + $0x7c] sm:$0xf]
      %v2753 = vld [vmem:[%s4 + $0x80] sm:$0xf]
      %v2754 = vld [vmem:[%s4 + $0x84] sm:$0xf]
      %v2755 = vld [vmem:[%s4 + $0x88] sm:$0xf]
      %v2756 = vld [vmem:[%s4 + $0x8c] sm:$0xf]
      %v2757 = vld [vmem:[%s4 + $0x90] sm:$0xf]
      %v2758 = vld [vmem:[%s4 + $0x94] sm:$0xf]
      %v2759 = vld [vmem:[%s4 + $0x98] sm:$0xf]
      %v2760 = vld [vmem:[%s4 + $0x9c] sm:$0xf]
      %v2761 = vld [vmem:[%s4 + $0xa0] sm:$0xf]
      %v2762 = vld [vmem:[%s4 + $0xa4] sm:$0xf]
      %v2763 = vld [vmem:[%s4 + $0xa8] sm:$0xf]
      %v2764 = vld [vmem:[%s4 + $0xac] sm:$0xf]
      %v2765 = vld [vmem:[%s4 + $0xb0] sm:$0xf]
      %v2766 = vld [vmem:[%s4 + $0xb4] sm:$0xf]
      %v2767 = vld [vmem:[%s4 + $0xb8] sm:$0xf]
      %v2768 = vld [vmem:[%s4 + $0xbc] sm:$0xf]
      %v2769 = vld [vmem:[%s4 + $0xc0] sm:$0xf]
      %v2770 = vld [vmem:[%s4 + $0xc4] sm:$0xf]
      %v2771 = vld [vmem:[%s4 + $0xc8] sm:$0xf]
      %v2772 = vld [vmem:[%s4 + $0xcc] sm:$0xf]
      %v2773 = vld [vmem:[%s4 + $0xd0] sm:$0xf]
      %v2774 = vld [vmem:[%s4 + $0xd4] sm:$0xf]
      %v2775 = vld [vmem:[%s4 + $0xd8] sm:$0xf]
      %v2776 = vld [vmem:[%s4 + $0xdc] sm:$0xf]
      %v2777 = vld [vmem:[%s4 + $0xe0] sm:$0xf]
      %v2778 = vld [vmem:[%s4 + $0xe4] sm:$0xf]
      %v2779 = vld [vmem:[%s4 + $0xe8] sm:$0xf]
      %v2780 = vld [vmem:[%s4 + $0xec] sm:$0xf]
      %v2781 = vld [vmem:[%s4 + $0xf0] sm:$0xf]
      %v2782 = vld [vmem:[%s4 + $0xf4] sm:$0xf]
      %v2783 = vld [vmem:[%s4 + $0xf8] sm:$0xf]
      %v2784 = vld [vmem:[%s4 + $0xfc] sm:$0xf]
      %v2785 = vld [vmem:[%s4 + $0x100] sm:$0xf]
      %v2786 = vld [vmem:[%s4 + $0x104] sm:$0xf]
      %v2787 = vld [vmem:[%s4 + $0x108] sm:$0xf]
      %v2788 = vld [vmem:[%s4 + $0x10c] sm:$0xf]
      %v2789 = vld [vmem:[%s4 + $0x110] sm:$0xf]
      %v2790 = vld [vmem:[%s4 + $0x114] sm:$0xf]
      %v2791 = vld [vmem:[%s4 + $0x118] sm:$0xf]
      %v2792 = vld [vmem:[%s4 + $0x11c] sm:$0xf]
      %v2793 = vld [vmem:[%s4 + $0x120] sm:$0xf]
      %v2794 = vld [vmem:[%s4 + $0x124] sm:$0xf]
      %v2795 = vld [vmem:[%s4 + $0x128] sm:$0xf]
      %v2796 = vld [vmem:[%s4 + $0x12c] sm:$0xf]
      %v2797 = vld [vmem:[%s4 + $0x130] sm:$0xf]
      %v2798 = vld [vmem:[%s4 + $0x134] sm:$0xf]
      %v2799 = vld [vmem:[%s4 + $0x138] sm:$0xf]
      %v2800 = vld [vmem:[%s4 + $0x13c] sm:$0xf]
      %v2801 = vld [vmem:[%s4 + $0x140] sm:$0xf]
      %v2802 = vld [vmem:[%s4 + $0x144] sm:$0xf]
      %v2803 = vld [vmem:[%s4 + $0x148] sm:$0xf]
      %v2804 = vld [vmem:[%s4 + $0x14c] sm:$0xf]
      %v2805 = vld [vmem:[%s4 + $0x150] sm:$0xf]
      %v2806 = vld [vmem:[%s4 + $0x154] sm:$0xf]
      %v2807 = vld [vmem:[%s4 + $0x158] sm:$0xf]
      %v2808 = vld [vmem:[%s4 + $0x15c] sm:$0xf]
      %v2809 = vld [vmem:[%s4 + $0x160] sm:$0xf]
      %v2810 = vld [vmem:[%s4 + $0x164] sm:$0xf]
      %v2811 = vld [vmem:[%s4 + $0x168] sm:$0xf]
      %v2812 = vld [vmem:[%s4 + $0x16c] sm:$0xf]
      %v2813 = vld [vmem:[%s4 + $0x170] sm:$0xf]
      %v2814 = vld [vmem:[%s4 + $0x174] sm:$0xf]
      %v2815 = vld [vmem:[%s4 + $0x178] sm:$0xf]
      %v2816 = vld [vmem:[%s4 + $0x17c] sm:$0xf]
      %v2817 = vld [vmem:[%s4 + $0x180] sm:$0xf]
      %v2818 = vld [vmem:[%s4 + $0x184] sm:$0xf]
      %v2819 = vld [vmem:[%s4 + $0x188] sm:$0xf]
      %v2820 = vld [vmem:[%s4 + $0x18c] sm:$0xf]
      %v2821 = vld [vmem:[%s4 + $0x190] sm:$0xf]
      %v2822 = vld [vmem:[%s4 + $0x194] sm:$0xf]
      %v2823 = vld [vmem:[%s4 + $0x198] sm:$0xf]
      %v2824 = vld [vmem:[%s4 + $0x19c] sm:$0xf]
      %v2825 = vld [vmem:[%s4 + $0x1a0] sm:$0xf]
      %v2826 = vld [vmem:[%s4 + $0x1a4] sm:$0xf]
      %v2827 = vld [vmem:[%s4 + $0x1a8] sm:$0xf]
      %v2828 = vld [vmem:[%s4 + $0x1ac] sm:$0xf]
      %v2829 = vld [vmem:[%s4 + $0x1b0] sm:$0xf]
      %v2830 = vld [vmem:[%s4 + $0x1b4] sm:$0xf]
      %v2831 = vld [vmem:[%s4 + $0x1b8] sm:$0xf]
      %v2832 = vld [vmem:[%s4 + $0x1bc] sm:$0xf]
      %v2833 = vld [vmem:[%s4 + $0x1c0] sm:$0xf]
      %v2834 = vld [vmem:[%s4 + $0x1c4] sm:$0xf]
      %v2835 = vld [vmem:[%s4 + $0x1c8] sm:$0xf]
      %v2836 = vld [vmem:[%s4 + $0x1cc] sm:$0xf]
      %v2837 = vld [vmem:[%s4 + $0x1d0] sm:$0xf]
      %v2838 = vld [vmem:[%s4 + $0x1d4] sm:$0xf]
      %v2839 = vld [vmem:[%s4 + $0x1d8] sm:$0xf]
      %v2840 = vld [vmem:[%s4 + $0x1dc] sm:$0xf]
      %v2841 = vld [vmem:[%s4 + $0x1e0] sm:$0xf]
      %v2842 = vld [vmem:[%s4 + $0x1e4] sm:$0xf]
      %v2843 = vld [vmem:[%s4 + $0x1e8] sm:$0xf]
      %v2844 = vld [vmem:[%s4 + $0x1ec] sm:$0xf]
      %v2845 = vld [vmem:[%s4 + $0x1f0] sm:$0xf]
      %v2846 = vld [vmem:[%s4 + $0x1f4] sm:$0xf]
      %v2847 = vld [vmem:[%s4 + $0x1f8] sm:$0xf]
      %v2848 = vld [vmem:[%s4 + $0x1fc] sm:$0xf]
      %v2849 = vld [vmem:[%s4 + $0x200] sm:$0xf]
      %v2850 = vld [vmem:[%s4 + $0x204] sm:$0xf]
      %v2851 = vld [vmem:[%s4 + $0x208] sm:$0xf]
      %v2852 = vld [vmem:[%s4 + $0x20c] sm:$0xf]
      %v2853 = vld [vmem:[%s4 + $0x210] sm:$0xf]
      %v2854 = vld [vmem:[%s4 + $0x214] sm:$0xf]
      %v2855 = vld [vmem:[%s4 + $0x218] sm:$0xf]
      %v2856 = vld [vmem:[%s4 + $0x21c] sm:$0xf]
      %v2857 = vld [vmem:[%s4 + $0x220] sm:$0xf]
      %v2858 = vld [vmem:[%s4 + $0x224] sm:$0xf]
      %v2859 = vld [vmem:[%s4 + $0x228] sm:$0xf]
      %v2860 = vld [vmem:[%s4 + $0x22c] sm:$0xf]
      %v2861 = vld [vmem:[%s4 + $0x230] sm:$0xf]
      %v2862 = vld [vmem:[%s4 + $0x234] sm:$0xf]
      %v2863 = vld [vmem:[%s4 + $0x238] sm:$0xf]
      %v2864 = vld [vmem:[%s4 + $0x23c] sm:$0xf]
      %v2865 = vld [vmem:[%s5] sm:$0x1]
      %v2867 = vlaneseq
      %v2868 = vshrl.u32 %v2867, 7
      %v2869 = vsub.s32 0, %v2868
      %v2870 = vrot.slane %v2865, %v2869
      %v3016 = vunpack.c.l.b16 %v2721
      %v3017 = vunpack.c.l.b16 %v2722
      %v3018 = vunpack.c.l.b16 %v2723
      %v3019 = vunpack.c.l.b16 %v2724
      %v3020 = vunpack.c.l.b16 %v2725
      %v3021 = vunpack.c.l.b16 %v2726
      %v3022 = vunpack.c.l.b16 %v2727
      %v3023 = vunpack.c.l.b16 %v2728
      %v3024 = vunpack.c.l.b16 %v2729
      %v3025 = vunpack.c.l.b16 %v2730
      %v3026 = vunpack.c.l.b16 %v2731
      %v3027 = vunpack.c.l.b16 %v2732
      %v3028 = vunpack.c.l.b16 %v2733
      %v3029 = vunpack.c.l.b16 %v2734
      %v3030 = vunpack.c.l.b16 %v2735
      %v3031 = vunpack.c.l.b16 %v2736
      %v3032 = vunpack.c.l.b16 %v2737
      %v3033 = vunpack.c.l.b16 %v2738
      %v3034 = vunpack.c.l.b16 %v2739
      %v3035 = vunpack.c.l.b16 %v2740
      %v3036 = vunpack.c.l.b16 %v2741
      %v3037 = vunpack.c.l.b16 %v2742
      %v3038 = vunpack.c.l.b16 %v2743
      %v3039 = vunpack.c.l.b16 %v2744
      %v3040 = vunpack.c.l.b16 %v2745
      %v3041 = vunpack.c.l.b16 %v2746
      %v3042 = vunpack.c.l.b16 %v2747
      %v3043 = vunpack.c.l.b16 %v2748
      %v3044 = vunpack.c.l.b16 %v2749
      %v3045 = vunpack.c.l.b16 %v2750
      %v3046 = vunpack.c.l.b16 %v2751
      %v3047 = vunpack.c.l.b16 %v2752
      %v3048 = vunpack.c.l.b16 %v2753
      %v3049 = vunpack.c.l.b16 %v2754
      %v3050 = vunpack.c.l.b16 %v2755
      %v3051 = vunpack.c.l.b16 %v2756
      %v3052 = vunpack.c.l.b16 %v2757
      %v3053 = vunpack.c.l.b16 %v2758
      %v3054 = vunpack.c.l.b16 %v2759
      %v3055 = vunpack.c.l.b16 %v2760
      %v3056 = vunpack.c.l.b16 %v2761
      %v3057 = vunpack.c.l.b16 %v2762
      %v3058 = vunpack.c.l.b16 %v2763
      %v3059 = vunpack.c.l.b16 %v2764
      %v3060 = vunpack.c.l.b16 %v2765
      %v3061 = vunpack.c.l.b16 %v2766
      %v3062 = vunpack.c.l.b16 %v2767
      %v3063 = vunpack.c.l.b16 %v2768
      %v3064 = vunpack.c.l.b16 %v2769
      %v3065 = vunpack.c.l.b16 %v2770
      %v3066 = vunpack.c.l.b16 %v2771
      %v3067 = vunpack.c.l.b16 %v2772
      %v3068 = vunpack.c.l.b16 %v2773
      %v3069 = vunpack.c.l.b16 %v2774
      %v3070 = vunpack.c.l.b16 %v2775
      %v3071 = vunpack.c.l.b16 %v2776
      %v3072 = vunpack.c.l.b16 %v2777
      %v3073 = vunpack.c.l.b16 %v2778
      %v3074 = vunpack.c.l.b16 %v2779
      %v3075 = vunpack.c.l.b16 %v2780
      %v3076 = vunpack.c.l.b16 %v2781
      %v3077 = vunpack.c.l.b16 %v2782
      %v3078 = vunpack.c.l.b16 %v2783
      %v3079 = vunpack.c.l.b16 %v2784
      %v3080 = vunpack.c.l.b16 %v2785
      %v3081 = vunpack.c.l.b16 %v2786
      %v3082 = vunpack.c.l.b16 %v2787
      %v3083 = vunpack.c.l.b16 %v2788
      %v3084 = vunpack.c.l.b16 %v2789
      %v3085 = vunpack.c.l.b16 %v2790
      %v3086 = vunpack.c.l.b16 %v2791
      %v3087 = vunpack.c.l.b16 %v2792
      %v3088 = vunpack.c.l.b16 %v2793
      %v3089 = vunpack.c.l.b16 %v2794
      %v3090 = vunpack.c.l.b16 %v2795
      %v3091 = vunpack.c.l.b16 %v2796
      %v3092 = vunpack.c.l.b16 %v2797
      %v3093 = vunpack.c.l.b16 %v2798
      %v3094 = vunpack.c.l.b16 %v2799
      %v3095 = vunpack.c.l.b16 %v2800
      %v3096 = vunpack.c.l.b16 %v2801
      %v3097 = vunpack.c.l.b16 %v2802
      %v3098 = vunpack.c.l.b16 %v2803
      %v3099 = vunpack.c.l.b16 %v2804
      %v3100 = vunpack.c.l.b16 %v2805
      %v3101 = vunpack.c.l.b16 %v2806
      %v3102 = vunpack.c.l.b16 %v2807
      %v3103 = vunpack.c.l.b16 %v2808
      %v3104 = vunpack.c.l.b16 %v2809
      %v3105 = vunpack.c.l.b16 %v2810
      %v3106 = vunpack.c.l.b16 %v2811
      %v3107 = vunpack.c.l.b16 %v2812
      %v3108 = vunpack.c.l.b16 %v2813
      %v3109 = vunpack.c.l.b16 %v2814
      %v3110 = vunpack.c.l.b16 %v2815
      %v3111 = vunpack.c.l.b16 %v2816
      %v3112 = vunpack.c.l.b16 %v2817
      %v3113 = vunpack.c.l.b16 %v2818
      %v3114 = vunpack.c.l.b16 %v2819
      %v3115 = vunpack.c.l.b16 %v2820
      %v3116 = vunpack.c.l.b16 %v2821
      %v3117 = vunpack.c.l.b16 %v2822
      %v3118 = vunpack.c.l.b16 %v2823
      %v3119 = vunpack.c.l.b16 %v2824
      %v3120 = vunpack.c.l.b16 %v2825
      %v3121 = vunpack.c.l.b16 %v2826
      %v3122 = vunpack.c.l.b16 %v2827
      %v3123 = vunpack.c.l.b16 %v2828
      %v3124 = vunpack.c.l.b16 %v2829
      %v3125 = vunpack.c.l.b16 %v2830
      %v3126 = vunpack.c.l.b16 %v2831
      %v3127 = vunpack.c.l.b16 %v2832
      %v3128 = vunpack.c.l.b16 %v2833
      %v3129 = vunpack.c.l.b16 %v2834
      %v3130 = vunpack.c.l.b16 %v2835
      %v3131 = vunpack.c.l.b16 %v2836
      %v3132 = vunpack.c.l.b16 %v2837
      %v3133 = vunpack.c.l.b16 %v2838
      %v3134 = vunpack.c.l.b16 %v2839
      %v3135 = vunpack.c.l.b16 %v2840
      %v3136 = vunpack.c.l.b16 %v2841
      %v3137 = vunpack.c.l.b16 %v2842
      %v3138 = vunpack.c.l.b16 %v2843
      %v3139 = vunpack.c.l.b16 %v2844
      %v3140 = vunpack.c.l.b16 %v2845
      %v3141 = vunpack.c.l.b16 %v2846
      %v3142 = vunpack.c.l.b16 %v2847
      %v3143 = vunpack.c.l.b16 %v2848
      %v3144 = vunpack.c.l.b16 %v2849
      %v3145 = vunpack.c.l.b16 %v2850
      %v3146 = vunpack.c.l.b16 %v2851
      %v3147 = vunpack.c.l.b16 %v2852
      %v3148 = vunpack.c.l.b16 %v2853
      %v3149 = vunpack.c.l.b16 %v2854
      %v3150 = vunpack.c.l.b16 %v2855
      %v3151 = vunpack.c.l.b16 %v2856
      %v3152 = vunpack.c.l.b16 %v2857
      %v3153 = vunpack.c.l.b16 %v2858
      %v3154 = vunpack.c.l.b16 %v2859
      %v3155 = vunpack.c.l.b16 %v2860
      %v3156 = vunpack.c.l.b16 %v2861
      %v3157 = vunpack.c.l.b16 %v2862
      %v3158 = vunpack.c.l.b16 %v2863
      %v3159 = vunpack.c.l.b16 %v2864
      %v3160 = vpack.c.b16 %v3017, %v3016
      %v3161 = vpack.c.b16 %v3019, %v3018
      %v3162 = vpack.c.b16 %v3021, %v3020
      %v3163 = vpack.c.b16 %v3023, %v3022
      %v3164 = vpack.c.b16 %v3025, %v3024
      %v3165 = vpack.c.b16 %v3027, %v3026
      %v3166 = vpack.c.b16 %v3029, %v3028
      %v3167 = vpack.c.b16 %v3031, %v3030
      %v3168 = vpack.c.b16 %v3033, %v3032
      %v3169 = vpack.c.b16 %v3035, %v3034
      %v3170 = vpack.c.b16 %v3037, %v3036
      %v3171 = vpack.c.b16 %v3039, %v3038
      %v3172 = vpack.c.b16 %v3041, %v3040
      %v3173 = vpack.c.b16 %v3043, %v3042
      %v3174 = vpack.c.b16 %v3045, %v3044
      %v3175 = vpack.c.b16 %v3047, %v3046
      %v3176 = vpack.c.b16 %v3049, %v3048
      %v3177 = vpack.c.b16 %v3051, %v3050
      %v3178 = vpack.c.b16 %v3053, %v3052
      %v3179 = vpack.c.b16 %v3055, %v3054
      %v3180 = vpack.c.b16 %v3057, %v3056
      %v3181 = vpack.c.b16 %v3059, %v3058
      %v3182 = vpack.c.b16 %v3061, %v3060
      %v3183 = vpack.c.b16 %v3063, %v3062
      %v3184 = vpack.c.b16 %v3065, %v3064
      %v3185 = vpack.c.b16 %v3067, %v3066
      %v3186 = vpack.c.b16 %v3069, %v3068
      %v3187 = vpack.c.b16 %v3071, %v3070
      %v3188 = vpack.c.b16 %v3073, %v3072
      %v3189 = vpack.c.b16 %v3075, %v3074
      %v3190 = vpack.c.b16 %v3077, %v3076
      %v3191 = vpack.c.b16 %v3079, %v3078
      %v3192 = vpack.c.b16 %v3081, %v3080
      %v3193 = vpack.c.b16 %v3083, %v3082
      %v3194 = vpack.c.b16 %v3085, %v3084
      %v3195 = vpack.c.b16 %v3087, %v3086
      %v3196 = vpack.c.b16 %v3089, %v3088
      %v3197 = vpack.c.b16 %v3091, %v3090
      %v3198 = vpack.c.b16 %v3093, %v3092
      %v3199 = vpack.c.b16 %v3095, %v3094
      %v3200 = vpack.c.b16 %v3097, %v3096
      %v3201 = vpack.c.b16 %v3099, %v3098
      %v3202 = vpack.c.b16 %v3101, %v3100
      %v3203 = vpack.c.b16 %v3103, %v3102
      %v3204 = vpack.c.b16 %v3105, %v3104
      %v3205 = vpack.c.b16 %v3107, %v3106
      %v3206 = vpack.c.b16 %v3109, %v3108
      %v3207 = vpack.c.b16 %v3111, %v3110
      %v3208 = vpack.c.b16 %v3113, %v3112
      %v3209 = vpack.c.b16 %v3115, %v3114
      %v3210 = vpack.c.b16 %v3117, %v3116
      %v3211 = vpack.c.b16 %v3119, %v3118
      %v3212 = vpack.c.b16 %v3121, %v3120
      %v3213 = vpack.c.b16 %v3123, %v3122
      %v3214 = vpack.c.b16 %v3125, %v3124
      %v3215 = vpack.c.b16 %v3127, %v3126
      %v3216 = vpack.c.b16 %v3129, %v3128
      %v3217 = vpack.c.b16 %v3131, %v3130
      %v3218 = vpack.c.b16 %v3133, %v3132
      %v3219 = vpack.c.b16 %v3135, %v3134
      %v3220 = vpack.c.b16 %v3137, %v3136
      %v3221 = vpack.c.b16 %v3139, %v3138
      %v3222 = vpack.c.b16 %v3141, %v3140
      %v3223 = vpack.c.b16 %v3143, %v3142
      %v3224 = vpack.c.b16 %v3145, %v3144
      %v3225 = vpack.c.b16 %v3147, %v3146
      %v3226 = vpack.c.b16 %v3149, %v3148
      %v3227 = vpack.c.b16 %v3151, %v3150
      %v3228 = vpack.c.b16 %v3153, %v3152
      %v3229 = vpack.c.b16 %v3155, %v3154
      %v3230 = vpack.c.b16 %v3157, %v3156
      %v3231 = vpack.c.b16 %v3159, %v3158
      %3304 = vmatprep.subr.bf16.mxu0 0
      %3305 = vmatpush1.bf16.msra.mxu0 %v3160
      %3306 = vmatprep.subr.bf16.mxu0 0
      %3307 = vmatpush1.bf16.msra.mxu0 %v3161
      %3308 = vmatprep.subr.bf16.mxu0 0
      %3309 = vmatpush1.bf16.msra.mxu0 %v3162
      %3310 = vmatprep.subr.bf16.mxu0 0
      %3311 = vmatpush1.bf16.msra.mxu0 %v3163
      %3312 = vmatprep.subr.bf16.mxu0 0
      %3313 = vmatpush1.bf16.msra.mxu0 %v3164
      %3314 = vmatprep.subr.bf16.mxu0 0
      %3315 = vmatpush1.bf16.msra.mxu0 %v3165
      %3316 = vmatprep.subr.bf16.mxu0 0
      %3317 = vmatpush1.bf16.msra.mxu0 %v3166
      %3318 = vmatprep.subr.bf16.mxu0 0
      %3319 = vmatpush1.bf16.msra.mxu0 %v3167
      %3320 = vmatprep.subr.bf16.mxu0 0
      %3321 = vmatpush1.bf16.msra.mxu0 %v3168
      %3322 = vmatprep.subr.bf16.mxu0 0
      %3323 = vmatpush1.bf16.msra.mxu0 %v3169
      %3324 = vmatprep.subr.bf16.mxu0 0
      %3325 = vmatpush1.bf16.msra.mxu0 %v3170
      %3326 = vmatprep.subr.bf16.mxu0 0
      %3327 = vmatpush1.bf16.msra.mxu0 %v3171
      %3328 = vmatprep.subr.bf16.mxu0 0
      %3329 = vmatpush1.bf16.msra.mxu0 %v3172
      %3330 = vmatprep.subr.bf16.mxu0 0
      %3331 = vmatpush1.bf16.msra.mxu0 %v3173
      %3332 = vmatprep.subr.bf16.mxu0 0
      %3333 = vmatpush1.bf16.msra.mxu0 %v3174
      %3334 = vmatprep.subr.bf16.mxu0 0
      %3335 = vmatpush1.bf16.msra.mxu0 %v3175
      %3336 = vmatprep.mubr.bf16.mxu0 %v2632
      %3337 = vmatmul.mubr.bf16.gmra.mrb[0].mxu0 %v2631
      %v3338 = vpop.f32.mrb[0].mxu0
      %v3339 = vadd.f32 %v2870, %v3338
      %v3340 = vpop.f32.mrb[0].mxu0
      %v3341 = vpop.f32.mrb[0].mxu0
      %v3342 = vadd.f32 %v2870, %v3341
      %v3343 = vpop.f32.mrb[0].mxu0
      %3344 = vmatprep.mubr.bf16.mxu0 %v2641
      %3345 = vmatmul.mubr.bf16.gmra.mrb[0].mxu0 %v2640
      %v3346 = vpop.f32.mrb[0].mxu0
      %v3347 = vadd.f32 %v2870, %v3346
      %v3348 = vpop.f32.mrb[0].mxu0
      %v3349 = vpop.f32.mrb[0].mxu0
      %v3350 = vadd.f32 %v2870, %v3349
      %v3351 = vpop.f32.mrb[0].mxu0
      %3352 = vmatprep.mubr.bf16.mxu0 %v2650
      %3353 = vmatmul.mubr.bf16.gmra.mrb[0].mxu0 %v2649
      %v3354 = vpop.f32.mrb[0].mxu0
      %v3355 = vadd.f32 %v2870, %v3354
      %v3356 = vpop.f32.mrb[0].mxu0
      %v3357 = vpop.f32.mrb[0].mxu0
      %v3358 = vadd.f32 %v2870, %v3357
      %v3359 = vpop.f32.mrb[0].mxu0
      %3360 = vmatprep.mubr.bf16.mxu0 %v2659
      %3361 = vmatmul.mubr.bf16.gmra.mrb[0].mxu0 %v2658
      %v3362 = vpop.f32.mrb[0].mxu0
      %v3363 = vadd.f32 %v2870, %v3362
      %v3364 = vpop.f32.mrb[0].mxu0
      %v3365 = vpop.f32.mrb[0].mxu0
      %v3366 = vadd.f32 %v2870, %v3365
      %v3367 = vpop.f32.mrb[0].mxu0
      %3368 = vmatprep.mubr.bf16.mxu0 %v2668
      %3369 = vmatmul.mubr.bf16.gmra.mrb[0].mxu0 %v2667
      %v3370 = vpop.f32.mrb[0].mxu0
      %v3371 = vadd.f32 %v2870, %v3370
      %v3372 = vpop.f32.mrb[0].mxu0
      %v3373 = vpop.f32.mrb[0].mxu0
      %v3374 = vadd.f32 %v2870, %v3373
      %v3375 = vpop.f32.mrb[0].mxu0
      %3376 = vmatprep.mubr.bf16.mxu0 %v2677
      %3377 = vmatmul.mubr.bf16.gmra.mrb[0].mxu0 %v2676
      %v3378 = vpop.f32.mrb[0].mxu0
      %v3379 = vadd.f32 %v2870, %v3378
      %v3380 = vpop.f32.mrb[0].mxu0
      %v3381 = vpop.f32.mrb[0].mxu0
      %v3382 = vadd.f32 %v2870, %v3381
      %v3383 = vpop.f32.mrb[0].mxu0
      %3384 = vmatprep.mubr.bf16.mxu0 %v2686
      %3385 = vmatmul.mubr.bf16.gmra.mrb[0].mxu0 %v2685
      %v3386 = vpop.f32.mrb[0].mxu0
      %v3387 = vadd.f32 %v2870, %v3386
      %v3388 = vpop.f32.mrb[0].mxu0
      %v3389 = vpop.f32.mrb[0].mxu0
      %v3390 = vadd.f32 %v2870, %v3389
      %v3391 = vpop.f32.mrb[0].mxu0
      %3392 = vmatprep.mubr.bf16.mxu0 %v2695
      %3393 = vmatmul.mubr.bf16.gmra.mrb[0].mxu0 %v2694
      %v3394 = vpop.f32.mrb[0].mxu0
      %v3395 = vadd.f32 %v2870, %v3394
      %v3396 = vpop.f32.mrb[0].mxu0
      %v3397 = vpop.f32.mrb[0].mxu0
      %v3398 = vadd.f32 %v2870, %v3397
      %v3399 = vpop.f32.mrb[0].mxu0
      %3400 = vmatprep.mubr.bf16.mxu0 %v2704
      %3401 = vmatmul.mubr.bf16.gmra.mrb[0].mxu0 %v2703
      %v3402 = vpop.f32.mrb[0].mxu0
      %v3403 = vadd.f32 %v2870, %v3402
      %v3404 = vpop.f32.mrb[0].mxu0
      %v3405 = vpop.f32.mrb[0].mxu0
      %v3406 = vadd.f32 %v2870, %v3405
      %v3407 = vpop.f32.mrb[0].mxu0
      %3408 = vmatprep.mubr.bf16.mxu0 %v2713
      %3409 = vmatmul.mubr.bf16.gmra.mrb[0].mxu0 %v2712
      %v3410 = vpop.f32.mrb[0].mxu0
      %v3411 = vadd.f32 %v2870, %v3410
      %v3412 = vpop.f32.mrb[0].mxu0
      %v3413 = vpop.f32.mrb[0].mxu0
      %v3414 = vadd.f32 %v2870, %v3413
      %v3415 = vpop.f32.mrb[0].mxu0
      %3416 = vdwg.mxu0
      %3417 = vmatprep.subr.bf16.mxu0 0
      %3418 = vmatpush1.bf16.msra.mxu0 %v3176
      %3419 = vmatprep.subr.bf16.mxu0 0
      %3420 = vmatpush1.bf16.msra.mxu0 %v3177
      %3421 = vmatprep.subr.bf16.mxu0 0
      %3422 = vmatpush1.bf16.msra.mxu0 %v3178
      %3423 = vmatprep.subr.bf16.mxu0 0
      %3424 = vmatpush1.bf16.msra.mxu0 %v3179
      %3425 = vmatprep.subr.bf16.mxu0 0
      %3426 = vmatpush1.bf16.msra.mxu0 %v3180
      %3427 = vmatprep.subr.bf16.mxu0 0
      %3428 = vmatpush1.bf16.msra.mxu0 %v3181
      %3429 = vmatprep.subr.bf16.mxu0 0
      %3430 = vmatpush1.bf16.msra.mxu0 %v3182
      %3431 = vmatprep.subr.bf16.mxu0 0
      %3432 = vmatpush1.bf16.msra.mxu0 %v3183
      %3433 = vmatprep.subr.bf16.mxu0 0
      %3434 = vmatpush1.bf16.msra.mxu0 %v3184
      %3435 = vmatprep.subr.bf16.mxu0 0
      %3436 = vmatpush1.bf16.msra.mxu0 %v3185
      %3437 = vmatprep.subr.bf16.mxu0 0
      %3438 = vmatpush1.bf16.msra.mxu0 %v3186
      %3439 = vmatprep.subr.bf16.mxu0 0
      %3440 = vmatpush1.bf16.msra.mxu0 %v3187
      %3441 = vmatprep.subr.bf16.mxu0 0
      %3442 = vmatpush1.bf16.msra.mxu0 %v3188
      %3443 = vmatprep.subr.bf16.mxu0 0
      %3444 = vmatpush1.bf16.msra.mxu0 %v3189
      %3445 = vmatprep.subr.bf16.mxu0 0
      %3446 = vmatpush1.bf16.msra.mxu0 %v3190
      %3447 = vmatprep.subr.bf16.mxu0 0
      %3448 = vmatpush1.bf16.msra.mxu0 %v3191
      %3449 = vmatprep.mubr.bf16.mxu0 %v2634
      %3450 = vmatmul.mubr.bf16.gmra.mrb[0].mxu0 %v2633
      %v3451 = vpop.f32.mrb[0].mxu0
      %v3452 = vadd.f32 %v3339, %v3451
      %v3453 = vpop.f32.mrb[0].mxu0
      %v3454 = vpop.f32.mrb[0].mxu0
      %v3455 = vadd.f32 %v3342, %v3454
      %v3456 = vpop.f32.mrb[0].mxu0
      %3457 = vmatprep.mubr.bf16.mxu0 %v2643
      %3458 = vmatmul.mubr.bf16.gmra.mrb[0].mxu0 %v2642
      %v3459 = vpop.f32.mrb[0].mxu0
      %v3460 = vadd.f32 %v3347, %v3459
      %v3461 = vpop.f32.mrb[0].mxu0
      %v3462 = vpop.f32.mrb[0].mxu0
      %v3463 = vadd.f32 %v3350, %v3462
      %v3464 = vpop.f32.mrb[0].mxu0
      %3465 = vmatprep.mubr.bf16.mxu0 %v2652
      %3466 = vmatmul.mubr.bf16.gmra.mrb[0].mxu0 %v2651
      %v3467 = vpop.f32.mrb[0].mxu0
      %v3468 = vadd.f32 %v3355, %v3467
      %v3469 = vpop.f32.mrb[0].mxu0
      %v3470 = vpop.f32.mrb[0].mxu0
      %v3471 = vadd.f32 %v3358, %v3470
      %v3472 = vpop.f32.mrb[0].mxu0
      %3473 = vmatprep.mubr.bf16.mxu0 %v2661
      %3474 = vmatmul.mubr.bf16.gmra.mrb[0].mxu0 %v2660
      %v3475 = vpop.f32.mrb[0].mxu0
      %v3476 = vadd.f32 %v3363, %v3475
      %v3477 = vpop.f32.mrb[0].mxu0
      %v3478 = vpop.f32.mrb[0].mxu0
      %v3479 = vadd.f32 %v3366, %v3478
      %v3480 = vpop.f32.mrb[0].mxu0
      %3481 = vmatprep.mubr.bf16.mxu0 %v2670
      %3482 = vmatmul.mubr.bf16.gmra.mrb[0].mxu0 %v2669
      %v3483 = vpop.f32.mrb[0].mxu0
      %v3484 = vadd.f32 %v3371, %v3483
      %v3485 = vpop.f32.mrb[0].mxu0
      %v3486 = vpop.f32.mrb[0].mxu0
      %v3487 = vadd.f32 %v3374, %v3486
      %v3488 = vpop.f32.mrb[0].mxu0
      %3489 = vmatprep.mubr.bf16.mxu0 %v2679
      %3490 = vmatmul.mubr.bf16.gmra.mrb[0].mxu0 %v2678
      %v3491 = vpop.f32.mrb[0].mxu0
      %v3492 = vadd.f32 %v3379, %v3491
      %v3493 = vpop.f32.mrb[0].mxu0
      %v3494 = vpop.f32.mrb[0].mxu0
      %v3495 = vadd.f32 %v3382, %v3494
      %v3496 = vpop.f32.mrb[0].mxu0
      %3497 = vmatprep.mubr.bf16.mxu0 %v2688
      %3498 = vmatmul.mubr.bf16.gmra.mrb[0].mxu0 %v2687
      %v3499 = vpop.f32.mrb[0].mxu0
      %v3500 = vadd.f32 %v3387, %v3499
      %v3501 = vpop.f32.mrb[0].mxu0
      %v3502 = vpop.f32.mrb[0].mxu0
      %v3503 = vadd.f32 %v3390, %v3502
      %v3504 = vpop.f32.mrb[0].mxu0
      %3505 = vmatprep.mubr.bf16.mxu0 %v2697
      %3506 = vmatmul.mubr.bf16.gmra.mrb[0].mxu0 %v2696
      %v3507 = vpop.f32.mrb[0].mxu0
      %v3508 = vadd.f32 %v3395, %v3507
      %v3509 = vpop.f32.mrb[0].mxu0
      %v3510 = vpop.f32.mrb[0].mxu0
      %v3511 = vadd.f32 %v3398, %v3510
      %v3512 = vpop.f32.mrb[0].mxu0
      %3513 = vmatprep.mubr.bf16.mxu0 %v2706
      %3514 = vmatmul.mubr.bf16.gmra.mrb[0].mxu0 %v2705
      %v3515 = vpop.f32.mrb[0].mxu0
      %v3516 = vadd.f32 %v3403, %v3515
      %v3517 = vpop.f32.mrb[0].mxu0
      %v3518 = vpop.f32.mrb[0].mxu0
      %v3519 = vadd.f32 %v3406, %v3518
      %v3520 = vpop.f32.mrb[0].mxu0
      %3521 = vmatprep.mubr.bf16.mxu0 %v2715
      %3522 = vmatmul.mubr.bf16.gmra.mrb[0].mxu0 %v2714
      %v3523 = vpop.f32.mrb[0].mxu0
      %v3524 = vadd.f32 %v3411, %v3523
      %v3525 = vpop.f32.mrb[0].mxu0
      %v3526 = vpop.f32.mrb[0].mxu0
      %v3527 = vadd.f32 %v3414, %v3526
      %v3528 = vpop.f32.mrb[0].mxu0
      %3529 = vdwg.mxu0
      %3530 = vmatprep.subr.bf16.mxu0 0
      %3531 = vmatpush1.bf16.msra.mxu0 %v3192
      %3532 = vmatprep.subr.bf16.mxu0 0
      %3533 = vmatpush1.bf16.msra.mxu0 %v3193
      %3534 = vmatprep.subr.bf16.mxu0 0
      %3535 = vmatpush1.bf16.msra.mxu0 %v3194
      %3536 = vmatprep.subr.bf16.mxu0 0
      %3537 = vmatpush1.bf16.msra.mxu0 %v3195
      %3538 = vmatprep.subr.bf16.mxu0 0
      %3539 = vmatpush1.bf16.msra.mxu0 %v3196
      %3540 = vmatprep.subr.bf16.mxu0 0
      %3541 = vmatpush1.bf16.msra.mxu0 %v3197
      %3542 = vmatprep.subr.bf16.mxu0 0
      %3543 = vmatpush1.bf16.msra.mxu0 %v3198
      %3544 = vmatprep.subr.bf16.mxu0 0
      %3545 = vmatpush1.bf16.msra.mxu0 %v3199
      %3546 = vmatprep.subr.bf16.mxu0 0
      %3547 = vmatpush1.bf16.msra.mxu0 %v3200
      %3548 = vmatprep.subr.bf16.mxu0 0
      %3549 = vmatpush1.bf16.msra.mxu0 %v3201
      %3550 = vmatprep.subr.bf16.mxu0 0
      %3551 = vmatpush1.bf16.msra.mxu0 %v3202
      %3552 = vmatprep.subr.bf16.mxu0 0
      %3553 = vmatpush1.bf16.msra.mxu0 %v3203
      %3554 = vmatprep.subr.bf16.mxu0 0
      %3555 = vmatpush1.bf16.msra.mxu0 %v3204
      %3556 = vmatprep.subr.bf16.mxu0 0
      %3557 = vmatpush1.bf16.msra.mxu0 %v3205
      %3558 = vmatprep.subr.bf16.mxu0 0
      %3559 = vmatpush1.bf16.msra.mxu0 %v3206
      %3560 = vmatprep.subr.bf16.mxu0 0
      %3561 = vmatpush1.bf16.msra.mxu0 %v3207
      %3562 = vmatprep.mubr.bf16.mxu0 %v2636
      %3563 = vmatmul.mubr.bf16.gmra.mrb[0].mxu0 %v2635
      %v3564 = vpop.f32.mrb[0].mxu0
      %v3565 = vadd.f32 %v3452, %v3564
      %v3566 = vpop.f32.mrb[0].mxu0
      %v3567 = vpop.f32.mrb[0].mxu0
      %v3568 = vadd.f32 %v3455, %v3567
      %v3569 = vpop.f32.mrb[0].mxu0
      %3570 = vmatprep.mubr.bf16.mxu0 %v2645
      %3571 = vmatmul.mubr.bf16.gmra.mrb[0].mxu0 %v2644
      %v3572 = vpop.f32.mrb[0].mxu0
      %v3573 = vadd.f32 %v3460, %v3572
      %v3574 = vpop.f32.mrb[0].mxu0
      %v3575 = vpop.f32.mrb[0].mxu0
      %v3576 = vadd.f32 %v3463, %v3575
      %v3577 = vpop.f32.mrb[0].mxu0
      %3578 = vmatprep.mubr.bf16.mxu0 %v2654
      %3579 = vmatmul.mubr.bf16.gmra.mrb[0].mxu0 %v2653
      %v3580 = vpop.f32.mrb[0].mxu0
      %v3581 = vadd.f32 %v3468, %v3580
      %v3582 = vpop.f32.mrb[0].mxu0
      %v3583 = vpop.f32.mrb[0].mxu0
      %v3584 = vadd.f32 %v3471, %v3583
      %v3585 = vpop.f32.mrb[0].mxu0
      %3586 = vmatprep.mubr.bf16.mxu0 %v2663
      %3587 = vmatmul.mubr.bf16.gmra.mrb[0].mxu0 %v2662
      %v3588 = vpop.f32.mrb[0].mxu0
      %v3589 = vadd.f32 %v3476, %v3588
      %v3590 = vpop.f32.mrb[0].mxu0
      %v3591 = vpop.f32.mrb[0].mxu0
      %v3592 = vadd.f32 %v3479, %v3591
      %v3593 = vpop.f32.mrb[0].mxu0
      %3594 = vmatprep.mubr.bf16.mxu0 %v2672
      %3595 = vmatmul.mubr.bf16.gmra.mrb[0].mxu0 %v2671
      %v3596 = vpop.f32.mrb[0].mxu0
      %v3597 = vadd.f32 %v3484, %v3596
      %v3598 = vpop.f32.mrb[0].mxu0
      %v3599 = vpop.f32.mrb[0].mxu0
      %v3600 = vadd.f32 %v3487, %v3599
      %v3601 = vpop.f32.mrb[0].mxu0
      %3602 = vmatprep.mubr.bf16.mxu0 %v2681
      %3603 = vmatmul.mubr.bf16.gmra.mrb[0].mxu0 %v2680
      %v3604 = vpop.f32.mrb[0].mxu0
      %v3605 = vadd.f32 %v3492, %v3604
      %v3606 = vpop.f32.mrb[0].mxu0
      %v3607 = vpop.f32.mrb[0].mxu0
      %v3608 = vadd.f32 %v3495, %v3607
      %v3609 = vpop.f32.mrb[0].mxu0
      %3610 = vmatprep.mubr.bf16.mxu0 %v2690
      %3611 = vmatmul.mubr.bf16.gmra.mrb[0].mxu0 %v2689
      %v3612 = vpop.f32.mrb[0].mxu0
      %v3613 = vadd.f32 %v3500, %v3612
      %v3614 = vpop.f32.mrb[0].mxu0
      %v3615 = vpop.f32.mrb[0].mxu0
      %v3616 = vadd.f32 %v3503, %v3615
      %v3617 = vpop.f32.mrb[0].mxu0
      %3618 = vmatprep.mubr.bf16.mxu0 %v2699
      %3619 = vmatmul.mubr.bf16.gmra.mrb[0].mxu0 %v2698
      %v3620 = vpop.f32.mrb[0].mxu0
      %v3621 = vadd.f32 %v3508, %v3620
      %v3622 = vpop.f32.mrb[0].mxu0
      %v3623 = vpop.f32.mrb[0].mxu0
      %v3624 = vadd.f32 %v3511, %v3623
      %v3625 = vpop.f32.mrb[0].mxu0
      %3626 = vmatprep.mubr.bf16.mxu0 %v2708
      %3627 = vmatmul.mubr.bf16.gmra.mrb[0].mxu0 %v2707
      %v3628 = vpop.f32.mrb[0].mxu0
      %v3629 = vadd.f32 %v3516, %v3628
      %v3630 = vpop.f32.mrb[0].mxu0
      %v3631 = vpop.f32.mrb[0].mxu0
      %v3632 = vadd.f32 %v3519, %v3631
      %v3633 = vpop.f32.mrb[0].mxu0
      %3634 = vmatprep.mubr.bf16.mxu0 %v2717
      %3635 = vmatmul.mubr.bf16.gmra.mrb[0].mxu0 %v2716
      %v3636 = vpop.f32.mrb[0].mxu0
      %v3637 = vadd.f32 %v3524, %v3636
      %v3638 = vpop.f32.mrb[0].mxu0
      %v3639 = vpop.f32.mrb[0].mxu0
      %v3640 = vadd.f32 %v3527, %v3639
      %v3641 = vpop.f32.mrb[0].mxu0
      %3642 = vdwg.mxu0
      %3643 = vmatprep.subr.bf16.mxu0 0
      %3644 = vmatpush1.bf16.msra.mxu0 %v3208
      %3645 = vmatprep.subr.bf16.mxu0 0
      %3646 = vmatpush1.bf16.msra.mxu0 %v3209
      %3647 = vmatprep.subr.bf16.mxu0 0
      %3648 = vmatpush1.bf16.msra.mxu0 %v3210
      %3649 = vmatprep.subr.bf16.mxu0 0
      %3650 = vmatpush1.bf16.msra.mxu0 %v3211
      %3651 = vmatprep.subr.bf16.mxu0 0
      %3652 = vmatpush1.bf16.msra.mxu0 %v3212
      %3653 = vmatprep.subr.bf16.mxu0 0
      %3654 = vmatpush1.bf16.msra.mxu0 %v3213
      %3655 = vmatprep.subr.bf16.mxu0 0
      %3656 = vmatpush1.bf16.msra.mxu0 %v3214
      %3657 = vmatprep.subr.bf16.mxu0 0
      %3658 = vmatpush1.bf16.msra.mxu0 %v3215
      %3659 = vmatprep.subr.bf16.mxu0 0
      %3660 = vmatpush1.bf16.msra.mxu0 %v3216
      %3661 = vmatprep.subr.bf16.mxu0 0
      %3662 = vmatpush1.bf16.msra.mxu0 %v3217
      %3663 = vmatprep.subr.bf16.mxu0 0
      %3664 = vmatpush1.bf16.msra.mxu0 %v3218
      %3665 = vmatprep.subr.bf16.mxu0 0
      %3666 = vmatpush1.bf16.msra.mxu0 %v3219
      %3667 = vmatprep.subr.bf16.mxu0 0
      %3668 = vmatpush1.bf16.msra.mxu0 %v3220
      %3669 = vmatprep.subr.bf16.mxu0 0
      %3670 = vmatpush1.bf16.msra.mxu0 %v3221
      %3671 = vmatprep.subr.bf16.mxu0 0
      %3672 = vmatpush1.bf16.msra.mxu0 %v3222
      %3673 = vmatprep.subr.bf16.mxu0 0
      %3674 = vmatpush1.bf16.msra.mxu0 %v3223
      %3675 = vmatprep.mubr.bf16.mxu0 %v2638
      %3676 = vmatmul.mubr.bf16.gmra.mrb[0].mxu0 %v2637
      %v3677 = vpop.f32.mrb[0].mxu0
      %v3678 = vadd.f32 %v3565, %v3677
      %v3679 = vpop.f32.mrb[0].mxu0
      %v3680 = vpop.f32.mrb[0].mxu0
      %v3681 = vadd.f32 %v3568, %v3680
      %v3682 = vpop.f32.mrb[0].mxu0
      %3683 = vmatprep.mubr.bf16.mxu0 %v2647
      %3684 = vmatmul.mubr.bf16.gmra.mrb[0].mxu0 %v2646
      %v3685 = vpop.f32.mrb[0].mxu0
      %v3686 = vadd.f32 %v3573, %v3685
      %v3687 = vpop.f32.mrb[0].mxu0
      %v3688 = vpop.f32.mrb[0].mxu0
      %v3689 = vadd.f32 %v3576, %v3688
      %v3690 = vpop.f32.mrb[0].mxu0
      %3691 = vmatprep.mubr.bf16.mxu0 %v2656
      %3692 = vmatmul.mubr.bf16.gmra.mrb[0].mxu0 %v2655
      %v3693 = vpop.f32.mrb[0].mxu0
      %v3694 = vadd.f32 %v3581, %v3693
      %v3695 = vpop.f32.mrb[0].mxu0
      %v3696 = vpop.f32.mrb[0].mxu0
      %v3697 = vadd.f32 %v3584, %v3696
      %v3698 = vpop.f32.mrb[0].mxu0
      %3699 = vmatprep.mubr.bf16.mxu0 %v2665
      %3700 = vmatmul.mubr.bf16.gmra.mrb[0].mxu0 %v2664
      %v3701 = vpop.f32.mrb[0].mxu0
      %v3702 = vadd.f32 %v3589, %v3701
      %v3703 = vpop.f32.mrb[0].mxu0
      %v3704 = vpop.f32.mrb[0].mxu0
      %v3705 = vadd.f32 %v3592, %v3704
      %v3706 = vpop.f32.mrb[0].mxu0
      %3707 = vmatprep.mubr.bf16.mxu0 %v2674
      %3708 = vmatmul.mubr.bf16.gmra.mrb[0].mxu0 %v2673
      %v3709 = vpop.f32.mrb[0].mxu0
      %v3710 = vadd.f32 %v3597, %v3709
      %v3711 = vpop.f32.mrb[0].mxu0
      %v3712 = vpop.f32.mrb[0].mxu0
      %v3713 = vadd.f32 %v3600, %v3712
      %v3714 = vpop.f32.mrb[0].mxu0
      %3715 = vmatprep.mubr.bf16.mxu0 %v2683
      %3716 = vmatmul.mubr.bf16.gmra.mrb[0].mxu0 %v2682
      %v3717 = vpop.f32.mrb[0].mxu0
      %v3718 = vadd.f32 %v3605, %v3717
      %v3719 = vpop.f32.mrb[0].mxu0
      %v3720 = vpop.f32.mrb[0].mxu0
      %v3721 = vadd.f32 %v3608, %v3720
      %v3722 = vpop.f32.mrb[0].mxu0
      %3723 = vmatprep.mubr.bf16.mxu0 %v2692
      %3724 = vmatmul.mubr.bf16.gmra.mrb[0].mxu0 %v2691
      %v3725 = vpop.f32.mrb[0].mxu0
      %v3726 = vadd.f32 %v3613, %v3725
      %v3727 = vpop.f32.mrb[0].mxu0
      %v3728 = vpop.f32.mrb[0].mxu0
      %v3729 = vadd.f32 %v3616, %v3728
      %v3730 = vpop.f32.mrb[0].mxu0
      %3731 = vmatprep.mubr.bf16.mxu0 %v2701
      %3732 = vmatmul.mubr.bf16.gmra.mrb[0].mxu0 %v2700
      %v3733 = vpop.f32.mrb[0].mxu0
      %v3734 = vadd.f32 %v3621, %v3733
      %v3735 = vpop.f32.mrb[0].mxu0
      %v3736 = vpop.f32.mrb[0].mxu0
      %v3737 = vadd.f32 %v3624, %v3736
      %v3738 = vpop.f32.mrb[0].mxu0
      %3739 = vmatprep.mubr.bf16.mxu0 %v2710
      %3740 = vmatmul.mubr.bf16.gmra.mrb[0].mxu0 %v2709
      %v3741 = vpop.f32.mrb[0].mxu0
      %v3742 = vadd.f32 %v3629, %v3741
      %v3743 = vpop.f32.mrb[0].mxu0
      %v3744 = vpop.f32.mrb[0].mxu0
      %v3745 = vadd.f32 %v3632, %v3744
      %v3746 = vpop.f32.mrb[0].mxu0
      %3747 = vmatprep.mubr.bf16.mxu0 %v2719
      %3748 = vmatmul.mubr.bf16.gmra.mrb[0].mxu0 %v2718
      %v3749 = vpop.f32.mrb[0].mxu0
      %v3750 = vadd.f32 %v3637, %v3749
      %v3751 = vpop.f32.mrb[0].mxu0
      %v3752 = vpop.f32.mrb[0].mxu0
      %v3753 = vadd.f32 %v3640, %v3752
      %v3754 = vpop.f32.mrb[0].mxu0
      %3755 = vdwg.mxu0
      %3756 = vmatprep.subr.bf16.mxu0 0
      %3757 = vmatpush1.bf16.msra.mxu0 %v3224
      %3758 = vmatprep.subr.bf16.mxu0 0
      %3759 = vmatpush1.bf16.msra.mxu0 %v3225
      %3760 = vmatprep.subr.bf16.mxu0 0
      %3761 = vmatpush1.bf16.msra.mxu0 %v3226
      %3762 = vmatprep.subr.bf16.mxu0 0
      %3763 = vmatpush1.bf16.msra.mxu0 %v3227
      %3764 = vmatprep.subr.bf16.mxu0 0
      %3765 = vmatpush1.bf16.msra.mxu0 %v3228
      %3766 = vmatprep.subr.bf16.mxu0 0
      %3767 = vmatpush1.bf16.msra.mxu0 %v3229
      %3768 = vmatprep.subr.bf16.mxu0 0
      %3769 = vmatpush1.bf16.msra.mxu0 %v3230
      %3770 = vmatprep.subr.bf16.mxu0 0
      %3771 = vmatpush1.bf16.msra.mxu0 %v3231
      %3772 = vmatprep.subr.bf16.mxu0 0
      %3773 = vmatpush1.bf16.msra.mxu0 0
      %3774 = vmatprep.subr.bf16.mxu0 0
      %3775 = vmatpush1.bf16.msra.mxu0 0
      %3776 = vmatprep.subr.bf16.mxu0 0
      %3777 = vmatpush1.bf16.msra.mxu0 0
      %3778 = vmatprep.subr.bf16.mxu0 0
      %3779 = vmatpush1.bf16.msra.mxu0 0
      %3780 = vmatprep.subr.bf16.mxu0 0
      %3781 = vmatpush1.bf16.msra.mxu0 0
      %3782 = vmatprep.subr.bf16.mxu0 0
      %3783 = vmatpush1.bf16.msra.mxu0 0
      %3784 = vmatprep.subr.bf16.mxu0 0
      %3785 = vmatpush1.bf16.msra.mxu0 0
      %3786 = vmatprep.subr.bf16.mxu0 0
      %3787 = vmatpush1.bf16.msra.mxu0 0
      %3788 = vmatprep.mubr.bf16.mxu0 0
      %3789 = vmatmul.mubr.bf16.gmra.mrb[0].mxu0 %v2639
      %v3790 = vpop.f32.mrb[0].mxu0
      %v3791 = vadd.f32 %v3678, %v3790
      %v3792 = vpop.f32.mrb[0].mxu0
      %v3793 = vpop.f32.mrb[0].mxu0
      %v3794 = vadd.f32 %v3681, %v3793
      %v3795 = vpop.f32.mrb[0].mxu0
      %3796 = vmatprep.mubr.bf16.mxu0 0
      %3797 = vmatmul.mubr.bf16.gmra.mrb[0].mxu0 %v2648
      %v3798 = vpop.f32.mrb[0].mxu0
      %v3799 = vadd.f32 %v3686, %v3798
      %v3800 = vpop.f32.mrb[0].mxu0
      %v3801 = vpop.f32.mrb[0].mxu0
      %v3802 = vadd.f32 %v3689, %v3801
      %v3803 = vpop.f32.mrb[0].mxu0
      %3804 = vmatprep.mubr.bf16.mxu0 0
      %3805 = vmatmul.mubr.bf16.gmra.mrb[0].mxu0 %v2657
      %v3806 = vpop.f32.mrb[0].mxu0
      %v3807 = vadd.f32 %v3694, %v3806
      %v3808 = vpop.f32.mrb[0].mxu0
      %v3809 = vpop.f32.mrb[0].mxu0
      %v3810 = vadd.f32 %v3697, %v3809
      %v3811 = vpop.f32.mrb[0].mxu0
      %3812 = vmatprep.mubr.bf16.mxu0 0
      %3813 = vmatmul.mubr.bf16.gmra.mrb[0].mxu0 %v2666
      %v3814 = vpop.f32.mrb[0].mxu0
      %v3815 = vadd.f32 %v3702, %v3814
      %v3816 = vpop.f32.mrb[0].mxu0
      %v3817 = vpop.f32.mrb[0].mxu0
      %v3818 = vadd.f32 %v3705, %v3817
      %v3819 = vpop.f32.mrb[0].mxu0
      %3820 = vmatprep.mubr.bf16.mxu0 0
      %3821 = vmatmul.mubr.bf16.gmra.mrb[0].mxu0 %v2675
      %v3822 = vpop.f32.mrb[0].mxu0
      %v3823 = vadd.f32 %v3710, %v3822
      %v3824 = vpop.f32.mrb[0].mxu0
      %v3825 = vpop.f32.mrb[0].mxu0
      %v3826 = vadd.f32 %v3713, %v3825
      %v3827 = vpop.f32.mrb[0].mxu0
      %3828 = vmatprep.mubr.bf16.mxu0 0
      %3829 = vmatmul.mubr.bf16.gmra.mrb[0].mxu0 %v2684
      %v3830 = vpop.f32.mrb[0].mxu0
      %v3831 = vadd.f32 %v3718, %v3830
      %v3832 = vpop.f32.mrb[0].mxu0
      %v3833 = vpop.f32.mrb[0].mxu0
      %v3834 = vadd.f32 %v3721, %v3833
      %v3835 = vpop.f32.mrb[0].mxu0
      %3836 = vmatprep.mubr.bf16.mxu0 0
      %3837 = vmatmul.mubr.bf16.gmra.mrb[0].mxu0 %v2693
      %v3838 = vpop.f32.mrb[0].mxu0
      %v3839 = vadd.f32 %v3726, %v3838
      %v3840 = vpop.f32.mrb[0].mxu0
      %v3841 = vpop.f32.mrb[0].mxu0
      %v3842 = vadd.f32 %v3729, %v3841
      %v3843 = vpop.f32.mrb[0].mxu0
      %3844 = vmatprep.mubr.bf16.mxu0 0
      %3845 = vmatmul.mubr.bf16.gmra.mrb[0].mxu0 %v2702
      %v3846 = vpop.f32.mrb[0].mxu0
      %v3847 = vadd.f32 %v3734, %v3846
      %v3848 = vpop.f32.mrb[0].mxu0
      %v3849 = vpop.f32.mrb[0].mxu0
      %v3850 = vadd.f32 %v3737, %v3849
      %v3851 = vpop.f32.mrb[0].mxu0
      %3852 = vmatprep.mubr.bf16.mxu0 0
      %3853 = vmatmul.mubr.bf16.gmra.mrb[0].mxu0 %v2711
      %v3854 = vpop.f32.mrb[0].mxu0
      %v3855 = vadd.f32 %v3742, %v3854
      %v3856 = vpop.f32.mrb[0].mxu0
      %v3857 = vpop.f32.mrb[0].mxu0
      %v3858 = vadd.f32 %v3745, %v3857
      %v3859 = vpop.f32.mrb[0].mxu0
      %3860 = vmatprep.mubr.bf16.mxu0 0
      %3861 = vmatmul.mubr.bf16.gmra.mrb[0].mxu0 %v2720
      %v3862 = vpop.f32.mrb[0].mxu0
      %v3863 = vadd.f32 %v3750, %v3862
      %v3864 = vpop.f32.mrb[0].mxu0
      %v3865 = vpop.f32.mrb[0].mxu0
      %v3866 = vadd.f32 %v3753, %v3865
      %v3867 = vpop.f32.mrb[0].mxu0
      %3868 = vdwg.mxu0
      %v3869 = vmax.f32 %v3791, 0.0
      %v3870 = vmax.f32 %v3794, 0.0
      %v3871 = vmax.f32 %v3799, 0.0
      %v3872 = vmax.f32 %v3802, 0.0
      %v3873 = vmax.f32 %v3807, 0.0
      %v3874 = vmax.f32 %v3810, 0.0
      %v3875 = vmax.f32 %v3815, 0.0
      %v3876 = vmax.f32 %v3818, 0.0
      %v3877 = vmax.f32 %v3823, 0.0
      %v3878 = vmax.f32 %v3826, 0.0
      %v3879 = vmax.f32 %v3831, 0.0
      %v3880 = vmax.f32 %v3834, 0.0
      %v3881 = vmax.f32 %v3839, 0.0
      %v3882 = vmax.f32 %v3842, 0.0
      %v3883 = vmax.f32 %v3847, 0.0
      %v3884 = vmax.f32 %v3850, 0.0
      %v3885 = vmax.f32 %v3855, 0.0
      %v3886 = vmax.f32 %v3858, 0.0
      %v3887 = vmax.f32 %v3863, 0.0
      %v3888 = vmax.f32 %v3866, 0.0
      %3889 = vst.msk [vmem:[#allocation3 + $0x8] sm:$0xff] %vm572, %v3869
      %3890 = vst.msk [vmem:[#allocation3 + $0x10] sm:$0xff] %vm572, %v3870
      %3891 = vst.msk [vmem:[#allocation3 + $0x28] sm:$0xff] %vm572, %v3871
      %3892 = vst.msk [vmem:[#allocation3 + $0x30] sm:$0xff] %vm572, %v3872
      %3893 = vst.msk [vmem:[#allocation3 + $0x48] sm:$0xff] %vm572, %v3873
      %3894 = vst.msk [vmem:[#allocation3 + $0x50] sm:$0xff] %vm572, %v3874
      %3895 = vst.msk [vmem:[#allocation3 + $0x68] sm:$0xff] %vm572, %v3875
      %3896 = vst.msk [vmem:[#allocation3 + $0x70] sm:$0xff] %vm572, %v3876
      %3897 = vst.msk [vmem:[#allocation3 + $0x88] sm:$0xff] %vm572, %v3877
      %3898 = vst.msk [vmem:[#allocation3 + $0x90] sm:$0xff] %vm572, %v3878
      %3899 = vst.msk [vmem:[#allocation3 + $0xa8] sm:$0xff] %vm572, %v3879
      %3900 = vst.msk [vmem:[#allocation3 + $0xb0] sm:$0xff] %vm572, %v3880
      %3901 = vst.msk [vmem:[#allocation3 + $0xc8] sm:$0xff] %vm572, %v3881
      %3902 = vst.msk [vmem:[#allocation3 + $0xd0] sm:$0xff] %vm572, %v3882
      %3903 = vst.msk [vmem:[#allocation3 + $0xe8] sm:$0xff] %vm572, %v3883
      %3904 = vst.msk [vmem:[#allocation3 + $0xf0] sm:$0xff] %vm572, %v3884
      %3905 = vst.msk [vmem:[#allocation3 + $0x108] sm:$0xff] %vm572, %v3885
      %3906 = vst.msk [vmem:[#allocation3 + $0x110] sm:$0xff] %vm572, %v3886
      %3907 = vst.msk [vmem:[#allocation3 + $0x128] sm:$0xff] %vm572, %v3887
      %3908 = vst.msk [vmem:[#allocation3 + $0x130] sm:$0xff] %vm572, %v3888
      %p3909 = scmp.eq.s32.totalorder %s24, 0
      // Predicated region
      $region53: #{tpu_custom_call.1} parent=51 // pred_check
        %p3910 = pneg %p3909
      $region54: #{tpu_custom_call.1} parent=51 // pred_check_branch
        %3912 = sbr.rel (%p3910) target = $region56
      $region55: #{tpu_custom_call.1} parent=51 // pred_region
        %3913 = vst.msk [vmem:[#allocation3] sm:$0xff] %vm572, 0.0
        %3914 = vst.msk [vmem:[#allocation3 + $0x8] sm:$0xff] %vm572, 0.0
        %3915 = vst.msk [vmem:[#allocation3 + $0x10] sm:$0xff] %vm572, 0.0
        %3916 = vst.msk [vmem:[#allocation3 + $0x18] sm:$0xff] %vm572, 0.0
      $region56: #{tpu_custom_call.1} parent=51 // pred_fallthru
        _
      %p3917 = scmp.eq.s32.totalorder %s24, 1
      // Predicated region
      $region57: #{tpu_custom_call.1} parent=51 // pred_check
        %p3918 = pneg %p3917
      $region58: #{tpu_custom_call.1} parent=51 // pred_check_branch
        %3920 = sbr.rel (%p3918) target = $region60
      $region59: #{tpu_custom_call.1} parent=51 // pred_region
        %s3921 = scalar_lea.vmem [#allocation3], 288
        %3922 = vst.msk [vmem:[%s3921] sm:$0xff] %vm572, 0.0
        %3923 = vst.msk [vmem:[%s3921 + $0x8] sm:$0xff] %vm572, 0.0
        %3924 = vst.msk [vmem:[%s3921 + $0x10] sm:$0xff] %vm572, 0.0
        %3925 = vst.msk [vmem:[%s3921 + $0x18] sm:$0xff] %vm572, 0.0
      $region60: #{tpu_custom_call.1} parent=51 // pred_fallthru
        _
      %v3926 = vld [vmem:[#allocation3 + $0x7] sm:$0xff]
      %v3927 = vld [vmem:[#allocation3 + $0xf] sm:$0xff]
      %v3928 = vld [vmem:[#allocation3 + $0x27] sm:$0xff]
      %v3929 = vld [vmem:[#allocation3 + $0x2f] sm:$0xff]
      %v3930 = vld [vmem:[#allocation3 + $0x47] sm:$0xff]
      %v3931 = vld [vmem:[#allocation3 + $0x4f] sm:$0xff]
      %v3932 = vld [vmem:[#allocation3 + $0x67] sm:$0xff]
      %v3933 = vld [vmem:[#allocation3 + $0x6f] sm:$0xff]
      %v3934 = vld [vmem:[#allocation3 + $0x87] sm:$0xff]
      %v3935 = vld [vmem:[#allocation3 + $0x8f] sm:$0xff]
      %v3936 = vld [vmem:[#allocation3 + $0xa7] sm:$0xff]
      %v3937 = vld [vmem:[#allocation3 + $0xaf] sm:$0xff]
      %v3938 = vld [vmem:[#allocation3 + $0xc7] sm:$0xff]
      %v3939 = vld [vmem:[#allocation3 + $0xcf] sm:$0xff]
      %v3940 = vld [vmem:[#allocation3 + $0xe7] sm:$0xff]
      %v3941 = vld [vmem:[#allocation3 + $0xef] sm:$0xff]
      %v3942 = vpack.c.bf16 %v3927, %v3926
      %v3943 = vpack.c.bf16 %v3929, %v3928
      %v3944 = vpack.c.bf16 %v3931, %v3930
      %v3945 = vpack.c.bf16 %v3933, %v3932
      %v3946 = vpack.c.bf16 %v3935, %v3934
      %v3947 = vpack.c.bf16 %v3937, %v3936
      %v3948 = vpack.c.bf16 %v3939, %v3938
      %v3949 = vpack.c.bf16 %v3941, %v3940
      %v3951 = vsel %vm572, %v3942, 0
      %v3954 = vsel %vm572, %v3943, 0
      %v3957 = vsel %vm572, %v3944, 0
      %v3960 = vsel %vm572, %v3945, 0
      %v3963 = vsel %vm572, %v3946, 0
      %v3966 = vsel %vm572, %v3947, 0
      %v3969 = vsel %vm572, %v3948, 0
      %v3972 = vsel %vm572, %v3949, 0
      %3974 = vst [vmem:[#allocation4] sm:$0xff] %v3951
      %3975 = vst [vmem:[#allocation4 + $0x48] sm:$0xff] %v3954
      %3976 = vst [vmem:[#allocation4 + $0x90] sm:$0xff] %v3957
      %3977 = vst [vmem:[#allocation4 + $0xd8] sm:$0xff] %v3960
      %3978 = vst [vmem:[#allocation4 + $0x120] sm:$0xff] %v3963
      %3979 = vst [vmem:[#allocation4 + $0x168] sm:$0xff] %v3966
      %3980 = vst [vmem:[#allocation4 + $0x1b0] sm:$0xff] %v3969
      %3981 = vst [vmem:[#allocation4 + $0x1f8] sm:$0xff] %v3972
      %v3982 = vld [vmem:[#allocation3 + $0x8] sm:$0xff]
      %v3983 = vld [vmem:[#allocation3 + $0x10] sm:$0xff]
      %v3984 = vld [vmem:[#allocation3 + $0x28] sm:$0xff]
      %v3985 = vld [vmem:[#allocation3 + $0x30] sm:$0xff]
      %v3986 = vld [vmem:[#allocation3 + $0x48] sm:$0xff]
      %v3987 = vld [vmem:[#allocation3 + $0x50] sm:$0xff]
      %v3988 = vld [vmem:[#allocation3 + $0x68] sm:$0xff]
      %v3989 = vld [vmem:[#allocation3 + $0x70] sm:$0xff]
      %v3990 = vld [vmem:[#allocation3 + $0x88] sm:$0xff]
      %v3991 = vld [vmem:[#allocation3 + $0x90] sm:$0xff]
      %v3992 = vld [vmem:[#allocation3 + $0xa8] sm:$0xff]
      %v3993 = vld [vmem:[#allocation3 + $0xb0] sm:$0xff]
      %v3994 = vld [vmem:[#allocation3 + $0xc8] sm:$0xff]
      %v3995 = vld [vmem:[#allocation3 + $0xd0] sm:$0xff]
      %v3996 = vld [vmem:[#allocation3 + $0xe8] sm:$0xff]
      %v3997 = vld [vmem:[#allocation3 + $0xf0] sm:$0xff]
      %v3998 = vpack.c.bf16 %v3983, %v3982
      %v3999 = vpack.c.bf16 %v3985, %v3984
      %v4000 = vpack.c.bf16 %v3987, %v3986
      %v4001 = vpack.c.bf16 %v3989, %v3988
      %v4002 = vpack.c.bf16 %v3991, %v3990
      %v4003 = vpack.c.bf16 %v3993, %v3992
      %v4004 = vpack.c.bf16 %v3995, %v3994
      %v4005 = vpack.c.bf16 %v3997, %v3996
      %v4007 = vsel %vm572, %v3998, 0
      %v4010 = vsel %vm572, %v3999, 0
      %v4013 = vsel %vm572, %v4000, 0
      %v4016 = vsel %vm572, %v4001, 0
      %v4019 = vsel %vm572, %v4002, 0
      %v4022 = vsel %vm572, %v4003, 0
      %v4025 = vsel %vm572, %v4004, 0
      %v4028 = vsel %vm572, %v4005, 0
      %4030 = vst [vmem:[#allocation4 + $0x8] sm:$0xff] %v4007
      %4031 = vst [vmem:[#allocation4 + $0x50] sm:$0xff] %v4010
      %4032 = vst [vmem:[#allocation4 + $0x98] sm:$0xff] %v4013
      %4033 = vst [vmem:[#allocation4 + $0xe0] sm:$0xff] %v4016
      %4034 = vst [vmem:[#allocation4 + $0x128] sm:$0xff] %v4019
      %4035 = vst [vmem:[#allocation4 + $0x170] sm:$0xff] %v4022
      %4036 = vst [vmem:[#allocation4 + $0x1b8] sm:$0xff] %v4025
      %4037 = vst [vmem:[#allocation4 + $0x200] sm:$0xff] %v4028
      %v4038 = vld [vmem:[#allocation3 + $0x9] sm:$0xff]
      %v4039 = vld [vmem:[#allocation3 + $0x11] sm:$0xff]
      %v4040 = vld [vmem:[#allocation3 + $0x29] sm:$0xff]
      %v4041 = vld [vmem:[#allocation3 + $0x31] sm:$0xff]
      %v4042 = vld [vmem:[#allocation3 + $0x49] sm:$0xff]
      %v4043 = vld [vmem:[#allocation3 + $0x51] sm:$0xff]
      %v4044 = vld [vmem:[#allocation3 + $0x69] sm:$0xff]
      %v4045 = vld [vmem:[#allocation3 + $0x71] sm:$0xff]
      %v4046 = vld [vmem:[#allocation3 + $0x89] sm:$0xff]
      %v4047 = vld [vmem:[#allocation3 + $0x91] sm:$0xff]
      %v4048 = vld [vmem:[#allocation3 + $0xa9] sm:$0xff]
      %v4049 = vld [vmem:[#allocation3 + $0xb1] sm:$0xff]
      %v4050 = vld [vmem:[#allocation3 + $0xc9] sm:$0xff]
      %v4051 = vld [vmem:[#allocation3 + $0xd1] sm:$0xff]
      %v4052 = vld [vmem:[#allocation3 + $0xe9] sm:$0xff]
      %v4053 = vld [vmem:[#allocation3 + $0xf1] sm:$0xff]
      %v4054 = vpack.c.bf16 %v4039, %v4038
      %v4055 = vpack.c.bf16 %v4041, %v4040
      %v4056 = vpack.c.bf16 %v4043, %v4042
      %v4057 = vpack.c.bf16 %v4045, %v4044
      %v4058 = vpack.c.bf16 %v4047, %v4046
      %v4059 = vpack.c.bf16 %v4049, %v4048
      %v4060 = vpack.c.bf16 %v4051, %v4050
      %v4061 = vpack.c.bf16 %v4053, %v4052
      %v4063 = vsel %vm572, %v4054, 0
      %v4066 = vsel %vm572, %v4055, 0
      %v4069 = vsel %vm572, %v4056, 0
      %v4072 = vsel %vm572, %v4057, 0
      %v4075 = vsel %vm572, %v4058, 0
      %v4078 = vsel %vm572, %v4059, 0
      %v4081 = vsel %vm572, %v4060, 0
      %v4084 = vsel %vm572, %v4061, 0
      %4086 = vst [vmem:[#allocation4 + $0x10] sm:$0xff] %v4063
      %4087 = vst [vmem:[#allocation4 + $0x58] sm:$0xff] %v4066
      %4088 = vst [vmem:[#allocation4 + $0xa0] sm:$0xff] %v4069
      %4089 = vst [vmem:[#allocation4 + $0xe8] sm:$0xff] %v4072
      %4090 = vst [vmem:[#allocation4 + $0x130] sm:$0xff] %v4075
      %4091 = vst [vmem:[#allocation4 + $0x178] sm:$0xff] %v4078
      %4092 = vst [vmem:[#allocation4 + $0x1c0] sm:$0xff] %v4081
      %4093 = vst [vmem:[#allocation4 + $0x208] sm:$0xff] %v4084
      %s4094 = scalar_lea.vmem [#allocation3], 32
      %v4095 = vld [vmem:[%s4094 + $0x7] sm:$0xff]
      %v4096 = vld [vmem:[%s4094 + $0xf] sm:$0xff]
      %v4097 = vld [vmem:[%s4094 + $0x27] sm:$0xff]
      %v4098 = vld [vmem:[%s4094 + $0x2f] sm:$0xff]
      %v4099 = vld [vmem:[%s4094 + $0x47] sm:$0xff]
      %v4100 = vld [vmem:[%s4094 + $0x4f] sm:$0xff]
      %v4101 = vld [vmem:[%s4094 + $0x67] sm:$0xff]
      %v4102 = vld [vmem:[%s4094 + $0x6f] sm:$0xff]
      %v4103 = vld [vmem:[%s4094 + $0x87] sm:$0xff]
      %v4104 = vld [vmem:[%s4094 + $0x8f] sm:$0xff]
      %v4105 = vld [vmem:[%s4094 + $0xa7] sm:$0xff]
      %v4106 = vld [vmem:[%s4094 + $0xaf] sm:$0xff]
      %v4107 = vld [vmem:[%s4094 + $0xc7] sm:$0xff]
      %v4108 = vld [vmem:[%s4094 + $0xcf] sm:$0xff]
      %v4109 = vld [vmem:[%s4094 + $0xe7] sm:$0xff]
      %v4110 = vld [vmem:[%s4094 + $0xef] sm:$0xff]
      %v4111 = vpack.c.bf16 %v4096, %v4095
      %v4112 = vpack.c.bf16 %v4098, %v4097
      %v4113 = vpack.c.bf16 %v4100, %v4099
      %v4114 = vpack.c.bf16 %v4102, %v4101
      %v4115 = vpack.c.bf16 %v4104, %v4103
      %v4116 = vpack.c.bf16 %v4106, %v4105
      %v4117 = vpack.c.bf16 %v4108, %v4107
      %v4118 = vpack.c.bf16 %v4110, %v4109
      %v4120 = vsel %vm572, %v4111, 0
      %v4123 = vsel %vm572, %v4112, 0
      %v4126 = vsel %vm572, %v4113, 0
      %v4129 = vsel %vm572, %v4114, 0
      %v4132 = vsel %vm572, %v4115, 0
      %v4135 = vsel %vm572, %v4116, 0
      %v4138 = vsel %vm572, %v4117, 0
      %v4141 = vsel %vm572, %v4118, 0
      %4143 = vst [vmem:[#allocation4 + $0x18] sm:$0xff] %v4120
      %4144 = vst [vmem:[#allocation4 + $0x60] sm:$0xff] %v4123
      %4145 = vst [vmem:[#allocation4 + $0xa8] sm:$0xff] %v4126
      %4146 = vst [vmem:[#allocation4 + $0xf0] sm:$0xff] %v4129
      %4147 = vst [vmem:[#allocation4 + $0x138] sm:$0xff] %v4132
      %4148 = vst [vmem:[#allocation4 + $0x180] sm:$0xff] %v4135
      %4149 = vst [vmem:[#allocation4 + $0x1c8] sm:$0xff] %v4138
      %4150 = vst [vmem:[#allocation4 + $0x210] sm:$0xff] %v4141
      %v4151 = vld [vmem:[%s4094 + $0x8] sm:$0xff]
      %v4152 = vld [vmem:[%s4094 + $0x10] sm:$0xff]
      %v4153 = vld [vmem:[%s4094 + $0x28] sm:$0xff]
      %v4154 = vld [vmem:[%s4094 + $0x30] sm:$0xff]
      %v4155 = vld [vmem:[%s4094 + $0x48] sm:$0xff]
      %v4156 = vld [vmem:[%s4094 + $0x50] sm:$0xff]
      %v4157 = vld [vmem:[%s4094 + $0x68] sm:$0xff]
      %v4158 = vld [vmem:[%s4094 + $0x70] sm:$0xff]
      %v4159 = vld [vmem:[%s4094 + $0x88] sm:$0xff]
      %v4160 = vld [vmem:[%s4094 + $0x90] sm:$0xff]
      %v4161 = vld [vmem:[%s4094 + $0xa8] sm:$0xff]
      %v4162 = vld [vmem:[%s4094 + $0xb0] sm:$0xff]
      %v4163 = vld [vmem:[%s4094 + $0xc8] sm:$0xff]
      %v4164 = vld [vmem:[%s4094 + $0xd0] sm:$0xff]
      %v4165 = vld [vmem:[%s4094 + $0xe8] sm:$0xff]
      %v4166 = vld [vmem:[%s4094 + $0xf0] sm:$0xff]
      %v4167 = vpack.c.bf16 %v4152, %v4151
      %v4168 = vpack.c.bf16 %v4154, %v4153
      %v4169 = vpack.c.bf16 %v4156, %v4155
      %v4170 = vpack.c.bf16 %v4158, %v4157
      %v4171 = vpack.c.bf16 %v4160, %v4159
      %v4172 = vpack.c.bf16 %v4162, %v4161
      %v4173 = vpack.c.bf16 %v4164, %v4163
      %v4174 = vpack.c.bf16 %v4166, %v4165
      %v4176 = vsel %vm572, %v4167, 0
      %v4179 = vsel %vm572, %v4168, 0
      %v4182 = vsel %vm572, %v4169, 0
      %v4185 = vsel %vm572, %v4170, 0
      %v4188 = vsel %vm572, %v4171, 0
      %v4191 = vsel %vm572, %v4172, 0
      %v4194 = vsel %vm572, %v4173, 0
      %v4197 = vsel %vm572, %v4174, 0
      %4199 = vst [vmem:[#allocation4 + $0x20] sm:$0xff] %v4176
      %4200 = vst [vmem:[#allocation4 + $0x68] sm:$0xff] %v4179
      %4201 = vst [vmem:[#allocation4 + $0xb0] sm:$0xff] %v4182
      %4202 = vst [vmem:[#allocation4 + $0xf8] sm:$0xff] %v4185
      %4203 = vst [vmem:[#allocation4 + $0x140] sm:$0xff] %v4188
      %4204 = vst [vmem:[#allocation4 + $0x188] sm:$0xff] %v4191
      %4205 = vst [vmem:[#allocation4 + $0x1d0] sm:$0xff] %v4194
      %4206 = vst [vmem:[#allocation4 + $0x218] sm:$0xff] %v4197
      %v4207 = vld [vmem:[%s4094 + $0x9] sm:$0xff]
      %v4208 = vld [vmem:[%s4094 + $0x11] sm:$0xff]
      %v4209 = vld [vmem:[%s4094 + $0x29] sm:$0xff]
      %v4210 = vld [vmem:[%s4094 + $0x31] sm:$0xff]
      %v4211 = vld [vmem:[%s4094 + $0x49] sm:$0xff]
      %v4212 = vld [vmem:[%s4094 + $0x51] sm:$0xff]
      %v4213 = vld [vmem:[%s4094 + $0x69] sm:$0xff]
      %v4214 = vld [vmem:[%s4094 + $0x71] sm:$0xff]
      %v4215 = vld [vmem:[%s4094 + $0x89] sm:$0xff]
      %v4216 = vld [vmem:[%s4094 + $0x91] sm:$0xff]
      %v4217 = vld [vmem:[%s4094 + $0xa9] sm:$0xff]
      %v4218 = vld [vmem:[%s4094 + $0xb1] sm:$0xff]
      %v4219 = vld [vmem:[%s4094 + $0xc9] sm:$0xff]
      %v4220 = vld [vmem:[%s4094 + $0xd1] sm:$0xff]
      %v4221 = vld [vmem:[%s4094 + $0xe9] sm:$0xff]
      %v4222 = vld [vmem:[%s4094 + $0xf1] sm:$0xff]
      %v4223 = vpack.c.bf16 %v4208, %v4207
      %v4224 = vpack.c.bf16 %v4210, %v4209
      %v4225 = vpack.c.bf16 %v4212, %v4211
      %v4226 = vpack.c.bf16 %v4214, %v4213
      %v4227 = vpack.c.bf16 %v4216, %v4215
      %v4228 = vpack.c.bf16 %v4218, %v4217
      %v4229 = vpack.c.bf16 %v4220, %v4219
      %v4230 = vpack.c.bf16 %v4222, %v4221
      %v4232 = vsel %vm572, %v4223, 0
      %v4235 = vsel %vm572, %v4224, 0
      %v4238 = vsel %vm572, %v4225, 0
      %v4241 = vsel %vm572, %v4226, 0
      %v4244 = vsel %vm572, %v4227, 0
      %v4247 = vsel %vm572, %v4228, 0
      %v4250 = vsel %vm572, %v4229, 0
      %v4253 = vsel %vm572, %v4230, 0
      %4255 = vst [vmem:[#allocation4 + $0x28] sm:$0xff] %v4232
      %4256 = vst [vmem:[#allocation4 + $0x70] sm:$0xff] %v4235
      %4257 = vst [vmem:[#allocation4 + $0xb8] sm:$0xff] %v4238
      %4258 = vst [vmem:[#allocation4 + $0x100] sm:$0xff] %v4241
      %4259 = vst [vmem:[#allocation4 + $0x148] sm:$0xff] %v4244
      %4260 = vst [vmem:[#allocation4 + $0x190] sm:$0xff] %v4247
      %4261 = vst [vmem:[#allocation4 + $0x1d8] sm:$0xff] %v4250
      %4262 = vst [vmem:[#allocation4 + $0x220] sm:$0xff] %v4253
      %s4263 = scalar_lea.vmem [#allocation3], 64
      %v4264 = vld [vmem:[%s4263 + $0x7] sm:$0xff]
      %v4265 = vld [vmem:[%s4263 + $0xf] sm:$0xff]
      %v4266 = vld [vmem:[%s4263 + $0x27] sm:$0xff]
      %v4267 = vld [vmem:[%s4263 + $0x2f] sm:$0xff]
      %v4268 = vld [vmem:[%s4263 + $0x47] sm:$0xff]
      %v4269 = vld [vmem:[%s4263 + $0x4f] sm:$0xff]
      %v4270 = vld [vmem:[%s4263 + $0x67] sm:$0xff]
      %v4271 = vld [vmem:[%s4263 + $0x6f] sm:$0xff]
      %v4272 = vld [vmem:[%s4263 + $0x87] sm:$0xff]
      %v4273 = vld [vmem:[%s4263 + $0x8f] sm:$0xff]
      %v4274 = vld [vmem:[%s4263 + $0xa7] sm:$0xff]
      %v4275 = vld [vmem:[%s4263 + $0xaf] sm:$0xff]
      %v4276 = vld [vmem:[%s4263 + $0xc7] sm:$0xff]
      %v4277 = vld [vmem:[%s4263 + $0xcf] sm:$0xff]
      %v4278 = vld [vmem:[%s4263 + $0xe7] sm:$0xff]
      %v4279 = vld [vmem:[%s4263 + $0xef] sm:$0xff]
      %v4280 = vpack.c.bf16 %v4265, %v4264
      %v4281 = vpack.c.bf16 %v4267, %v4266
      %v4282 = vpack.c.bf16 %v4269, %v4268
      %v4283 = vpack.c.bf16 %v4271, %v4270
      %v4284 = vpack.c.bf16 %v4273, %v4272
      %v4285 = vpack.c.bf16 %v4275, %v4274
      %v4286 = vpack.c.bf16 %v4277, %v4276
      %v4287 = vpack.c.bf16 %v4279, %v4278
      %v4289 = vsel %vm572, %v4280, 0
      %v4292 = vsel %vm572, %v4281, 0
      %v4295 = vsel %vm572, %v4282, 0
      %v4298 = vsel %vm572, %v4283, 0
      %v4301 = vsel %vm572, %v4284, 0
      %v4304 = vsel %vm572, %v4285, 0
      %v4307 = vsel %vm572, %v4286, 0
      %v4310 = vsel %vm572, %v4287, 0
      %4312 = vst [vmem:[#allocation4 + $0x30] sm:$0xff] %v4289
      %4313 = vst [vmem:[#allocation4 + $0x78] sm:$0xff] %v4292
      %4314 = vst [vmem:[#allocation4 + $0xc0] sm:$0xff] %v4295
      %4315 = vst [vmem:[#allocation4 + $0x108] sm:$0xff] %v4298
      %4316 = vst [vmem:[#allocation4 + $0x150] sm:$0xff] %v4301
      %4317 = vst [vmem:[#allocation4 + $0x198] sm:$0xff] %v4304
      %4318 = vst [vmem:[#allocation4 + $0x1e0] sm:$0xff] %v4307
      %4319 = vst [vmem:[#allocation4 + $0x228] sm:$0xff] %v4310
      %v4320 = vld [vmem:[%s4263 + $0x8] sm:$0xff]
      %v4321 = vld [vmem:[%s4263 + $0x10] sm:$0xff]
      %v4322 = vld [vmem:[%s4263 + $0x28] sm:$0xff]
      %v4323 = vld [vmem:[%s4263 + $0x30] sm:$0xff]
      %v4324 = vld [vmem:[%s4263 + $0x48] sm:$0xff]
      %v4325 = vld [vmem:[%s4263 + $0x50] sm:$0xff]
      %v4326 = vld [vmem:[%s4263 + $0x68] sm:$0xff]
      %v4327 = vld [vmem:[%s4263 + $0x70] sm:$0xff]
      %v4328 = vld [vmem:[%s4263 + $0x88] sm:$0xff]
      %v4329 = vld [vmem:[%s4263 + $0x90] sm:$0xff]
      %v4330 = vld [vmem:[%s4263 + $0xa8] sm:$0xff]
      %v4331 = vld [vmem:[%s4263 + $0xb0] sm:$0xff]
      %v4332 = vld [vmem:[%s4263 + $0xc8] sm:$0xff]
      %v4333 = vld [vmem:[%s4263 + $0xd0] sm:$0xff]
      %v4334 = vld [vmem:[%s4263 + $0xe8] sm:$0xff]
      %v4335 = vld [vmem:[%s4263 + $0xf0] sm:$0xff]
      %v4336 = vpack.c.bf16 %v4321, %v4320
      %v4337 = vpack.c.bf16 %v4323, %v4322
      %v4338 = vpack.c.bf16 %v4325, %v4324
      %v4339 = vpack.c.bf16 %v4327, %v4326
      %v4340 = vpack.c.bf16 %v4329, %v4328
      %v4341 = vpack.c.bf16 %v4331, %v4330
      %v4342 = vpack.c.bf16 %v4333, %v4332
      %v4343 = vpack.c.bf16 %v4335, %v4334
      %v4345 = vsel %vm572, %v4336, 0
      %v4348 = vsel %vm572, %v4337, 0
      %v4351 = vsel %vm572, %v4338, 0
      %v4354 = vsel %vm572, %v4339, 0
      %v4357 = vsel %vm572, %v4340, 0
      %v4360 = vsel %vm572, %v4341, 0
      %v4363 = vsel %vm572, %v4342, 0
      %v4366 = vsel %vm572, %v4343, 0
      %4368 = vst [vmem:[#allocation4 + $0x38] sm:$0xff] %v4345
      %4369 = vst [vmem:[#allocation4 + $0x80] sm:$0xff] %v4348
      %4370 = vst [vmem:[#allocation4 + $0xc8] sm:$0xff] %v4351
      %4371 = vst [vmem:[#allocation4 + $0x110] sm:$0xff] %v4354
      %4372 = vst [vmem:[#allocation4 + $0x158] sm:$0xff] %v4357
      %4373 = vst [vmem:[#allocation4 + $0x1a0] sm:$0xff] %v4360
      %4374 = vst [vmem:[#allocation4 + $0x1e8] sm:$0xff] %v4363
      %4375 = vst [vmem:[#allocation4 + $0x230] sm:$0xff] %v4366
      %v4376 = vld [vmem:[%s4263 + $0x9] sm:$0xff]
      %v4377 = vld [vmem:[%s4263 + $0x11] sm:$0xff]
      %v4378 = vld [vmem:[%s4263 + $0x29] sm:$0xff]
      %v4379 = vld [vmem:[%s4263 + $0x31] sm:$0xff]
      %v4380 = vld [vmem:[%s4263 + $0x49] sm:$0xff]
      %v4381 = vld [vmem:[%s4263 + $0x51] sm:$0xff]
      %v4382 = vld [vmem:[%s4263 + $0x69] sm:$0xff]
      %v4383 = vld [vmem:[%s4263 + $0x71] sm:$0xff]
      %v4384 = vld [vmem:[%s4263 + $0x89] sm:$0xff]
      %v4385 = vld [vmem:[%s4263 + $0x91] sm:$0xff]
      %v4386 = vld [vmem:[%s4263 + $0xa9] sm:$0xff]
      %v4387 = vld [vmem:[%s4263 + $0xb1] sm:$0xff]
      %v4388 = vld [vmem:[%s4263 + $0xc9] sm:$0xff]
      %v4389 = vld [vmem:[%s4263 + $0xd1] sm:$0xff]
      %v4390 = vld [vmem:[%s4263 + $0xe9] sm:$0xff]
      %v4391 = vld [vmem:[%s4263 + $0xf1] sm:$0xff]
      %v4392 = vpack.c.bf16 %v4377, %v4376
      %v4393 = vpack.c.bf16 %v4379, %v4378
      %v4394 = vpack.c.bf16 %v4381, %v4380
      %v4395 = vpack.c.bf16 %v4383, %v4382
      %v4396 = vpack.c.bf16 %v4385, %v4384
      %v4397 = vpack.c.bf16 %v4387, %v4386
      %v4398 = vpack.c.bf16 %v4389, %v4388
      %v4399 = vpack.c.bf16 %v4391, %v4390
      %v4401 = vsel %vm572, %v4392, 0
      %v4404 = vsel %vm572, %v4393, 0
      %v4407 = vsel %vm572, %v4394, 0
      %v4410 = vsel %vm572, %v4395, 0
      %v4413 = vsel %vm572, %v4396, 0
      %v4416 = vsel %vm572, %v4397, 0
      %v4419 = vsel %vm572, %v4398, 0
      %v4422 = vsel %vm572, %v4399, 0
      %4424 = vst [vmem:[#allocation4 + $0x40] sm:$0xff] %v4401
      %4425 = vst [vmem:[#allocation4 + $0x88] sm:$0xff] %v4404
      %4426 = vst [vmem:[#allocation4 + $0xd0] sm:$0xff] %v4407
      %4427 = vst [vmem:[#allocation4 + $0x118] sm:$0xff] %v4410
      %4428 = vst [vmem:[#allocation4 + $0x160] sm:$0xff] %v4413
      %4429 = vst [vmem:[#allocation4 + $0x1a8] sm:$0xff] %v4416
      %4430 = vst [vmem:[#allocation4 + $0x1f0] sm:$0xff] %v4419
      %4431 = vst [vmem:[#allocation4 + $0x238] sm:$0xff] %v4422
      %v4432 = vld [vmem:[#allocation4] sm:$0xff]
      %v4433 = vld [vmem:[#allocation4 + $0x8] sm:$0xff]
      %v4434 = vld [vmem:[#allocation4 + $0x10] sm:$0xff]
      %v4435 = vld [vmem:[#allocation4 + $0x18] sm:$0xff]
      %v4436 = vld [vmem:[#allocation4 + $0x20] sm:$0xff]
      %v4437 = vld [vmem:[#allocation4 + $0x28] sm:$0xff]
      %v4438 = vld [vmem:[#allocation4 + $0x30] sm:$0xff]
      %v4439 = vld [vmem:[#allocation4 + $0x38] sm:$0xff]
      %v4440 = vld [vmem:[#allocation4 + $0x40] sm:$0xff]
      %v4441 = vld [vmem:[#allocation4 + $0x48] sm:$0xff]
      %v4442 = vld [vmem:[#allocation4 + $0x50] sm:$0xff]
      %v4443 = vld [vmem:[#allocation4 + $0x58] sm:$0xff]
      %v4444 = vld [vmem:[#allocation4 + $0x60] sm:$0xff]
      %v4445 = vld [vmem:[#allocation4 + $0x68] sm:$0xff]
      %v4446 = vld [vmem:[#allocation4 + $0x70] sm:$0xff]
      %v4447 = vld [vmem:[#allocation4 + $0x78] sm:$0xff]
      %v4448 = vld [vmem:[#allocation4 + $0x80] sm:$0xff]
      %v4449 = vld [vmem:[#allocation4 + $0x88] sm:$0xff]
      %v4450 = vld [vmem:[#allocation4 + $0x90] sm:$0xff]
      %v4451 = vld [vmem:[#allocation4 + $0x98] sm:$0xff]
      %v4452 = vld [vmem:[#allocation4 + $0xa0] sm:$0xff]
      %v4453 = vld [vmem:[#allocation4 + $0xa8] sm:$0xff]
      %v4454 = vld [vmem:[#allocation4 + $0xb0] sm:$0xff]
      %v4455 = vld [vmem:[#allocation4 + $0xb8] sm:$0xff]
      %v4456 = vld [vmem:[#allocation4 + $0xc0] sm:$0xff]
      %v4457 = vld [vmem:[#allocation4 + $0xc8] sm:$0xff]
      %v4458 = vld [vmem:[#allocation4 + $0xd0] sm:$0xff]
      %v4459 = vld [vmem:[#allocation4 + $0xd8] sm:$0xff]
      %v4460 = vld [vmem:[#allocation4 + $0xe0] sm:$0xff]
      %v4461 = vld [vmem:[#allocation4 + $0xe8] sm:$0xff]
      %v4462 = vld [vmem:[#allocation4 + $0xf0] sm:$0xff]
      %v4463 = vld [vmem:[#allocation4 + $0xf8] sm:$0xff]
      %v4464 = vld [vmem:[#allocation4 + $0x100] sm:$0xff]
      %v4465 = vld [vmem:[#allocation4 + $0x108] sm:$0xff]
      %v4466 = vld [vmem:[#allocation4 + $0x110] sm:$0xff]
      %v4467 = vld [vmem:[#allocation4 + $0x118] sm:$0xff]
      %v4468 = vld [vmem:[#allocation4 + $0x120] sm:$0xff]
      %v4469 = vld [vmem:[#allocation4 + $0x128] sm:$0xff]
      %v4470 = vld [vmem:[#allocation4 + $0x130] sm:$0xff]
      %v4471 = vld [vmem:[#allocation4 + $0x138] sm:$0xff]
      %v4472 = vld [vmem:[#allocation4 + $0x140] sm:$0xff]
      %v4473 = vld [vmem:[#allocation4 + $0x148] sm:$0xff]
      %v4474 = vld [vmem:[#allocation4 + $0x150] sm:$0xff]
      %v4475 = vld [vmem:[#allocation4 + $0x158] sm:$0xff]
      %v4476 = vld [vmem:[#allocation4 + $0x160] sm:$0xff]
      %v4477 = vld [vmem:[#allocation4 + $0x168] sm:$0xff]
      %v4478 = vld [vmem:[#allocation4 + $0x170] sm:$0xff]
      %v4479 = vld [vmem:[#allocation4 + $0x178] sm:$0xff]
      %v4480 = vld [vmem:[#allocation4 + $0x180] sm:$0xff]
      %v4481 = vld [vmem:[#allocation4 + $0x188] sm:$0xff]
      %v4482 = vld [vmem:[#allocation4 + $0x190] sm:$0xff]
      %v4483 = vld [vmem:[#allocation4 + $0x198] sm:$0xff]
      %v4484 = vld [vmem:[#allocation4 + $0x1a0] sm:$0xff]
      %v4485 = vld [vmem:[#allocation4 + $0x1a8] sm:$0xff]
      %v4486 = vld [vmem:[#allocation4 + $0x1b0] sm:$0xff]
      %v4487 = vld [vmem:[#allocation4 + $0x1b8] sm:$0xff]
      %v4488 = vld [vmem:[#allocation4 + $0x1c0] sm:$0xff]
      %v4489 = vld [vmem:[#allocation4 + $0x1c8] sm:$0xff]
      %v4490 = vld [vmem:[#allocation4 + $0x1d0] sm:$0xff]
      %v4491 = vld [vmem:[#allocation4 + $0x1d8] sm:$0xff]
      %v4492 = vld [vmem:[#allocation4 + $0x1e0] sm:$0xff]
      %v4493 = vld [vmem:[#allocation4 + $0x1e8] sm:$0xff]
      %v4494 = vld [vmem:[#allocation4 + $0x1f0] sm:$0xff]
      %v4495 = vld [vmem:[#allocation4 + $0x1f8] sm:$0xff]
      %v4496 = vld [vmem:[#allocation4 + $0x200] sm:$0xff]
      %v4497 = vld [vmem:[#allocation4 + $0x208] sm:$0xff]
      %v4498 = vld [vmem:[#allocation4 + $0x210] sm:$0xff]
      %v4499 = vld [vmem:[#allocation4 + $0x218] sm:$0xff]
      %v4500 = vld [vmem:[#allocation4 + $0x220] sm:$0xff]
      %v4501 = vld [vmem:[#allocation4 + $0x228] sm:$0xff]
      %v4502 = vld [vmem:[#allocation4 + $0x230] sm:$0xff]
      %v4503 = vld [vmem:[#allocation4 + $0x238] sm:$0xff]
      %v4504 = vld [vmem:[%s6] sm:$0xf]
      %v4505 = vld [vmem:[%s6 + $0x4] sm:$0xf]
      %v4506 = vld [vmem:[%s6 + $0x8] sm:$0xf]
      %v4507 = vld [vmem:[%s6 + $0xc] sm:$0xf]
      %v4508 = vld [vmem:[%s6 + $0x10] sm:$0xf]
      %v4509 = vld [vmem:[%s6 + $0x14] sm:$0xf]
      %v4510 = vld [vmem:[%s6 + $0x18] sm:$0xf]
      %v4511 = vld [vmem:[%s6 + $0x1c] sm:$0xf]
      %v4512 = vld [vmem:[%s6 + $0x20] sm:$0xf]
      %v4513 = vld [vmem:[%s6 + $0x24] sm:$0xf]
      %v4514 = vld [vmem:[%s6 + $0x28] sm:$0xf]
      %v4515 = vld [vmem:[%s6 + $0x2c] sm:$0xf]
      %v4516 = vld [vmem:[%s6 + $0x30] sm:$0xf]
      %v4517 = vld [vmem:[%s6 + $0x34] sm:$0xf]
      %v4518 = vld [vmem:[%s6 + $0x38] sm:$0xf]
      %v4519 = vld [vmem:[%s6 + $0x3c] sm:$0xf]
      %v4520 = vld [vmem:[%s6 + $0x40] sm:$0xf]
      %v4521 = vld [vmem:[%s6 + $0x44] sm:$0xf]
      %v4522 = vld [vmem:[%s6 + $0x48] sm:$0xf]
      %v4523 = vld [vmem:[%s6 + $0x4c] sm:$0xf]
      %v4524 = vld [vmem:[%s6 + $0x50] sm:$0xf]
      %v4525 = vld [vmem:[%s6 + $0x54] sm:$0xf]
      %v4526 = vld [vmem:[%s6 + $0x58] sm:$0xf]
      %v4527 = vld [vmem:[%s6 + $0x5c] sm:$0xf]
      %v4528 = vld [vmem:[%s6 + $0x60] sm:$0xf]
      %v4529 = vld [vmem:[%s6 + $0x64] sm:$0xf]
      %v4530 = vld [vmem:[%s6 + $0x68] sm:$0xf]
      %v4531 = vld [vmem:[%s6 + $0x6c] sm:$0xf]
      %v4532 = vld [vmem:[%s6 + $0x70] sm:$0xf]
      %v4533 = vld [vmem:[%s6 + $0x74] sm:$0xf]
      %v4534 = vld [vmem:[%s6 + $0x78] sm:$0xf]
      %v4535 = vld [vmem:[%s6 + $0x7c] sm:$0xf]
      %v4536 = vld [vmem:[%s6 + $0x80] sm:$0xf]
      %v4537 = vld [vmem:[%s6 + $0x84] sm:$0xf]
      %v4538 = vld [vmem:[%s6 + $0x88] sm:$0xf]
      %v4539 = vld [vmem:[%s6 + $0x8c] sm:$0xf]
      %v4540 = vld [vmem:[%s6 + $0x90] sm:$0xf]
      %v4541 = vld [vmem:[%s6 + $0x94] sm:$0xf]
      %v4542 = vld [vmem:[%s6 + $0x98] sm:$0xf]
      %v4543 = vld [vmem:[%s6 + $0x9c] sm:$0xf]
      %v4544 = vld [vmem:[%s6 + $0xa0] sm:$0xf]
      %v4545 = vld [vmem:[%s6 + $0xa4] sm:$0xf]
      %v4546 = vld [vmem:[%s6 + $0xa8] sm:$0xf]
      %v4547 = vld [vmem:[%s6 + $0xac] sm:$0xf]
      %v4548 = vld [vmem:[%s6 + $0xb0] sm:$0xf]
      %v4549 = vld [vmem:[%s6 + $0xb4] sm:$0xf]
      %v4550 = vld [vmem:[%s6 + $0xb8] sm:$0xf]
      %v4551 = vld [vmem:[%s6 + $0xbc] sm:$0xf]
      %v4552 = vld [vmem:[%s6 + $0xc0] sm:$0xf]
      %v4553 = vld [vmem:[%s6 + $0xc4] sm:$0xf]
      %v4554 = vld [vmem:[%s6 + $0xc8] sm:$0xf]
      %v4555 = vld [vmem:[%s6 + $0xcc] sm:$0xf]
      %v4556 = vld [vmem:[%s6 + $0xd0] sm:$0xf]
      %v4557 = vld [vmem:[%s6 + $0xd4] sm:$0xf]
      %v4558 = vld [vmem:[%s6 + $0xd8] sm:$0xf]
      %v4559 = vld [vmem:[%s6 + $0xdc] sm:$0xf]
      %v4560 = vld [vmem:[%s6 + $0xe0] sm:$0xf]
      %v4561 = vld [vmem:[%s6 + $0xe4] sm:$0xf]
      %v4562 = vld [vmem:[%s6 + $0xe8] sm:$0xf]
      %v4563 = vld [vmem:[%s6 + $0xec] sm:$0xf]
      %v4564 = vld [vmem:[%s6 + $0xf0] sm:$0xf]
      %v4565 = vld [vmem:[%s6 + $0xf4] sm:$0xf]
      %v4566 = vld [vmem:[%s6 + $0xf8] sm:$0xf]
      %v4567 = vld [vmem:[%s6 + $0xfc] sm:$0xf]
      %v4568 = vld [vmem:[%s6 + $0x100] sm:$0xf]
      %v4569 = vld [vmem:[%s6 + $0x104] sm:$0xf]
      %v4570 = vld [vmem:[%s6 + $0x108] sm:$0xf]
      %v4571 = vld [vmem:[%s6 + $0x10c] sm:$0xf]
      %v4572 = vld [vmem:[%s6 + $0x110] sm:$0xf]
      %v4573 = vld [vmem:[%s6 + $0x114] sm:$0xf]
      %v4574 = vld [vmem:[%s6 + $0x118] sm:$0xf]
      %v4575 = vld [vmem:[%s6 + $0x11c] sm:$0xf]
      %v4576 = vld [vmem:[%s6 + $0x120] sm:$0xf]
      %v4577 = vld [vmem:[%s6 + $0x124] sm:$0xf]
      %v4578 = vld [vmem:[%s6 + $0x128] sm:$0xf]
      %v4579 = vld [vmem:[%s6 + $0x12c] sm:$0xf]
      %v4580 = vld [vmem:[%s6 + $0x130] sm:$0xf]
      %v4581 = vld [vmem:[%s6 + $0x134] sm:$0xf]
      %v4582 = vld [vmem:[%s6 + $0x138] sm:$0xf]
      %v4583 = vld [vmem:[%s6 + $0x13c] sm:$0xf]
      %v4584 = vld [vmem:[%s6 + $0x140] sm:$0xf]
      %v4585 = vld [vmem:[%s6 + $0x144] sm:$0xf]
      %v4586 = vld [vmem:[%s6 + $0x148] sm:$0xf]
      %v4587 = vld [vmem:[%s6 + $0x14c] sm:$0xf]
      %v4588 = vld [vmem:[%s6 + $0x150] sm:$0xf]
      %v4589 = vld [vmem:[%s6 + $0x154] sm:$0xf]
      %v4590 = vld [vmem:[%s6 + $0x158] sm:$0xf]
      %v4591 = vld [vmem:[%s6 + $0x15c] sm:$0xf]
      %v4592 = vld [vmem:[%s6 + $0x160] sm:$0xf]
      %v4593 = vld [vmem:[%s6 + $0x164] sm:$0xf]
      %v4594 = vld [vmem:[%s6 + $0x168] sm:$0xf]
      %v4595 = vld [vmem:[%s6 + $0x16c] sm:$0xf]
      %v4596 = vld [vmem:[%s6 + $0x170] sm:$0xf]
      %v4597 = vld [vmem:[%s6 + $0x174] sm:$0xf]
      %v4598 = vld [vmem:[%s6 + $0x178] sm:$0xf]
      %v4599 = vld [vmem:[%s6 + $0x17c] sm:$0xf]
      %v4600 = vld [vmem:[%s6 + $0x180] sm:$0xf]
      %v4601 = vld [vmem:[%s6 + $0x184] sm:$0xf]
      %v4602 = vld [vmem:[%s6 + $0x188] sm:$0xf]
      %v4603 = vld [vmem:[%s6 + $0x18c] sm:$0xf]
      %v4604 = vld [vmem:[%s6 + $0x190] sm:$0xf]
      %v4605 = vld [vmem:[%s6 + $0x194] sm:$0xf]
      %v4606 = vld [vmem:[%s6 + $0x198] sm:$0xf]
      %v4607 = vld [vmem:[%s6 + $0x19c] sm:$0xf]
      %v4608 = vld [vmem:[%s6 + $0x1a0] sm:$0xf]
      %v4609 = vld [vmem:[%s6 + $0x1a4] sm:$0xf]
      %v4610 = vld [vmem:[%s6 + $0x1a8] sm:$0xf]
      %v4611 = vld [vmem:[%s6 + $0x1ac] sm:$0xf]
      %v4612 = vld [vmem:[%s6 + $0x1b0] sm:$0xf]
      %v4613 = vld [vmem:[%s6 + $0x1b4] sm:$0xf]
      %v4614 = vld [vmem:[%s6 + $0x1b8] sm:$0xf]
      %v4615 = vld [vmem:[%s6 + $0x1bc] sm:$0xf]
      %v4616 = vld [vmem:[%s6 + $0x1c0] sm:$0xf]
      %v4617 = vld [vmem:[%s6 + $0x1c4] sm:$0xf]
      %v4618 = vld [vmem:[%s6 + $0x1c8] sm:$0xf]
      %v4619 = vld [vmem:[%s6 + $0x1cc] sm:$0xf]
      %v4620 = vld [vmem:[%s6 + $0x1d0] sm:$0xf]
      %v4621 = vld [vmem:[%s6 + $0x1d4] sm:$0xf]
      %v4622 = vld [vmem:[%s6 + $0x1d8] sm:$0xf]
      %v4623 = vld [vmem:[%s6 + $0x1dc] sm:$0xf]
      %v4624 = vld [vmem:[%s6 + $0x1e0] sm:$0xf]
      %v4625 = vld [vmem:[%s6 + $0x1e4] sm:$0xf]
      %v4626 = vld [vmem:[%s6 + $0x1e8] sm:$0xf]
      %v4627 = vld [vmem:[%s6 + $0x1ec] sm:$0xf]
      %v4628 = vld [vmem:[%s6 + $0x1f0] sm:$0xf]
      %v4629 = vld [vmem:[%s6 + $0x1f4] sm:$0xf]
      %v4630 = vld [vmem:[%s6 + $0x1f8] sm:$0xf]
      %v4631 = vld [vmem:[%s6 + $0x1fc] sm:$0xf]
      %v4632 = vld [vmem:[%s6 + $0x200] sm:$0xf]
      %v4633 = vld [vmem:[%s6 + $0x204] sm:$0xf]
      %v4634 = vld [vmem:[%s6 + $0x208] sm:$0xf]
      %v4635 = vld [vmem:[%s6 + $0x20c] sm:$0xf]
      %v4636 = vld [vmem:[%s6 + $0x210] sm:$0xf]
      %v4637 = vld [vmem:[%s6 + $0x214] sm:$0xf]
      %v4638 = vld [vmem:[%s6 + $0x218] sm:$0xf]
      %v4639 = vld [vmem:[%s6 + $0x21c] sm:$0xf]
      %v4640 = vld [vmem:[%s6 + $0x220] sm:$0xf]
      %v4641 = vld [vmem:[%s6 + $0x224] sm:$0xf]
      %v4642 = vld [vmem:[%s6 + $0x228] sm:$0xf]
      %v4643 = vld [vmem:[%s6 + $0x22c] sm:$0xf]
      %v4644 = vld [vmem:[%s6 + $0x230] sm:$0xf]
      %v4645 = vld [vmem:[%s6 + $0x234] sm:$0xf]
      %v4646 = vld [vmem:[%s6 + $0x238] sm:$0xf]
      %v4647 = vld [vmem:[%s6 + $0x23c] sm:$0xf]
      %v4648 = vld [vmem:[%s7] sm:$0x1]
      %v4650 = vlaneseq
      %v4651 = vshrl.u32 %v4650, 7
      %v4652 = vsub.s32 0, %v4651
      %v4653 = vrot.slane %v4648, %v4652
      %v4799 = vunpack.c.l.b16 %v4504
      %v4800 = vunpack.c.l.b16 %v4505
      %v4801 = vunpack.c.l.b16 %v4506
      %v4802 = vunpack.c.l.b16 %v4507
      %v4803 = vunpack.c.l.b16 %v4508
      %v4804 = vunpack.c.l.b16 %v4509
      %v4805 = vunpack.c.l.b16 %v4510
      %v4806 = vunpack.c.l.b16 %v4511
      %v4807 = vunpack.c.l.b16 %v4512
      %v4808 = vunpack.c.l.b16 %v4513
      %v4809 = vunpack.c.l.b16 %v4514
      %v4810 = vunpack.c.l.b16 %v4515
      %v4811 = vunpack.c.l.b16 %v4516
      %v4812 = vunpack.c.l.b16 %v4517
      %v4813 = vunpack.c.l.b16 %v4518
      %v4814 = vunpack.c.l.b16 %v4519
      %v4815 = vunpack.c.l.b16 %v4520
      %v4816 = vunpack.c.l.b16 %v4521
      %v4817 = vunpack.c.l.b16 %v4522
      %v4818 = vunpack.c.l.b16 %v4523
      %v4819 = vunpack.c.l.b16 %v4524
      %v4820 = vunpack.c.l.b16 %v4525
      %v4821 = vunpack.c.l.b16 %v4526
      %v4822 = vunpack.c.l.b16 %v4527
      %v4823 = vunpack.c.l.b16 %v4528
      %v4824 = vunpack.c.l.b16 %v4529
      %v4825 = vunpack.c.l.b16 %v4530
      %v4826 = vunpack.c.l.b16 %v4531
      %v4827 = vunpack.c.l.b16 %v4532
      %v4828 = vunpack.c.l.b16 %v4533
      %v4829 = vunpack.c.l.b16 %v4534
      %v4830 = vunpack.c.l.b16 %v4535
      %v4831 = vunpack.c.l.b16 %v4536
      %v4832 = vunpack.c.l.b16 %v4537
      %v4833 = vunpack.c.l.b16 %v4538
      %v4834 = vunpack.c.l.b16 %v4539
      %v4835 = vunpack.c.l.b16 %v4540
      %v4836 = vunpack.c.l.b16 %v4541
      %v4837 = vunpack.c.l.b16 %v4542
      %v4838 = vunpack.c.l.b16 %v4543
      %v4839 = vunpack.c.l.b16 %v4544
      %v4840 = vunpack.c.l.b16 %v4545
      %v4841 = vunpack.c.l.b16 %v4546
      %v4842 = vunpack.c.l.b16 %v4547
      %v4843 = vunpack.c.l.b16 %v4548
      %v4844 = vunpack.c.l.b16 %v4549
      %v4845 = vunpack.c.l.b16 %v4550
      %v4846 = vunpack.c.l.b16 %v4551
      %v4847 = vunpack.c.l.b16 %v4552
      %v4848 = vunpack.c.l.b16 %v4553
      %v4849 = vunpack.c.l.b16 %v4554
      %v4850 = vunpack.c.l.b16 %v4555
      %v4851 = vunpack.c.l.b16 %v4556
      %v4852 = vunpack.c.l.b16 %v4557
      %v4853 = vunpack.c.l.b16 %v4558
      %v4854 = vunpack.c.l.b16 %v4559
      %v4855 = vunpack.c.l.b16 %v4560
      %v4856 = vunpack.c.l.b16 %v4561
      %v4857 = vunpack.c.l.b16 %v4562
      %v4858 = vunpack.c.l.b16 %v4563
      %v4859 = vunpack.c.l.b16 %v4564
      %v4860 = vunpack.c.l.b16 %v4565
      %v4861 = vunpack.c.l.b16 %v4566
      %v4862 = vunpack.c.l.b16 %v4567
      %v4863 = vunpack.c.l.b16 %v4568
      %v4864 = vunpack.c.l.b16 %v4569
      %v4865 = vunpack.c.l.b16 %v4570
      %v4866 = vunpack.c.l.b16 %v4571
      %v4867 = vunpack.c.l.b16 %v4572
      %v4868 = vunpack.c.l.b16 %v4573
      %v4869 = vunpack.c.l.b16 %v4574
      %v4870 = vunpack.c.l.b16 %v4575
      %v4871 = vunpack.c.l.b16 %v4576
      %v4872 = vunpack.c.l.b16 %v4577
      %v4873 = vunpack.c.l.b16 %v4578
      %v4874 = vunpack.c.l.b16 %v4579
      %v4875 = vunpack.c.l.b16 %v4580
      %v4876 = vunpack.c.l.b16 %v4581
      %v4877 = vunpack.c.l.b16 %v4582
      %v4878 = vunpack.c.l.b16 %v4583
      %v4879 = vunpack.c.l.b16 %v4584
      %v4880 = vunpack.c.l.b16 %v4585
      %v4881 = vunpack.c.l.b16 %v4586
      %v4882 = vunpack.c.l.b16 %v4587
      %v4883 = vunpack.c.l.b16 %v4588
      %v4884 = vunpack.c.l.b16 %v4589
      %v4885 = vunpack.c.l.b16 %v4590
      %v4886 = vunpack.c.l.b16 %v4591
      %v4887 = vunpack.c.l.b16 %v4592
      %v4888 = vunpack.c.l.b16 %v4593
      %v4889 = vunpack.c.l.b16 %v4594
      %v4890 = vunpack.c.l.b16 %v4595
      %v4891 = vunpack.c.l.b16 %v4596
      %v4892 = vunpack.c.l.b16 %v4597
      %v4893 = vunpack.c.l.b16 %v4598
      %v4894 = vunpack.c.l.b16 %v4599
      %v4895 = vunpack.c.l.b16 %v4600
      %v4896 = vunpack.c.l.b16 %v4601
      %v4897 = vunpack.c.l.b16 %v4602
      %v4898 = vunpack.c.l.b16 %v4603
      %v4899 = vunpack.c.l.b16 %v4604
      %v4900 = vunpack.c.l.b16 %v4605
      %v4901 = vunpack.c.l.b16 %v4606
      %v4902 = vunpack.c.l.b16 %v4607
      %v4903 = vunpack.c.l.b16 %v4608
      %v4904 = vunpack.c.l.b16 %v4609
      %v4905 = vunpack.c.l.b16 %v4610
      %v4906 = vunpack.c.l.b16 %v4611
      %v4907 = vunpack.c.l.b16 %v4612
      %v4908 = vunpack.c.l.b16 %v4613
      %v4909 = vunpack.c.l.b16 %v4614
      %v4910 = vunpack.c.l.b16 %v4615
      %v4911 = vunpack.c.l.b16 %v4616
      %v4912 = vunpack.c.l.b16 %v4617
      %v4913 = vunpack.c.l.b16 %v4618
      %v4914 = vunpack.c.l.b16 %v4619
      %v4915 = vunpack.c.l.b16 %v4620
      %v4916 = vunpack.c.l.b16 %v4621
      %v4917 = vunpack.c.l.b16 %v4622
      %v4918 = vunpack.c.l.b16 %v4623
      %v4919 = vunpack.c.l.b16 %v4624
      %v4920 = vunpack.c.l.b16 %v4625
      %v4921 = vunpack.c.l.b16 %v4626
      %v4922 = vunpack.c.l.b16 %v4627
      %v4923 = vunpack.c.l.b16 %v4628
      %v4924 = vunpack.c.l.b16 %v4629
      %v4925 = vunpack.c.l.b16 %v4630
      %v4926 = vunpack.c.l.b16 %v4631
      %v4927 = vunpack.c.l.b16 %v4632
      %v4928 = vunpack.c.l.b16 %v4633
      %v4929 = vunpack.c.l.b16 %v4634
      %v4930 = vunpack.c.l.b16 %v4635
      %v4931 = vunpack.c.l.b16 %v4636
      %v4932 = vunpack.c.l.b16 %v4637
      %v4933 = vunpack.c.l.b16 %v4638
      %v4934 = vunpack.c.l.b16 %v4639
      %v4935 = vunpack.c.l.b16 %v4640
      %v4936 = vunpack.c.l.b16 %v4641
      %v4937 = vunpack.c.l.b16 %v4642
      %v4938 = vunpack.c.l.b16 %v4643
      %v4939 = vunpack.c.l.b16 %v4644
      %v4940 = vunpack.c.l.b16 %v4645
      %v4941 = vunpack.c.l.b16 %v4646
      %v4942 = vunpack.c.l.b16 %v4647
      %v4943 = vpack.c.b16 %v4800, %v4799
      %v4944 = vpack.c.b16 %v4802, %v4801
      %v4945 = vpack.c.b16 %v4804, %v4803
      %v4946 = vpack.c.b16 %v4806, %v4805
      %v4947 = vpack.c.b16 %v4808, %v4807
      %v4948 = vpack.c.b16 %v4810, %v4809
      %v4949 = vpack.c.b16 %v4812, %v4811
      %v4950 = vpack.c.b16 %v4814, %v4813
      %v4951 = vpack.c.b16 %v4816, %v4815
      %v4952 = vpack.c.b16 %v4818, %v4817
      %v4953 = vpack.c.b16 %v4820, %v4819
      %v4954 = vpack.c.b16 %v4822, %v4821
      %v4955 = vpack.c.b16 %v4824, %v4823
      %v4956 = vpack.c.b16 %v4826, %v4825
      %v4957 = vpack.c.b16 %v4828, %v4827
      %v4958 = vpack.c.b16 %v4830, %v4829
      %v4959 = vpack.c.b16 %v4832, %v4831
      %v4960 = vpack.c.b16 %v4834, %v4833
      %v4961 = vpack.c.b16 %v4836, %v4835
      %v4962 = vpack.c.b16 %v4838, %v4837
      %v4963 = vpack.c.b16 %v4840, %v4839
      %v4964 = vpack.c.b16 %v4842, %v4841
      %v4965 = vpack.c.b16 %v4844, %v4843
      %v4966 = vpack.c.b16 %v4846, %v4845
      %v4967 = vpack.c.b16 %v4848, %v4847
      %v4968 = vpack.c.b16 %v4850, %v4849
      %v4969 = vpack.c.b16 %v4852, %v4851
      %v4970 = vpack.c.b16 %v4854, %v4853
      %v4971 = vpack.c.b16 %v4856, %v4855
      %v4972 = vpack.c.b16 %v4858, %v4857
      %v4973 = vpack.c.b16 %v4860, %v4859
      %v4974 = vpack.c.b16 %v4862, %v4861
      %v4975 = vpack.c.b16 %v4864, %v4863
      %v4976 = vpack.c.b16 %v4866, %v4865
      %v4977 = vpack.c.b16 %v4868, %v4867
      %v4978 = vpack.c.b16 %v4870, %v4869
      %v4979 = vpack.c.b16 %v4872, %v4871
      %v4980 = vpack.c.b16 %v4874, %v4873
      %v4981 = vpack.c.b16 %v4876, %v4875
      %v4982 = vpack.c.b16 %v4878, %v4877
      %v4983 = vpack.c.b16 %v4880, %v4879
      %v4984 = vpack.c.b16 %v4882, %v4881
      %v4985 = vpack.c.b16 %v4884, %v4883
      %v4986 = vpack.c.b16 %v4886, %v4885
      %v4987 = vpack.c.b16 %v4888, %v4887
      %v4988 = vpack.c.b16 %v4890, %v4889
      %v4989 = vpack.c.b16 %v4892, %v4891
      %v4990 = vpack.c.b16 %v4894, %v4893
      %v4991 = vpack.c.b16 %v4896, %v4895
      %v4992 = vpack.c.b16 %v4898, %v4897
      %v4993 = vpack.c.b16 %v4900, %v4899
      %v4994 = vpack.c.b16 %v4902, %v4901
      %v4995 = vpack.c.b16 %v4904, %v4903
      %v4996 = vpack.c.b16 %v4906, %v4905
      %v4997 = vpack.c.b16 %v4908, %v4907
      %v4998 = vpack.c.b16 %v4910, %v4909
      %v4999 = vpack.c.b16 %v4912, %v4911
      %v5000 = vpack.c.b16 %v4914, %v4913
      %v5001 = vpack.c.b16 %v4916, %v4915
      %v5002 = vpack.c.b16 %v4918, %v4917
      %v5003 = vpack.c.b16 %v4920, %v4919
      %v5004 = vpack.c.b16 %v4922, %v4921
      %v5005 = vpack.c.b16 %v4924, %v4923
      %v5006 = vpack.c.b16 %v4926, %v4925
      %v5007 = vpack.c.b16 %v4928, %v4927
      %v5008 = vpack.c.b16 %v4930, %v4929
      %v5009 = vpack.c.b16 %v4932, %v4931
      %v5010 = vpack.c.b16 %v4934, %v4933
      %v5011 = vpack.c.b16 %v4936, %v4935
      %v5012 = vpack.c.b16 %v4938, %v4937
      %v5013 = vpack.c.b16 %v4940, %v4939
      %v5014 = vpack.c.b16 %v4942, %v4941
      %5087 = vmatprep.subr.bf16.mxu0 0
      %5088 = vmatpush1.bf16.msra.mxu0 %v4943
      %5089 = vmatprep.subr.bf16.mxu0 0
      %5090 = vmatpush1.bf16.msra.mxu0 %v4944
      %5091 = vmatprep.subr.bf16.mxu0 0
      %5092 = vmatpush1.bf16.msra.mxu0 %v4945
      %5093 = vmatprep.subr.bf16.mxu0 0
      %5094 = vmatpush1.bf16.msra.mxu0 %v4946
      %5095 = vmatprep.subr.bf16.mxu0 0
      %5096 = vmatpush1.bf16.msra.mxu0 %v4947
      %5097 = vmatprep.subr.bf16.mxu0 0
      %5098 = vmatpush1.bf16.msra.mxu0 %v4948
      %5099 = vmatprep.subr.bf16.mxu0 0
      %5100 = vmatpush1.bf16.msra.mxu0 %v4949
      %5101 = vmatprep.subr.bf16.mxu0 0
      %5102 = vmatpush1.bf16.msra.mxu0 %v4950
      %5103 = vmatprep.subr.bf16.mxu0 0
      %5104 = vmatpush1.bf16.msra.mxu0 %v4951
      %5105 = vmatprep.subr.bf16.mxu0 0
      %5106 = vmatpush1.bf16.msra.mxu0 %v4952
      %5107 = vmatprep.subr.bf16.mxu0 0
      %5108 = vmatpush1.bf16.msra.mxu0 %v4953
      %5109 = vmatprep.subr.bf16.mxu0 0
      %5110 = vmatpush1.bf16.msra.mxu0 %v4954
      %5111 = vmatprep.subr.bf16.mxu0 0
      %5112 = vmatpush1.bf16.msra.mxu0 %v4955
      %5113 = vmatprep.subr.bf16.mxu0 0
      %5114 = vmatpush1.bf16.msra.mxu0 %v4956
      %5115 = vmatprep.subr.bf16.mxu0 0
      %5116 = vmatpush1.bf16.msra.mxu0 %v4957
      %5117 = vmatprep.subr.bf16.mxu0 0
      %5118 = vmatpush1.bf16.msra.mxu0 %v4958
      %5119 = vmatprep.mubr.bf16.mxu0 %v4433
      %5120 = vmatmul.mubr.bf16.gmra.mrb[0].mxu0 %v4432
      %v5121 = vpop.f32.mrb[0].mxu0
      %v5122 = vadd.f32 %v4653, %v5121
      %v5123 = vpop.f32.mrb[0].mxu0
      %v5124 = vpop.f32.mrb[0].mxu0
      %v5125 = vadd.f32 %v4653, %v5124
      %v5126 = vpop.f32.mrb[0].mxu0
      %5127 = vmatprep.mubr.bf16.mxu0 %v4442
      %5128 = vmatmul.mubr.bf16.gmra.mrb[0].mxu0 %v4441
      %v5129 = vpop.f32.mrb[0].mxu0
      %v5130 = vadd.f32 %v4653, %v5129
      %v5131 = vpop.f32.mrb[0].mxu0
      %v5132 = vpop.f32.mrb[0].mxu0
      %v5133 = vadd.f32 %v4653, %v5132
      %v5134 = vpop.f32.mrb[0].mxu0
      %5135 = vmatprep.mubr.bf16.mxu0 %v4451
      %5136 = vmatmul.mubr.bf16.gmra.mrb[0].mxu0 %v4450
      %v5137 = vpop.f32.mrb[0].mxu0
      %v5138 = vadd.f32 %v4653, %v5137
      %v5139 = vpop.f32.mrb[0].mxu0
      %v5140 = vpop.f32.mrb[0].mxu0
      %v5141 = vadd.f32 %v4653, %v5140
      %v5142 = vpop.f32.mrb[0].mxu0
      %5143 = vmatprep.mubr.bf16.mxu0 %v4460
      %5144 = vmatmul.mubr.bf16.gmra.mrb[0].mxu0 %v4459
      %v5145 = vpop.f32.mrb[0].mxu0
      %v5146 = vadd.f32 %v4653, %v5145
      %v5147 = vpop.f32.mrb[0].mxu0
      %v5148 = vpop.f32.mrb[0].mxu0
      %v5149 = vadd.f32 %v4653, %v5148
      %v5150 = vpop.f32.mrb[0].mxu0
      %5151 = vmatprep.mubr.bf16.mxu0 %v4469
      %5152 = vmatmul.mubr.bf16.gmra.mrb[0].mxu0 %v4468
      %v5153 = vpop.f32.mrb[0].mxu0
      %v5154 = vadd.f32 %v4653, %v5153
      %v5155 = vpop.f32.mrb[0].mxu0
      %v5156 = vpop.f32.mrb[0].mxu0
      %v5157 = vadd.f32 %v4653, %v5156
      %v5158 = vpop.f32.mrb[0].mxu0
      %5159 = vmatprep.mubr.bf16.mxu0 %v4478
      %5160 = vmatmul.mubr.bf16.gmra.mrb[0].mxu0 %v4477
      %v5161 = vpop.f32.mrb[0].mxu0
      %v5162 = vadd.f32 %v4653, %v5161
      %v5163 = vpop.f32.mrb[0].mxu0
      %v5164 = vpop.f32.mrb[0].mxu0
      %v5165 = vadd.f32 %v4653, %v5164
      %v5166 = vpop.f32.mrb[0].mxu0
      %5167 = vmatprep.mubr.bf16.mxu0 %v4487
      %5168 = vmatmul.mubr.bf16.gmra.mrb[0].mxu0 %v4486
      %v5169 = vpop.f32.mrb[0].mxu0
      %v5170 = vadd.f32 %v4653, %v5169
      %v5171 = vpop.f32.mrb[0].mxu0
      %v5172 = vpop.f32.mrb[0].mxu0
      %v5173 = vadd.f32 %v4653, %v5172
      %v5174 = vpop.f32.mrb[0].mxu0
      %5175 = vmatprep.mubr.bf16.mxu0 %v4496
      %5176 = vmatmul.mubr.bf16.gmra.mrb[0].mxu0 %v4495
      %v5177 = vpop.f32.mrb[0].mxu0
      %v5178 = vadd.f32 %v4653, %v5177
      %v5179 = vpop.f32.mrb[0].mxu0
      %v5180 = vpop.f32.mrb[0].mxu0
      %v5181 = vadd.f32 %v4653, %v5180
      %v5182 = vpop.f32.mrb[0].mxu0
      %5183 = vdwg.mxu0
      %5184 = vmatprep.subr.bf16.mxu0 0
      %5185 = vmatpush1.bf16.msra.mxu0 %v4959
      %5186 = vmatprep.subr.bf16.mxu0 0
      %5187 = vmatpush1.bf16.msra.mxu0 %v4960
      %5188 = vmatprep.subr.bf16.mxu0 0
      %5189 = vmatpush1.bf16.msra.mxu0 %v4961
      %5190 = vmatprep.subr.bf16.mxu0 0
      %5191 = vmatpush1.bf16.msra.mxu0 %v4962
      %5192 = vmatprep.subr.bf16.mxu0 0
      %5193 = vmatpush1.bf16.msra.mxu0 %v4963
      %5194 = vmatprep.subr.bf16.mxu0 0
      %5195 = vmatpush1.bf16.msra.mxu0 %v4964
      %5196 = vmatprep.subr.bf16.mxu0 0
      %5197 = vmatpush1.bf16.msra.mxu0 %v4965
      %5198 = vmatprep.subr.bf16.mxu0 0
      %5199 = vmatpush1.bf16.msra.mxu0 %v4966
      %5200 = vmatprep.subr.bf16.mxu0 0
      %5201 = vmatpush1.bf16.msra.mxu0 %v4967
      %5202 = vmatprep.subr.bf16.mxu0 0
      %5203 = vmatpush1.bf16.msra.mxu0 %v4968
      %5204 = vmatprep.subr.bf16.mxu0 0
      %5205 = vmatpush1.bf16.msra.mxu0 %v4969
      %5206 = vmatprep.subr.bf16.mxu0 0
      %5207 = vmatpush1.bf16.msra.mxu0 %v4970
      %5208 = vmatprep.subr.bf16.mxu0 0
      %5209 = vmatpush1.bf16.msra.mxu0 %v4971
      %5210 = vmatprep.subr.bf16.mxu0 0
      %5211 = vmatpush1.bf16.msra.mxu0 %v4972
      %5212 = vmatprep.subr.bf16.mxu0 0
      %5213 = vmatpush1.bf16.msra.mxu0 %v4973
      %5214 = vmatprep.subr.bf16.mxu0 0
      %5215 = vmatpush1.bf16.msra.mxu0 %v4974
      %5216 = vmatprep.mubr.bf16.mxu0 %v4435
      %5217 = vmatmul.mubr.bf16.gmra.mrb[0].mxu0 %v4434
      %v5218 = vpop.f32.mrb[0].mxu0
      %v5219 = vadd.f32 %v5122, %v5218
      %v5220 = vpop.f32.mrb[0].mxu0
      %v5221 = vpop.f32.mrb[0].mxu0
      %v5222 = vadd.f32 %v5125, %v5221
      %v5223 = vpop.f32.mrb[0].mxu0
      %5224 = vmatprep.mubr.bf16.mxu0 %v4444
      %5225 = vmatmul.mubr.bf16.gmra.mrb[0].mxu0 %v4443
      %v5226 = vpop.f32.mrb[0].mxu0
      %v5227 = vadd.f32 %v5130, %v5226
      %v5228 = vpop.f32.mrb[0].mxu0
      %v5229 = vpop.f32.mrb[0].mxu0
      %v5230 = vadd.f32 %v5133, %v5229
      %v5231 = vpop.f32.mrb[0].mxu0
      %5232 = vmatprep.mubr.bf16.mxu0 %v4453
      %5233 = vmatmul.mubr.bf16.gmra.mrb[0].mxu0 %v4452
      %v5234 = vpop.f32.mrb[0].mxu0
      %v5235 = vadd.f32 %v5138, %v5234
      %v5236 = vpop.f32.mrb[0].mxu0
      %v5237 = vpop.f32.mrb[0].mxu0
      %v5238 = vadd.f32 %v5141, %v5237
      %v5239 = vpop.f32.mrb[0].mxu0
      %5240 = vmatprep.mubr.bf16.mxu0 %v4462
      %5241 = vmatmul.mubr.bf16.gmra.mrb[0].mxu0 %v4461
      %v5242 = vpop.f32.mrb[0].mxu0
      %v5243 = vadd.f32 %v5146, %v5242
      %v5244 = vpop.f32.mrb[0].mxu0
      %v5245 = vpop.f32.mrb[0].mxu0
      %v5246 = vadd.f32 %v5149, %v5245
      %v5247 = vpop.f32.mrb[0].mxu0
      %5248 = vmatprep.mubr.bf16.mxu0 %v4471
      %5249 = vmatmul.mubr.bf16.gmra.mrb[0].mxu0 %v4470
      %v5250 = vpop.f32.mrb[0].mxu0
      %v5251 = vadd.f32 %v5154, %v5250
      %v5252 = vpop.f32.mrb[0].mxu0
      %v5253 = vpop.f32.mrb[0].mxu0
      %v5254 = vadd.f32 %v5157, %v5253
      %v5255 = vpop.f32.mrb[0].mxu0
      %5256 = vmatprep.mubr.bf16.mxu0 %v4480
      %5257 = vmatmul.mubr.bf16.gmra.mrb[0].mxu0 %v4479
      %v5258 = vpop.f32.mrb[0].mxu0
      %v5259 = vadd.f32 %v5162, %v5258
      %v5260 = vpop.f32.mrb[0].mxu0
      %v5261 = vpop.f32.mrb[0].mxu0
      %v5262 = vadd.f32 %v5165, %v5261
      %v5263 = vpop.f32.mrb[0].mxu0
      %5264 = vmatprep.mubr.bf16.mxu0 %v4489
      %5265 = vmatmul.mubr.bf16.gmra.mrb[0].mxu0 %v4488
      %v5266 = vpop.f32.mrb[0].mxu0
      %v5267 = vadd.f32 %v5170, %v5266
      %v5268 = vpop.f32.mrb[0].mxu0
      %v5269 = vpop.f32.mrb[0].mxu0
      %v5270 = vadd.f32 %v5173, %v5269
      %v5271 = vpop.f32.mrb[0].mxu0
      %5272 = vmatprep.mubr.bf16.mxu0 %v4498
      %5273 = vmatmul.mubr.bf16.gmra.mrb[0].mxu0 %v4497
      %v5274 = vpop.f32.mrb[0].mxu0
      %v5275 = vadd.f32 %v5178, %v5274
      %v5276 = vpop.f32.mrb[0].mxu0
      %v5277 = vpop.f32.mrb[0].mxu0
      %v5278 = vadd.f32 %v5181, %v5277
      %v5279 = vpop.f32.mrb[0].mxu0
      %5280 = vdwg.mxu0
      %5281 = vmatprep.subr.bf16.mxu0 0
      %5282 = vmatpush1.bf16.msra.mxu0 %v4975
      %5283 = vmatprep.subr.bf16.mxu0 0
      %5284 = vmatpush1.bf16.msra.mxu0 %v4976
      %5285 = vmatprep.subr.bf16.mxu0 0
      %5286 = vmatpush1.bf16.msra.mxu0 %v4977
      %5287 = vmatprep.subr.bf16.mxu0 0
      %5288 = vmatpush1.bf16.msra.mxu0 %v4978
      %5289 = vmatprep.subr.bf16.mxu0 0
      %5290 = vmatpush1.bf16.msra.mxu0 %v4979
      %5291 = vmatprep.subr.bf16.mxu0 0
      %5292 = vmatpush1.bf16.msra.mxu0 %v4980
      %5293 = vmatprep.subr.bf16.mxu0 0
      %5294 = vmatpush1.bf16.msra.mxu0 %v4981
      %5295 = vmatprep.subr.bf16.mxu0 0
      %5296 = vmatpush1.bf16.msra.mxu0 %v4982
      %5297 = vmatprep.subr.bf16.mxu0 0
      %5298 = vmatpush1.bf16.msra.mxu0 %v4983
      %5299 = vmatprep.subr.bf16.mxu0 0
      %5300 = vmatpush1.bf16.msra.mxu0 %v4984
      %5301 = vmatprep.subr.bf16.mxu0 0
      %5302 = vmatpush1.bf16.msra.mxu0 %v4985
      %5303 = vmatprep.subr.bf16.mxu0 0
      %5304 = vmatpush1.bf16.msra.mxu0 %v4986
      %5305 = vmatprep.subr.bf16.mxu0 0
      %5306 = vmatpush1.bf16.msra.mxu0 %v4987
      %5307 = vmatprep.subr.bf16.mxu0 0
      %5308 = vmatpush1.bf16.msra.mxu0 %v4988
      %5309 = vmatprep.subr.bf16.mxu0 0
      %5310 = vmatpush1.bf16.msra.mxu0 %v4989
      %5311 = vmatprep.subr.bf16.mxu0 0
      %5312 = vmatpush1.bf16.msra.mxu0 %v4990
      %5313 = vmatprep.mubr.bf16.mxu0 %v4437
      %5314 = vmatmul.mubr.bf16.gmra.mrb[0].mxu0 %v4436
      %v5315 = vpop.f32.mrb[0].mxu0
      %v5316 = vadd.f32 %v5219, %v5315
      %v5317 = vpop.f32.mrb[0].mxu0
      %v5318 = vpop.f32.mrb[0].mxu0
      %v5319 = vadd.f32 %v5222, %v5318
      %v5320 = vpop.f32.mrb[0].mxu0
      %5321 = vmatprep.mubr.bf16.mxu0 %v4446
      %5322 = vmatmul.mubr.bf16.gmra.mrb[0].mxu0 %v4445
      %v5323 = vpop.f32.mrb[0].mxu0
      %v5324 = vadd.f32 %v5227, %v5323
      %v5325 = vpop.f32.mrb[0].mxu0
      %v5326 = vpop.f32.mrb[0].mxu0
      %v5327 = vadd.f32 %v5230, %v5326
      %v5328 = vpop.f32.mrb[0].mxu0
      %5329 = vmatprep.mubr.bf16.mxu0 %v4455
      %5330 = vmatmul.mubr.bf16.gmra.mrb[0].mxu0 %v4454
      %v5331 = vpop.f32.mrb[0].mxu0
      %v5332 = vadd.f32 %v5235, %v5331
      %v5333 = vpop.f32.mrb[0].mxu0
      %v5334 = vpop.f32.mrb[0].mxu0
      %v5335 = vadd.f32 %v5238, %v5334
      %v5336 = vpop.f32.mrb[0].mxu0
      %5337 = vmatprep.mubr.bf16.mxu0 %v4464
      %5338 = vmatmul.mubr.bf16.gmra.mrb[0].mxu0 %v4463
      %v5339 = vpop.f32.mrb[0].mxu0
      %v5340 = vadd.f32 %v5243, %v5339
      %v5341 = vpop.f32.mrb[0].mxu0
      %v5342 = vpop.f32.mrb[0].mxu0
      %v5343 = vadd.f32 %v5246, %v5342
      %v5344 = vpop.f32.mrb[0].mxu0
      %5345 = vmatprep.mubr.bf16.mxu0 %v4473
      %5346 = vmatmul.mubr.bf16.gmra.mrb[0].mxu0 %v4472
      %v5347 = vpop.f32.mrb[0].mxu0
      %v5348 = vadd.f32 %v5251, %v5347
      %v5349 = vpop.f32.mrb[0].mxu0
      %v5350 = vpop.f32.mrb[0].mxu0
      %v5351 = vadd.f32 %v5254, %v5350
      %v5352 = vpop.f32.mrb[0].mxu0
      %5353 = vmatprep.mubr.bf16.mxu0 %v4482
      %5354 = vmatmul.mubr.bf16.gmra.mrb[0].mxu0 %v4481
      %v5355 = vpop.f32.mrb[0].mxu0
      %v5356 = vadd.f32 %v5259, %v5355
      %v5357 = vpop.f32.mrb[0].mxu0
      %v5358 = vpop.f32.mrb[0].mxu0
      %v5359 = vadd.f32 %v5262, %v5358
      %v5360 = vpop.f32.mrb[0].mxu0
      %5361 = vmatprep.mubr.bf16.mxu0 %v4491
      %5362 = vmatmul.mubr.bf16.gmra.mrb[0].mxu0 %v4490
      %v5363 = vpop.f32.mrb[0].mxu0
      %v5364 = vadd.f32 %v5267, %v5363
      %v5365 = vpop.f32.mrb[0].mxu0
      %v5366 = vpop.f32.mrb[0].mxu0
      %v5367 = vadd.f32 %v5270, %v5366
      %v5368 = vpop.f32.mrb[0].mxu0
      %5369 = vmatprep.mubr.bf16.mxu0 %v4500
      %5370 = vmatmul.mubr.bf16.gmra.mrb[0].mxu0 %v4499
      %v5371 = vpop.f32.mrb[0].mxu0
      %v5372 = vadd.f32 %v5275, %v5371
      %v5373 = vpop.f32.mrb[0].mxu0
      %v5374 = vpop.f32.mrb[0].mxu0
      %v5375 = vadd.f32 %v5278, %v5374
      %v5376 = vpop.f32.mrb[0].mxu0
      %5377 = vdwg.mxu0
      %5378 = vmatprep.subr.bf16.mxu0 0
      %5379 = vmatpush1.bf16.msra.mxu0 %v4991
      %5380 = vmatprep.subr.bf16.mxu0 0
      %5381 = vmatpush1.bf16.msra.mxu0 %v4992
      %5382 = vmatprep.subr.bf16.mxu0 0
      %5383 = vmatpush1.bf16.msra.mxu0 %v4993
      %5384 = vmatprep.subr.bf16.mxu0 0
      %5385 = vmatpush1.bf16.msra.mxu0 %v4994
      %5386 = vmatprep.subr.bf16.mxu0 0
      %5387 = vmatpush1.bf16.msra.mxu0 %v4995
      %5388 = vmatprep.subr.bf16.mxu0 0
      %5389 = vmatpush1.bf16.msra.mxu0 %v4996
      %5390 = vmatprep.subr.bf16.mxu0 0
      %5391 = vmatpush1.bf16.msra.mxu0 %v4997
      %5392 = vmatprep.subr.bf16.mxu0 0
      %5393 = vmatpush1.bf16.msra.mxu0 %v4998
      %5394 = vmatprep.subr.bf16.mxu0 0
      %5395 = vmatpush1.bf16.msra.mxu0 %v4999
      %5396 = vmatprep.subr.bf16.mxu0 0
      %5397 = vmatpush1.bf16.msra.mxu0 %v5000
      %5398 = vmatprep.subr.bf16.mxu0 0
      %5399 = vmatpush1.bf16.msra.mxu0 %v5001
      %5400 = vmatprep.subr.bf16.mxu0 0
      %5401 = vmatpush1.bf16.msra.mxu0 %v5002
      %5402 = vmatprep.subr.bf16.mxu0 0
      %5403 = vmatpush1.bf16.msra.mxu0 %v5003
      %5404 = vmatprep.subr.bf16.mxu0 0
      %5405 = vmatpush1.bf16.msra.mxu0 %v5004
      %5406 = vmatprep.subr.bf16.mxu0 0
      %5407 = vmatpush1.bf16.msra.mxu0 %v5005
      %5408 = vmatprep.subr.bf16.mxu0 0
      %5409 = vmatpush1.bf16.msra.mxu0 %v5006
      %5410 = vmatprep.mubr.bf16.mxu0 %v4439
      %5411 = vmatmul.mubr.bf16.gmra.mrb[0].mxu0 %v4438
      %v5412 = vpop.f32.mrb[0].mxu0
      %v5413 = vadd.f32 %v5316, %v5412
      %v5414 = vpop.f32.mrb[0].mxu0
      %v5415 = vpop.f32.mrb[0].mxu0
      %v5416 = vadd.f32 %v5319, %v5415
      %v5417 = vpop.f32.mrb[0].mxu0
      %5418 = vmatprep.mubr.bf16.mxu0 %v4448
      %5419 = vmatmul.mubr.bf16.gmra.mrb[0].mxu0 %v4447
      %v5420 = vpop.f32.mrb[0].mxu0
      %v5421 = vadd.f32 %v5324, %v5420
      %v5422 = vpop.f32.mrb[0].mxu0
      %v5423 = vpop.f32.mrb[0].mxu0
      %v5424 = vadd.f32 %v5327, %v5423
      %v5425 = vpop.f32.mrb[0].mxu0
      %5426 = vmatprep.mubr.bf16.mxu0 %v4457
      %5427 = vmatmul.mubr.bf16.gmra.mrb[0].mxu0 %v4456
      %v5428 = vpop.f32.mrb[0].mxu0
      %v5429 = vadd.f32 %v5332, %v5428
      %v5430 = vpop.f32.mrb[0].mxu0
      %v5431 = vpop.f32.mrb[0].mxu0
      %v5432 = vadd.f32 %v5335, %v5431
      %v5433 = vpop.f32.mrb[0].mxu0
      %5434 = vmatprep.mubr.bf16.mxu0 %v4466
      %5435 = vmatmul.mubr.bf16.gmra.mrb[0].mxu0 %v4465
      %v5436 = vpop.f32.mrb[0].mxu0
      %v5437 = vadd.f32 %v5340, %v5436
      %v5438 = vpop.f32.mrb[0].mxu0
      %v5439 = vpop.f32.mrb[0].mxu0
      %v5440 = vadd.f32 %v5343, %v5439
      %v5441 = vpop.f32.mrb[0].mxu0
      %5442 = vmatprep.mubr.bf16.mxu0 %v4475
      %5443 = vmatmul.mubr.bf16.gmra.mrb[0].mxu0 %v4474
      %v5444 = vpop.f32.mrb[0].mxu0
      %v5445 = vadd.f32 %v5348, %v5444
      %v5446 = vpop.f32.mrb[0].mxu0
      %v5447 = vpop.f32.mrb[0].mxu0
      %v5448 = vadd.f32 %v5351, %v5447
      %v5449 = vpop.f32.mrb[0].mxu0
      %5450 = vmatprep.mubr.bf16.mxu0 %v4484
      %5451 = vmatmul.mubr.bf16.gmra.mrb[0].mxu0 %v4483
      %v5452 = vpop.f32.mrb[0].mxu0
      %v5453 = vadd.f32 %v5356, %v5452
      %v5454 = vpop.f32.mrb[0].mxu0
      %v5455 = vpop.f32.mrb[0].mxu0
      %v5456 = vadd.f32 %v5359, %v5455
      %v5457 = vpop.f32.mrb[0].mxu0
      %5458 = vmatprep.mubr.bf16.mxu0 %v4493
      %5459 = vmatmul.mubr.bf16.gmra.mrb[0].mxu0 %v4492
      %v5460 = vpop.f32.mrb[0].mxu0
      %v5461 = vadd.f32 %v5364, %v5460
      %v5462 = vpop.f32.mrb[0].mxu0
      %v5463 = vpop.f32.mrb[0].mxu0
      %v5464 = vadd.f32 %v5367, %v5463
      %v5465 = vpop.f32.mrb[0].mxu0
      %5466 = vmatprep.mubr.bf16.mxu0 %v4502
      %5467 = vmatmul.mubr.bf16.gmra.mrb[0].mxu0 %v4501
      %v5468 = vpop.f32.mrb[0].mxu0
      %v5469 = vadd.f32 %v5372, %v5468
      %v5470 = vpop.f32.mrb[0].mxu0
      %v5471 = vpop.f32.mrb[0].mxu0
      %v5472 = vadd.f32 %v5375, %v5471
      %v5473 = vpop.f32.mrb[0].mxu0
      %5474 = vdwg.mxu0
      %5475 = vmatprep.subr.bf16.mxu0 0
      %5476 = vmatpush1.bf16.msra.mxu0 %v5007
      %5477 = vmatprep.subr.bf16.mxu0 0
      %5478 = vmatpush1.bf16.msra.mxu0 %v5008
      %5479 = vmatprep.subr.bf16.mxu0 0
      %5480 = vmatpush1.bf16.msra.mxu0 %v5009
      %5481 = vmatprep.subr.bf16.mxu0 0
      %5482 = vmatpush1.bf16.msra.mxu0 %v5010
      %5483 = vmatprep.subr.bf16.mxu0 0
      %5484 = vmatpush1.bf16.msra.mxu0 %v5011
      %5485 = vmatprep.subr.bf16.mxu0 0
      %5486 = vmatpush1.bf16.msra.mxu0 %v5012
      %5487 = vmatprep.subr.bf16.mxu0 0
      %5488 = vmatpush1.bf16.msra.mxu0 %v5013
      %5489 = vmatprep.subr.bf16.mxu0 0
      %5490 = vmatpush1.bf16.msra.mxu0 %v5014
      %5491 = vmatprep.subr.bf16.mxu0 0
      %5492 = vmatpush1.bf16.msra.mxu0 0
      %5493 = vmatprep.subr.bf16.mxu0 0
      %5494 = vmatpush1.bf16.msra.mxu0 0
      %5495 = vmatprep.subr.bf16.mxu0 0
      %5496 = vmatpush1.bf16.msra.mxu0 0
      %5497 = vmatprep.subr.bf16.mxu0 0
      %5498 = vmatpush1.bf16.msra.mxu0 0
      %5499 = vmatprep.subr.bf16.mxu0 0
      %5500 = vmatpush1.bf16.msra.mxu0 0
      %5501 = vmatprep.subr.bf16.mxu0 0
      %5502 = vmatpush1.bf16.msra.mxu0 0
      %5503 = vmatprep.subr.bf16.mxu0 0
      %5504 = vmatpush1.bf16.msra.mxu0 0
      %5505 = vmatprep.subr.bf16.mxu0 0
      %5506 = vmatpush1.bf16.msra.mxu0 0
      %5507 = vmatprep.mubr.bf16.mxu0 0
      %5508 = vmatmul.mubr.bf16.gmra.mrb[0].mxu0 %v4440
      %v5509 = vpop.f32.mrb[0].mxu0
      %v5510 = vadd.f32 %v5413, %v5509
      %v5511 = vpop.f32.mrb[0].mxu0
      %v5512 = vpop.f32.mrb[0].mxu0
      %v5513 = vadd.f32 %v5416, %v5512
      %v5514 = vpop.f32.mrb[0].mxu0
      %5515 = vmatprep.mubr.bf16.mxu0 0
      %5516 = vmatmul.mubr.bf16.gmra.mrb[0].mxu0 %v4449
      %v5517 = vpop.f32.mrb[0].mxu0
      %v5518 = vadd.f32 %v5421, %v5517
      %v5519 = vpop.f32.mrb[0].mxu0
      %v5520 = vpop.f32.mrb[0].mxu0
      %v5521 = vadd.f32 %v5424, %v5520
      %v5522 = vpop.f32.mrb[0].mxu0
      %5523 = vmatprep.mubr.bf16.mxu0 0
      %5524 = vmatmul.mubr.bf16.gmra.mrb[0].mxu0 %v4458
      %v5525 = vpop.f32.mrb[0].mxu0
      %v5526 = vadd.f32 %v5429, %v5525
      %v5527 = vpop.f32.mrb[0].mxu0
      %v5528 = vpop.f32.mrb[0].mxu0
      %v5529 = vadd.f32 %v5432, %v5528
      %v5530 = vpop.f32.mrb[0].mxu0
      %5531 = vmatprep.mubr.bf16.mxu0 0
      %5532 = vmatmul.mubr.bf16.gmra.mrb[0].mxu0 %v4467
      %v5533 = vpop.f32.mrb[0].mxu0
      %v5534 = vadd.f32 %v5437, %v5533
      %v5535 = vpop.f32.mrb[0].mxu0
      %v5536 = vpop.f32.mrb[0].mxu0
      %v5537 = vadd.f32 %v5440, %v5536
      %v5538 = vpop.f32.mrb[0].mxu0
      %5539 = vmatprep.mubr.bf16.mxu0 0
      %5540 = vmatmul.mubr.bf16.gmra.mrb[0].mxu0 %v4476
      %v5541 = vpop.f32.mrb[0].mxu0
      %v5542 = vadd.f32 %v5445, %v5541
      %v5543 = vpop.f32.mrb[0].mxu0
      %v5544 = vpop.f32.mrb[0].mxu0
      %v5545 = vadd.f32 %v5448, %v5544
      %v5546 = vpop.f32.mrb[0].mxu0
      %5547 = vmatprep.mubr.bf16.mxu0 0
      %5548 = vmatmul.mubr.bf16.gmra.mrb[0].mxu0 %v4485
      %v5549 = vpop.f32.mrb[0].mxu0
      %v5550 = vadd.f32 %v5453, %v5549
      %v5551 = vpop.f32.mrb[0].mxu0
      %v5552 = vpop.f32.mrb[0].mxu0
      %v5553 = vadd.f32 %v5456, %v5552
      %v5554 = vpop.f32.mrb[0].mxu0
      %5555 = vmatprep.mubr.bf16.mxu0 0
      %5556 = vmatmul.mubr.bf16.gmra.mrb[0].mxu0 %v4494
      %v5557 = vpop.f32.mrb[0].mxu0
      %v5558 = vadd.f32 %v5461, %v5557
      %v5559 = vpop.f32.mrb[0].mxu0
      %v5560 = vpop.f32.mrb[0].mxu0
      %v5561 = vadd.f32 %v5464, %v5560
      %v5562 = vpop.f32.mrb[0].mxu0
      %5563 = vmatprep.mubr.bf16.mxu0 0
      %5564 = vmatmul.mubr.bf16.gmra.mrb[0].mxu0 %v4503
      %v5565 = vpop.f32.mrb[0].mxu0
      %v5566 = vadd.f32 %v5469, %v5565
      %v5567 = vpop.f32.mrb[0].mxu0
      %v5568 = vpop.f32.mrb[0].mxu0
      %v5569 = vadd.f32 %v5472, %v5568
      %v5570 = vpop.f32.mrb[0].mxu0
      %5571 = vdwg.mxu0
      %v5572 = vmax.f32 %v5510, 0.0
      %v5573 = vmax.f32 %v5513, 0.0
      %v5574 = vmax.f32 %v5518, 0.0
      %v5575 = vmax.f32 %v5521, 0.0
      %v5576 = vmax.f32 %v5526, 0.0
      %v5577 = vmax.f32 %v5529, 0.0
      %v5578 = vmax.f32 %v5534, 0.0
      %v5579 = vmax.f32 %v5537, 0.0
      %v5580 = vmax.f32 %v5542, 0.0
      %v5581 = vmax.f32 %v5545, 0.0
      %v5582 = vmax.f32 %v5550, 0.0
      %v5583 = vmax.f32 %v5553, 0.0
      %v5584 = vmax.f32 %v5558, 0.0
      %v5585 = vmax.f32 %v5561, 0.0
      %v5586 = vmax.f32 %v5566, 0.0
      %v5587 = vmax.f32 %v5569, 0.0
      %5588 = vst.msk [vmem:[%s347] sm:$0xff] %vm572, %v5572
      %5589 = vst.msk [vmem:[%s347 + $0x8] sm:$0xff] %vm572, %v5573
      %5590 = vst.msk [vmem:[%s347 + $0x10] sm:$0xff] %vm572, %v5574
      %5591 = vst.msk [vmem:[%s347 + $0x18] sm:$0xff] %vm572, %v5575
      %5592 = vst.msk [vmem:[%s347 + $0x20] sm:$0xff] %vm572, %v5576
      %5593 = vst.msk [vmem:[%s347 + $0x28] sm:$0xff] %vm572, %v5577
      %5594 = vst.msk [vmem:[%s347 + $0x30] sm:$0xff] %vm572, %v5578
      %5595 = vst.msk [vmem:[%s347 + $0x38] sm:$0xff] %vm572, %v5579
      %5596 = vst.msk [vmem:[%s347 + $0x40] sm:$0xff] %vm572, %v5580
      %5597 = vst.msk [vmem:[%s347 + $0x48] sm:$0xff] %vm572, %v5581
      %5598 = vst.msk [vmem:[%s347 + $0x50] sm:$0xff] %vm572, %v5582
      %5599 = vst.msk [vmem:[%s347 + $0x58] sm:$0xff] %vm572, %v5583
      %5600 = vst.msk [vmem:[%s347 + $0x60] sm:$0xff] %vm572, %v5584
      %5601 = vst.msk [vmem:[%s347 + $0x68] sm:$0xff] %vm572, %v5585
      %5602 = vst.msk [vmem:[%s347 + $0x70] sm:$0xff] %vm572, %v5586
      %5603 = vst.msk [vmem:[%s347 + $0x78] sm:$0xff] %vm572, %v5587
      %s5604 = smul.u32 16, %s24
      %p5605 = scmp.lt.s32.totalorder %s23, 1
      %s5606 = scalar_select %p5605, %s23, 1
      %p5607 = scmp.lt.s32.totalorder %s5604, 31
      %s5608 = scalar_select %p5607, %s5604, 31
      %s5609 = smul.addr %s5606, 32
      %s5610 = sadd.s32 %s5608, %s5609
      %s5611 = smul.addr %s5610, 8
      %s5612 = scalar_lea.vmem %s8, %s5611
      // Predicated region
      $region61: #{tpu_custom_call.1} parent=51 // pred_check
        %p5613 = pneg %p229
      $region62: #{tpu_custom_call.1} parent=51 // pred_check_branch
        %5615 = sbr.rel (%p5613) target = $region64
      $region63: #{tpu_custom_call.1} parent=51 // pred_region
        %s5616 = smul.u32 16, %s24
      $region64: #{tpu_custom_call.1} parent=51 // pred_fallthru
        _
    $region52: #{tpu_custom_call.1} parent=5 // pred_fallthru
      _
    %p5617 = scmp.le.s32.totalorder 2, %s14
    // Predicated region
    $region65: #{tpu_custom_call.1} parent=5 // pred_check
      %p5618 = pneg %p5617
    $region66: #{tpu_custom_call.1} parent=5 // pred_check_branch
      %5620 = sbr.rel (%p5618) target = $region68
    $region67: #{tpu_custom_call.1} parent=5 // pred_region
      %s5621 = ssub.s32 %s14, 2
      // Predicated region
      $region69: #{tpu_custom_call.1} parent=67 // pred_check
        %p5622 = pneg %p235
      $region70: #{tpu_custom_call.1} parent=67 // pred_check_branch
        %5624 = sbr.rel (%p5622) target = $region72
      $region71: #{tpu_custom_call.1} parent=67 // pred_region
        %s5625 = smul.u32 16, %s26
        %p5626 = scmp.lt.s32.totalorder %s25, 1
        %s5627 = scalar_select %p5626, %s25, 1
        %p5628 = scmp.lt.s32.totalorder %s5625, 31
        %s5629 = scalar_select %p5628, %s5625, 31
        %s5630 = smul.addr %s5627, 32
        %s5631 = sadd.s32 %s5629, %s5630
        %s5632 = smul.addr %s5631, 8
        %s5633 = scalar_lea.vmem %s8, %s5632
      $region72: #{tpu_custom_call.1} parent=67 // pred_fallthru
        _
    $region68: #{tpu_custom_call.1} parent=5 // pred_fallthru
      _
  $region6: #{tpu_custom_call.1} parent=0 // loop_footer
    %s18 = sadd.s32 1, %s14
  $region7: #{tpu_custom_call.1} parent=0 // loop_footer_branch
    %13 = sbr.rel target = $region3
  $region8: #{tpu_custom_call.1} parent=0 // loop_exit
    _

</llo_original>
